<compile_context>
chip_gen: v7x
topology: tpu7x:2x2x1
jax: 0.10.0
libtpu: 0.0.40
codegen_flags: <defaults>
</compile_context>

<pallas_src>
import functools

import jax
import jax.numpy as jnp
from jax import lax
from jax.experimental import pallas as pl
from jax.experimental.pallas import tpu as pltpu


def _round_up(x, m):
    return ((x + m - 1) // m) * m


# ----------------------------------------------------------------------------
# Pallas kernels
# ----------------------------------------------------------------------------
def conv_stack_kernel(xg_ref, w1_ref, b1_ref, w2_ref, b2_ref, mask_ref,
                      y_ref, taps1_ref, y1g_ref, taps2_ref,
                      *, H, W, C, G1, G2):
    """conv1(5x5,pad2)+ReLU then conv2(3x3,pad1)+ReLU for one image.

    xg:   (G1 + Hp*Wp + G1, C) bf16  halo(2)+guard padded image, rows (hp,wp)
    w1:   (25*C, 16) bf16  stacked conv1 weight, row = (di*5+dj)*C + c
    w2:   (9*16, 32) bf16  stacked conv2 weight, row = (di*3+dj)*16 + c
    mask: (Hp*Wp, 1) f32   1 at interior (valid output) rows, 0 on the halo
    y:    (H*W, 32)  bf16  conv2 output, rows = pixels, lanes = channels
    """
    Hp, Wp = H + 4, W + 4
    Pp = Hp * Wp

    # ---- conv1: stack the 25 taps (constant row shifts of the guarded,
    # halo-padded block) along lanes -> one (Pp, 25*C) operand, single dot.
    for di in range(5):
        for dj in range(5):
            t = di * 5 + dj
            s = G1 + (di - 2) * Wp + (dj - 2)
            taps1_ref[:, t * C:(t + 1) * C] = xg_ref[s:s + Pp, :]
    y1 = jnp.dot(taps1_ref[...], w1_ref[...],
                 preferred_element_type=jnp.float32)
    # bias + ReLU, then one multiply by the interior mask so conv2's zero
    # padding ring is exact (replaces the old per-tap compare/select logic).
    y1 = jnp.maximum(y1 + b1_ref[...], 0.0) * mask_ref[...]

    # ---- stage y1 as bf16 in the guarded scratch; zero only the guards.
    y1g_ref[0:G2, :] = jnp.zeros((G2, 16), jnp.bfloat16)
    y1g_ref[G2 + Pp:G2 + Pp + G2, :] = jnp.zeros((G2, 16), jnp.bfloat16)
    y1g_ref[G2:G2 + Pp, :] = y1.astype(jnp.bfloat16)

    # ---- conv2: stack the 9 taps into (Pp, 144), single dot, bias+ReLU once.
    for di in range(3):
        for dj in range(3):
            t = di * 3 + dj
            s = G2 + (di - 1) * Wp + (dj - 1)
            taps2_ref[:, t * 16:(t + 1) * 16] = y1g_ref[s:s + Pp, :]
    y2 = jnp.dot(taps2_ref[...], w2_ref[...],
                 preferred_element_type=jnp.float32)
    y2 = jnp.maximum(y2 + b2_ref[...], 0.0).astype(y_ref.dtype)

    # ---- compact the interior (h, w) rows of the padded grid into (H*W, 32).
    for h in range(H):
        s = (h + 2) * Wp + 2
        y_ref[h * W:(h + 1) * W, :] = y2[s:s + W, :]


def noisy_mlp_kernel(flat_ref, wn1_ref, bn1_ref, wn2_ref, bn2_ref, o_ref,
                     acc_ref):
    """NoisyLinear(2048->256)+ReLU then NoisyLinear(256->A_pad), K-tiled.

    Grid axis 0 walks K-blocks of the folded wn1 (P3 accumulator pattern);
    the second (tiny) linear runs in the finalize step.
    """
    k = pl.program_id(0)

    @pl.when(k == 0)
    def _():
        acc_ref[...] = jnp.zeros_like(acc_ref)

    acc_ref[...] += jnp.dot(flat_ref[...], wn1_ref[...],
                            preferred_element_type=jnp.float32)

    @pl.when(k == pl.num_programs(0) - 1)
    def _():
        h = jnp.maximum(acc_ref[...] + bn1_ref[...], 0.0).astype(jnp.bfloat16)
        o_ref[...] = (jnp.dot(h, wn2_ref[...],
                              preferred_element_type=jnp.float32)
                      + bn2_ref[...])


# ----------------------------------------------------------------------------
# Pallas wrappers
# ----------------------------------------------------------------------------
def conv_stack(xg, w1s, b1, w2s, b2, mask, *, N, H, W, G1, G2):
    Hp, Wp = H + 4, W + 4
    Pp = Hp * Wp
    C = xg.shape[1]
    Rg1 = xg.shape[0] // N
    assert Rg1 % 8 == 0 and (H * W) % 8 == 0

    kernel = functools.partial(conv_stack_kernel, H=H, W=W, C=C, G1=G1, G2=G2)
    return pl.pallas_call(
        kernel,
        out_shape=jax.ShapeDtypeStruct((N * H * W, 32), jnp.bfloat16),
        grid=(N,),
        in_specs=[
            pl.BlockSpec((Rg1, C), lambda n: (n, 0)),
            pl.BlockSpec(w1s.shape, lambda n: (0, 0)),
            pl.BlockSpec(b1.shape, lambda n: (0, 0)),
            pl.BlockSpec(w2s.shape, lambda n: (0, 0)),
            pl.BlockSpec(b2.shape, lambda n: (0, 0)),
            pl.BlockSpec(mask.shape, lambda n: (0, 0)),
        ],
        out_specs=pl.BlockSpec((H * W, 32), lambda n: (n, 0)),
        scratch_shapes=[
            pltpu.VMEM((Pp, 25 * C), jnp.bfloat16),        # stacked conv1 taps
            pltpu.VMEM((G2 + Pp + G2, 16), jnp.bfloat16),  # guarded y1
            pltpu.VMEM((Pp, 9 * 16), jnp.bfloat16),        # stacked conv2 taps
        ],
        compiler_params=pltpu.CompilerParams(
            dimension_semantics=("parallel",)),
    )(xg, w1s, b1, w2s, b2, mask)


def noisy_mlp(flat, wn1, bn1, wn2, bn2, *, k_block=512):
    Nb, K = flat.shape
    F = wn1.shape[1]
    Np = wn2.shape[1]
    if K % k_block != 0 or k_block % 128 != 0:
        k_block = K
    nk = K // k_block

    return pl.pallas_call(
        noisy_mlp_kernel,
        out_shape=jax.ShapeDtypeStruct((Nb, Np), jnp.float32),
        grid=(nk,),
        in_specs=[
            pl.BlockSpec((Nb, k_block), lambda k: (0, k)),
            pl.BlockSpec((k_block, F), lambda k: (k, 0)),
            pl.BlockSpec((1, F), lambda k: (0, 0)),
            pl.BlockSpec((F, Np), lambda k: (0, 0)),
            pl.BlockSpec((1, Np), lambda k: (0, 0)),
        ],
        out_specs=pl.BlockSpec((Nb, Np), lambda k: (0, 0)),
        scratch_shapes=[pltpu.VMEM((Nb, F), jnp.float32)],
        compiler_params=pltpu.CompilerParams(
            dimension_semantics=("arbitrary",)),
    )(flat, wn1, bn1, wn2, bn2)


# ----------------------------------------------------------------------------
# Glue: parameter construction / folding, forward
# ----------------------------------------------------------------------------
def make_noisy_params(key, in_f, out_f, sigma_init=0.017):
    k1, k2, k3, k4 = jax.random.split(key, 4)
    mu_range = 1.0 / (in_f ** 0.5)
    return dict(
        wmu=jax.random.uniform(k1, (in_f, out_f), jnp.float32,
                               -mu_range, mu_range),
        wsig=jnp.full((in_f, out_f), sigma_init, jnp.float32),
        weps=jax.random.normal(k2, (in_f, out_f), jnp.float32),
        bmu=jax.random.uniform(k3, (out_f,), jnp.float32, -mu_range, mu_range),
        bsig=jnp.full((out_f,), sigma_init, jnp.float32),
        beps=jax.random.normal(k4, (out_f,), jnp.float32),
    )


def make_dqn_params(key, layers, n_actions, n, m):
    k = jax.random.split(key, 6)
    # conv weights built in HWIO (from PyTorch OIHW: transpose(2, 3, 1, 0))
    w1 = jax.random.uniform(k[0], (5, 5, layers, 16), jnp.float32, -0.1, 0.1)
    b1 = jax.random.uniform(k[1], (16,), jnp.float32, -0.1, 0.1)
    w2 = jax.random.uniform(k[2], (3, 3, 16, 32), jnp.float32, -0.1, 0.1)
    b2 = jax.random.uniform(k[3], (32,), jnp.float32, -0.1, 0.1)
    return dict(
        w1=w1.reshape(5 * 5 * layers, 16), b1=b1,        # stacked tap rows
        w2=w2.reshape(9 * 16, 32), b2=b2,                # stacked tap rows
        nl1=make_noisy_params(k[4], 32 * n * m, 256),
        nl2=make_noisy_params(k[5], 256, n_actions),
    )


def fold_dqn_params(params, n_actions, H, W, out_pad=128):
    """Fold noisy eps into effective weights, permute nl1 rows to NHWC
    flatten order, pad nl2 output to 128 lanes, build the conv interior mask,
    cast matmul operands to bf16."""
    nl1, nl2 = params["nl1"], params["nl2"]
    wn1 = nl1["wmu"] + nl1["wsig"] * nl1["weps"]          # (32*H*W, 256)
    bn1 = nl1["bmu"] + nl1["bsig"] * nl1["beps"]
    wn2 = nl2["wmu"] + nl2["wsig"] * nl2["weps"]          # (256, n_actions)
    bn2 = nl2["bmu"] + nl2["bsig"] * nl2["beps"]

    # NCHW flatten index c*(H*W)+p  ->  NHWC flatten index p*32+c
    out_f = wn1.shape[1]
    wn1 = wn1.reshape(32, H * W, out_f).transpose(1, 0, 2)
    wn1 = wn1.reshape(32 * H * W, out_f)

    npad = max(out_pad, _round_up(n_actions, 128))
    wn2p = jnp.zeros((wn2.shape[0], npad),
                     jnp.float32).at[:, :n_actions].set(wn2)
    bn2p = jnp.zeros((npad,), jnp.float32).at[:n_actions].set(bn2)

    # interior mask over the halo(2)-padded grid (zeroes conv2's padding ring)
    Hp, Wp = H + 4, W + 4
    hw = jnp.arange(Hp * Wp)
    hp, wp = hw // Wp, hw % Wp
    mask = (((hp >= 2) & (hp < H + 2) & (wp >= 2) & (wp < W + 2))
            .astype(jnp.float32).reshape(Hp * Wp, 1))

    bf16 = jnp.bfloat16
    return dict(
        w1=params["w1"].astype(bf16), b1=params["b1"].reshape(1, -1),
        w2=params["w2"].astype(bf16), b2=params["b2"].reshape(1, -1),
        mask=mask,
        wn1=wn1.astype(bf16), bn1=bn1.reshape(1, -1),
        wn2=wn2p.astype(bf16), bn2=bn2p.reshape(1, -1),
    )


@functools.partial(jax.jit, static_argnames=("n_actions",))
def dqn_forward(x_nchw, kp, *, n_actions):
    N, C, H, W = x_nchw.shape
    Hp, Wp = H + 4, W + 4
    Pp = Hp * Wp
    G1 = _round_up(2 * Wp + 2, 8)   # guard >= max conv1 row shift
    G2 = _round_up(Wp + 1, 8)       # guard >= max conv2 row shift
    Rg1 = _round_up(2 * G1 + Pp, 8)

    # halo(2) + guard padded input, rows (hp, wp), lanes = channels (bf16)
    x = jnp.transpose(x_nchw, (0, 2, 3, 1))                       # -> NHWC
    xpad = jnp.pad(x, ((0, 0), (2, 2), (2, 2), (0, 0))).reshape(N, Pp, C)
    xg = jnp.zeros((N, Rg1, C), jnp.bfloat16)
    xg = xg.at[:, G1:G1 + Pp, :].set(xpad.astype(jnp.bfloat16))
    xg = xg.reshape(N * Rg1, C)

    # conv1 + conv2 (+ ReLUs), fused, one stacked MXU matmul per conv
    y2 = conv_stack(xg, kp["w1"], kp["b1"], kp["w2"], kp["b2"], kp["mask"],
                    N=N, H=H, W=W, G1=G1, G2=G2)                  # (N*H*W, 32)

    # NHWC flatten (nl1 weight rows were permuted to match -> no transpose)
    flat = y2.reshape(N, H * W * 32)

    # NoisyLinear1 + ReLU + NoisyLinear2, K-tiled; output padded to 128 lanes
    out = noisy_mlp(flat, kp["wn1"], kp["bn1"], kp["wn2"], kp["bn2"])
    return out[:, :n_actions]


# ----------------------------------------------------------------------------
# Pure-JAX reference (mirrors the kernel's bf16 cast points)
# ----------------------------------------------------------------------------
def _ref_forward(x_nchw, kp, n_actions):
    f32 = jnp.float32
    N, C, H, W = x_nchw.shape
    x = jnp.transpose(x_nchw, (0, 2, 3, 1)).astype(jnp.bfloat16).astype(f32)
    w1 = kp["w1"].astype(f32).reshape(5, 5, C, 16)
    w2 = kp["w2"].astype(f32).reshape(3, 3, 16, 32)
    dn = ("NHWC", "HWIO", "NHWC")
    hi = lax.Precision.HIGHEST
    y1 = lax.conv_general_dilated(x, w1, (1, 1), "SAME",
                                  dimension_numbers=dn, precision=hi)
    y1 = jnp.maximum(y1 + kp["b1"], 0.0).astype(jnp.bfloat16).astype(f32)
    y2 = lax.conv_general_dilated(y1, w2, (1, 1), "SAME",
                                  dimension_numbers=dn, precision=hi)
    y2 = jnp.maximum(y2 + kp["b2"], 0.0).astype(jnp.bfloat16).astype(f32)
    flat = y2.reshape(N, H * W * 32)
    h = jnp.maximum(jnp.dot(flat, kp["wn1"].astype(f32), precision=hi)
                    + kp["bn1"], 0.0)
    h = h.astype(jnp.bfloat16).astype(f32)
    out = jnp.dot(h, kp["wn2"].astype(f32), precision=hi) + kp["bn2"]
    return out[:, :n_actions]


if __name__ == "__main__":
    layers, n_actions, n, m = 4, 6, 8, 8
    batch = 2

    key = jax.random.PRNGKey(0)
    k_params, k_x = jax.random.split(key)
    raw_params = make_dqn_params(k_params, layers, n_actions, n, m)
    kp = fold_dqn_params(raw_params, n_actions, n, m)

    x = jax.random.normal(k_x, (batch, layers, n, m), jnp.float32)  # NCHW

    out = dqn_forward(x, kp, n_actions=n_actions)
    out = jax.block_until_ready(out)
    assert out.shape == (batch, n_actions), out.shape
    assert bool(jnp.all(jnp.isfinite(out)))

    ref = _ref_forward(x, kp, n_actions)
    assert bool(jnp.allclose(out, ref, rtol=2e-2, atol=2e-2)), (
        "mismatch vs reference", out, ref)
    print("KERNEL_OK")
</pallas_src>

<mosaic_0001>
module attributes {stable_mosaic.version = 11 : i64} {
  func.func @noisy_mlp_kernel(%arg0: i32, %arg1: memref<2x512xbf16, #tpu.memory_space<vmem>>, %arg2: memref<512x256xbf16, #tpu.memory_space<vmem>>, %arg3: memref<1x256xf32, #tpu.memory_space<vmem>>, %arg4: memref<256x128xbf16, #tpu.memory_space<vmem>>, %arg5: memref<1x128xf32, #tpu.memory_space<vmem>>, %arg6: memref<2x128xf32, #tpu.memory_space<vmem>>, %arg7: memref<2x256xf32, #tpu.memory_space<vmem>>) attributes {dimension_semantics = [#tpu.dimension_semantics<arbitrary>], iteration_bounds = array<i64: 4>, scalar_prefetch = 0 : i64, scratch_operands = 1 : i64, tpu.core_type = #tpu.core_type<tc>, window_params = [{transform_indices = @transform_0, window_bounds = array<i64: 2, 512>}, {transform_indices = @transform_1, window_bounds = array<i64: 512, 256>}, {pipeline_mode = #tpu.pipeline_mode<synchronous>, transform_indices = @transform_2, window_bounds = array<i64: 1, 256>}, {pipeline_mode = #tpu.pipeline_mode<synchronous>, transform_indices = @transform_3, window_bounds = array<i64: 256, 128>}, {pipeline_mode = #tpu.pipeline_mode<synchronous>, transform_indices = @transform_4, window_bounds = array<i64: 1, 128>}, {pipeline_mode = #tpu.pipeline_mode<synchronous>, transform_indices = @transform_5, window_bounds = array<i64: 2, 128>}]} {
    %c0_i32 = arith.constant 0 : i32
    %0 = arith.cmpi eq, %arg0, %c0_i32 : i32
    %1 = arith.extui %0 : i1 to i32
    %c0_i32_0 = arith.constant 0 : i32
    %2 = arith.cmpi ne, %1, %c0_i32_0 : i32
    scf.if %2 {
      %cst_9 = arith.constant 0.000000e+00 : f32
      %12 = vector.broadcast %cst_9 : f32 to vector<2x256xf32>
      %c0_10 = arith.constant 0 : index
      %c0_11 = arith.constant 0 : index
      %13 = vector.load %arg7[%c0_10, %c0_11] : memref<2x256xf32, #tpu.memory_space<vmem>>, vector<2x256xf32>
      tpu.vector_store %arg7[%c0_10, %c0_11], %12 {strides = array<i32>} : memref<2x256xf32, #tpu.memory_space<vmem>>, vector<2x256xf32>,
    } else {
    }
    %c0 = arith.constant 0 : index
    %c0_1 = arith.constant 0 : index
    %3 = vector.load %arg7[%c0, %c0_1] : memref<2x256xf32, #tpu.memory_space<vmem>>, vector<2x256xf32>
    %c0_2 = arith.constant 0 : index
    %c0_3 = arith.constant 0 : index
    %4 = vector.load %arg1[%c0_2, %c0_3] : memref<2x512xbf16, #tpu.memory_space<vmem>>, vector<2x512xbf16>
    %c0_4 = arith.constant 0 : index
    %c0_5 = arith.constant 0 : index
    %5 = vector.load %arg2[%c0_4, %c0_5] : memref<512x256xbf16, #tpu.memory_space<vmem>>, vector<512x256xbf16>
    %cst = arith.constant dense<0.000000e+00> : vector<2x256xf32>
    %6 = tpu.matmul %4, %5, %cst {dimension_numbers = #tpu.dot_dimension_numbers<[1], [0], [0], [1], [0, 0, 1, 1], [], []>} : vector<2x512xbf16>, vector<512x256xbf16>, vector<2x256xf32> -> vector<2x256xf32>
    %7 = arith.addf %3, %6 : vector<2x256xf32>
    %c0_6 = arith.constant 0 : index
    %c0_7 = arith.constant 0 : index
    %8 = vector.load %arg7[%c0_6, %c0_7] : memref<2x256xf32, #tpu.memory_space<vmem>>, vector<2x256xf32>
    tpu.vector_store %arg7[%c0_6, %c0_7], %7 {strides = array<i32>} : memref<2x256xf32, #tpu.memory_space<vmem>>, vector<2x256xf32>,
    %c3_i32 = arith.constant 3 : i32
    %9 = arith.cmpi eq, %arg0, %c3_i32 : i32
    %10 = arith.extui %9 : i1 to i32
    %c0_i32_8 = arith.constant 0 : i32
    %11 = arith.cmpi ne, %10, %c0_i32_8 : i32
    scf.if %11 {
      %c0_9 = arith.constant 0 : index
      %c0_10 = arith.constant 0 : index
      %12 = vector.load %arg7[%c0_9, %c0_10] : memref<2x256xf32, #tpu.memory_space<vmem>>, vector<2x256xf32>
      %c0_11 = arith.constant 0 : index
      %c0_12 = arith.constant 0 : index
      %13 = vector.load %arg3[%c0_11, %c0_12] : memref<1x256xf32, #tpu.memory_space<vmem>>, vector<1x256xf32>
      %14 = vector.broadcast %13 : vector<1x256xf32> to vector<2x256xf32>
      %15 = arith.addf %12, %14 : vector<2x256xf32>
      %cst_13 = arith.constant 0.000000e+00 : f32
      %16 = vector.broadcast %cst_13 : f32 to vector<2x256xf32>
      %17 = arith.maximumf %15, %16 : vector<2x256xf32>
      %18 = arith.truncf %17 : vector<2x256xf32> to vector<2x256xbf16>
      %c0_14 = arith.constant 0 : index
      %c0_15 = arith.constant 0 : index
      %19 = vector.load %arg4[%c0_14, %c0_15] : memref<256x128xbf16, #tpu.memory_space<vmem>>, vector<256x128xbf16>
      %cst_16 = arith.constant dense<0.000000e+00> : vector<2x128xf32>
      %20 = tpu.matmul %18, %19, %cst_16 {dimension_numbers = #tpu.dot_dimension_numbers<[1], [0], [0], [1], [0, 0, 1, 1], [], []>} : vector<2x256xbf16>, vector<256x128xbf16>, vector<2x128xf32> -> vector<2x128xf32>
      %c0_17 = arith.constant 0 : index
      %c0_18 = arith.constant 0 : index
      %21 = vector.load %arg5[%c0_17, %c0_18] : memref<1x128xf32, #tpu.memory_space<vmem>>, vector<1x128xf32>
      %22 = vector.broadcast %21 : vector<1x128xf32> to vector<2x128xf32>
      %23 = arith.addf %20, %22 : vector<2x128xf32>
      %c0_19 = arith.constant 0 : index
      %c0_20 = arith.constant 0 : index
      %24 = vector.load %arg6[%c0_19, %c0_20] : memref<2x128xf32, #tpu.memory_space<vmem>>, vector<2x128xf32>
      tpu.vector_store %arg6[%c0_19, %c0_20], %23 {strides = array<i32>} : memref<2x128xf32, #tpu.memory_space<vmem>>, vector<2x128xf32>,
    } else {
    }
    return
  }
  func.func @transform_0(%arg0: i32) -> (i32, i32) {
    %c0_i32 = arith.constant 0 : i32
    %c0_i32_0 = arith.constant 0 : i32
    return %c0_i32, %arg0 : i32, i32
  }
  func.func @transform_1(%arg0: i32) -> (i32, i32) {
    %c0_i32 = arith.constant 0 : i32
    %c0_i32_0 = arith.constant 0 : i32
    return %arg0, %c0_i32 : i32, i32
  }
  func.func @transform_2(%arg0: i32) -> (i32, i32) {
    %c0_i32 = arith.constant 0 : i32
    %c0_i32_0 = arith.constant 0 : i32
    %c0_i32_1 = arith.constant 0 : i32
    return %c0_i32, %c0_i32_0 : i32, i32
  }
  func.func @transform_3(%arg0: i32) -> (i32, i32) {
    %c0_i32 = arith.constant 0 : i32
    %c0_i32_0 = arith.constant 0 : i32
    %c0_i32_1 = arith.constant 0 : i32
    return %c0_i32, %c0_i32_0 : i32, i32
  }
  func.func @transform_4(%arg0: i32) -> (i32, i32) {
    %c0_i32 = arith.constant 0 : i32
    %c0_i32_0 = arith.constant 0 : i32
    %c0_i32_1 = arith.constant 0 : i32
    return %c0_i32, %c0_i32_0 : i32, i32
  }
  func.func @transform_5(%arg0: i32) -> (i32, i32) {
    %c0_i32 = arith.constant 0 : i32
    %c0_i32_0 = arith.constant 0 : i32
    %c0_i32_1 = arith.constant 0 : i32
    return %c0_i32, %c0_i32_0 : i32, i32
  }
}

module attributes {stable_mosaic.version = 11 : i64} {
  func.func @conv_stack_kernel(%arg0: i32, %arg1: memref<208x4xbf16, #tpu.memory_space<vmem>>, %arg2: memref<100x16xbf16, #tpu.memory_space<vmem>>, %arg3: memref<1x16xf32, #tpu.memory_space<vmem>>, %arg4: memref<144x32xbf16, #tpu.memory_space<vmem>>, %arg5: memref<1x32xf32, #tpu.memory_space<vmem>>, %arg6: memref<144x1xf32, #tpu.memory_space<vmem>>, %arg7: memref<64x32xbf16, #tpu.memory_space<vmem>>, %arg8: memref<144x100xbf16, #tpu.memory_space<vmem>>, %arg9: memref<176x16xbf16, #tpu.memory_space<vmem>>, %arg10: memref<144x144xbf16, #tpu.memory_space<vmem>>) attributes {dimension_semantics = [#tpu.dimension_semantics<parallel>], iteration_bounds = array<i64: 2>, scalar_prefetch = 0 : i64, scratch_operands = 3 : i64, tpu.core_type = #tpu.core_type<tc>, window_params = [{transform_indices = @transform_0, window_bounds = array<i64: 208, 4>}, {pipeline_mode = #tpu.pipeline_mode<synchronous>, transform_indices = @transform_1, window_bounds = array<i64: 100, 16>}, {pipeline_mode = #tpu.pipeline_mode<synchronous>, transform_indices = @transform_2, window_bounds = array<i64: 1, 16>}, {pipeline_mode = #tpu.pipeline_mode<synchronous>, transform_indices = @transform_3, window_bounds = array<i64: 144, 32>}, {pipeline_mode = #tpu.pipeline_mode<synchronous>, transform_indices = @transform_4, window_bounds = array<i64: 1, 32>}, {pipeline_mode = #tpu.pipeline_mode<synchronous>, transform_indices = @transform_5, window_bounds = array<i64: 144, 1>}, {transform_indices = @transform_6, window_bounds = array<i64: 64, 32>}]} {
    %c6 = arith.constant 6 : index
    %c0 = arith.constant 0 : index
    %0 = vector.load %arg1[%c6, %c0] : memref<208x4xbf16, #tpu.memory_space<vmem>>, vector<144x4xbf16>
    %c0_0 = arith.constant 0 : index
    %c0_1 = arith.constant 0 : index
    %1 = vector.load %arg8[%c0_0, %c0_1] : memref<144x100xbf16, #tpu.memory_space<vmem>>, vector<144x4xbf16>
    tpu.vector_store %arg8[%c0_0, %c0_1], %0 {strides = array<i32>} : memref<144x100xbf16, #tpu.memory_space<vmem>>, vector<144x4xbf16>,
    %c7 = arith.constant 7 : index
    %c0_2 = arith.constant 0 : index
    %2 = vector.load %arg1[%c7, %c0_2] : memref<208x4xbf16, #tpu.memory_space<vmem>>, vector<144x4xbf16>
    %c0_3 = arith.constant 0 : index
    %c4 = arith.constant 4 : index
    %3 = vector.load %arg8[%c0_3, %c4] : memref<144x100xbf16, #tpu.memory_space<vmem>>, vector<144x4xbf16>
    tpu.vector_store %arg8[%c0_3, %c4], %2 {strides = array<i32>} : memref<144x100xbf16, #tpu.memory_space<vmem>>, vector<144x4xbf16>,
    %c8 = arith.constant 8 : index
    %c0_4 = arith.constant 0 : index
    %4 = vector.load %arg1[%c8, %c0_4] : memref<208x4xbf16, #tpu.memory_space<vmem>>, vector<144x4xbf16>
    %c0_5 = arith.constant 0 : index
    %c8_6 = arith.constant 8 : index
    %5 = vector.load %arg8[%c0_5, %c8_6] : memref<144x100xbf16, #tpu.memory_space<vmem>>, vector<144x4xbf16>
    tpu.vector_store %arg8[%c0_5, %c8_6], %4 {strides = array<i32>} : memref<144x100xbf16, #tpu.memory_space<vmem>>, vector<144x4xbf16>,
    %c9 = arith.constant 9 : index
    %c0_7 = arith.constant 0 : index
    %6 = vector.load %arg1[%c9, %c0_7] : memref<208x4xbf16, #tpu.memory_space<vmem>>, vector<144x4xbf16>
    %c0_8 = arith.constant 0 : index
    %c12 = arith.constant 12 : index
    %7 = vector.load %arg8[%c0_8, %c12] : memref<144x100xbf16, #tpu.memory_space<vmem>>, vector<144x4xbf16>
    tpu.vector_store %arg8[%c0_8, %c12], %6 {strides = array<i32>} : memref<144x100xbf16, #tpu.memory_space<vmem>>, vector<144x4xbf16>,
    %c10 = arith.constant 10 : index
    %c0_9 = arith.constant 0 : index
    %8 = vector.load %arg1[%c10, %c0_9] : memref<208x4xbf16, #tpu.memory_space<vmem>>, vector<144x4xbf16>
    %c0_10 = arith.constant 0 : index
    %c16 = arith.constant 16 : index
    %9 = vector.load %arg8[%c0_10, %c16] : memref<144x100xbf16, #tpu.memory_space<vmem>>, vector<144x4xbf16>
    tpu.vector_store %arg8[%c0_10, %c16], %8 {strides = array<i32>} : memref<144x100xbf16, #tpu.memory_space<vmem>>, vector<144x4xbf16>,
    %c18 = arith.constant 18 : index
    %c0_11 = arith.constant 0 : index
    %10 = vector.load %arg1[%c18, %c0_11] : memref<208x4xbf16, #tpu.memory_space<vmem>>, vector<144x4xbf16>
    %c0_12 = arith.constant 0 : index
    %c20 = arith.constant 20 : index
    %11 = vector.load %arg8[%c0_12, %c20] : memref<144x100xbf16, #tpu.memory_space<vmem>>, vector<144x4xbf16>
    tpu.vector_store %arg8[%c0_12, %c20], %10 {strides = array<i32>} : memref<144x100xbf16, #tpu.memory_space<vmem>>, vector<144x4xbf16>,
    %c19 = arith.constant 19 : index
    %c0_13 = arith.constant 0 : index
    %12 = vector.load %arg1[%c19, %c0_13] : memref<208x4xbf16, #tpu.memory_space<vmem>>, vector<144x4xbf16>
    %c0_14 = arith.constant 0 : index
    %c24 = arith.constant 24 : index
    %13 = vector.load %arg8[%c0_14, %c24] : memref<144x100xbf16, #tpu.memory_space<vmem>>, vector<144x4xbf16>
    tpu.vector_store %arg8[%c0_14, %c24], %12 {strides = array<i32>} : memref<144x100xbf16, #tpu.memory_space<vmem>>, vector<144x4xbf16>,
    %c20_15 = arith.constant 20 : index
    %c0_16 = arith.constant 0 : index
    %14 = vector.load %arg1[%c20_15, %c0_16] : memref<208x4xbf16, #tpu.memory_space<vmem>>, vector<144x4xbf16>
    %c0_17 = arith.constant 0 : index
    %c28 = arith.constant 28 : index
    %15 = vector.load %arg8[%c0_17, %c28] : memref<144x100xbf16, #tpu.memory_space<vmem>>, vector<144x4xbf16>
    tpu.vector_store %arg8[%c0_17, %c28], %14 {strides = array<i32>} : memref<144x100xbf16, #tpu.memory_space<vmem>>, vector<144x4xbf16>,
    %c21 = arith.constant 21 : index
    %c0_18 = arith.constant 0 : index
    %16 = vector.load %arg1[%c21, %c0_18] : memref<208x4xbf16, #tpu.memory_space<vmem>>, vector<144x4xbf16>
    %c0_19 = arith.constant 0 : index
    %c32 = arith.constant 32 : index
    %17 = vector.load %arg8[%c0_19, %c32] : memref<144x100xbf16, #tpu.memory_space<vmem>>, vector<144x4xbf16>
    tpu.vector_store %arg8[%c0_19, %c32], %16 {strides = array<i32>} : memref<144x100xbf16, #tpu.memory_space<vmem>>, vector<144x4xbf16>,
    %c22 = arith.constant 22 : index
    %c0_20 = arith.constant 0 : index
    %18 = vector.load %arg1[%c22, %c0_20] : memref<208x4xbf16, #tpu.memory_space<vmem>>, vector<144x4xbf16>
    %c0_21 = arith.constant 0 : index
    %c36 = arith.constant 36 : index
    %19 = vector.load %arg8[%c0_21, %c36] : memref<144x100xbf16, #tpu.memory_space<vmem>>, vector<144x4xbf16>
    tpu.vector_store %arg8[%c0_21, %c36], %18 {strides = array<i32>} : memref<144x100xbf16, #tpu.memory_space<vmem>>, vector<144x4xbf16>,
    %c30 = arith.constant 30 : index
    %c0_22 = arith.constant 0 : index
    %20 = vector.load %arg1[%c30, %c0_22] : memref<208x4xbf16, #tpu.memory_space<vmem>>, vector<144x4xbf16>
    %c0_23 = arith.constant 0 : index
    %c40 = arith.constant 40 : index
    %21 = vector.load %arg8[%c0_23, %c40] : memref<144x100xbf16, #tpu.memory_space<vmem>>, vector<144x4xbf16>
    tpu.vector_store %arg8[%c0_23, %c40], %20 {strides = array<i32>} : memref<144x100xbf16, #tpu.memory_space<vmem>>, vector<144x4xbf16>,
    %c31 = arith.constant 31 : index
    %c0_24 = arith.constant 0 : index
    %22 = vector.load %arg1[%c31, %c0_24] : memref<208x4xbf16, #tpu.memory_space<vmem>>, vector<144x4xbf16>
    %c0_25 = arith.constant 0 : index
    %c44 = arith.constant 44 : index
    %23 = vector.load %arg8[%c0_25, %c44] : memref<144x100xbf16, #tpu.memory_space<vmem>>, vector<144x4xbf16>
    tpu.vector_store %arg8[%c0_25, %c44], %22 {strides = array<i32>} : memref<144x100xbf16, #tpu.memory_space<vmem>>, vector<144x4xbf16>,
    %c32_26 = arith.constant 32 : index
    %c0_27 = arith.constant 0 : index
    %24 = vector.load %arg1[%c32_26, %c0_27] : memref<208x4xbf16, #tpu.memory_space<vmem>>, vector<144x4xbf16>
    %c0_28 = arith.constant 0 : index
    %c48 = arith.constant 48 : index
    %25 = vector.load %arg8[%c0_28, %c48] : memref<144x100xbf16, #tpu.memory_space<vmem>>, vector<144x4xbf16>
    tpu.vector_store %arg8[%c0_28, %c48], %24 {strides = array<i32>} : memref<144x100xbf16, #tpu.memory_space<vmem>>, vector<144x4xbf16>,
    %c33 = arith.constant 33 : index
    %c0_29 = arith.constant 0 : index
    %26 = vector.load %arg1[%c33, %c0_29] : memref<208x4xbf16, #tpu.memory_space<vmem>>, vector<144x4xbf16>
    %c0_30 = arith.constant 0 : index
    %c52 = arith.constant 52 : index
    %27 = vector.load %arg8[%c0_30, %c52] : memref<144x100xbf16, #tpu.memory_space<vmem>>, vector<144x4xbf16>
    tpu.vector_store %arg8[%c0_30, %c52], %26 {strides = array<i32>} : memref<144x100xbf16, #tpu.memory_space<vmem>>, vector<144x4xbf16>,
    %c34 = arith.constant 34 : index
    %c0_31 = arith.constant 0 : index
    %28 = vector.load %arg1[%c34, %c0_31] : memref<208x4xbf16, #tpu.memory_space<vmem>>, vector<144x4xbf16>
    %c0_32 = arith.constant 0 : index
    %c56 = arith.constant 56 : index
    %29 = vector.load %arg8[%c0_32, %c56] : memref<144x100xbf16, #tpu.memory_space<vmem>>, vector<144x4xbf16>
    tpu.vector_store %arg8[%c0_32, %c56], %28 {strides = array<i32>} : memref<144x100xbf16, #tpu.memory_space<vmem>>, vector<144x4xbf16>,
    %c42 = arith.constant 42 : index
    %c0_33 = arith.constant 0 : index
    %30 = vector.load %arg1[%c42, %c0_33] : memref<208x4xbf16, #tpu.memory_space<vmem>>, vector<144x4xbf16>
    %c0_34 = arith.constant 0 : index
    %c60 = arith.constant 60 : index
    %31 = vector.load %arg8[%c0_34, %c60] : memref<144x100xbf16, #tpu.memory_space<vmem>>, vector<144x4xbf16>
    tpu.vector_store %arg8[%c0_34, %c60], %30 {strides = array<i32>} : memref<144x100xbf16, #tpu.memory_space<vmem>>, vector<144x4xbf16>,
    %c43 = arith.constant 43 : index
    %c0_35 = arith.constant 0 : index
    %32 = vector.load %arg1[%c43, %c0_35] : memref<208x4xbf16, #tpu.memory_space<vmem>>, vector<144x4xbf16>
    %c0_36 = arith.constant 0 : index
    %c64 = arith.constant 64 : index
    %33 = vector.load %arg8[%c0_36, %c64] : memref<144x100xbf16, #tpu.memory_space<vmem>>, vector<144x4xbf16>
    tpu.vector_store %arg8[%c0_36, %c64], %32 {strides = array<i32>} : memref<144x100xbf16, #tpu.memory_space<vmem>>, vector<144x4xbf16>,
    %c44_37 = arith.constant 44 : index
    %c0_38 = arith.constant 0 : index
    %34 = vector.load %arg1[%c44_37, %c0_38] : memref<208x4xbf16, #tpu.memory_space<vmem>>, vector<144x4xbf16>
    %c0_39 = arith.constant 0 : index
    %c68 = arith.constant 68 : index
    %35 = vector.load %arg8[%c0_39, %c68] : memref<144x100xbf16, #tpu.memory_space<vmem>>, vector<144x4xbf16>
    tpu.vector_store %arg8[%c0_39, %c68], %34 {strides = array<i32>} : memref<144x100xbf16, #tpu.memory_space<vmem>>, vector<144x4xbf16>,
    %c45 = arith.constant 45 : index
    %c0_40 = arith.constant 0 : index
    %36 = vector.load %arg1[%c45, %c0_40] : memref<208x4xbf16, #tpu.memory_space<vmem>>, vector<144x4xbf16>
    %c0_41 = arith.constant 0 : index
    %c72 = arith.constant 72 : index
    %37 = vector.load %arg8[%c0_41, %c72] : memref<144x100xbf16, #tpu.memory_space<vmem>>, vector<144x4xbf16>
    tpu.vector_store %arg8[%c0_41, %c72], %36 {strides = array<i32>} : memref<144x100xbf16, #tpu.memory_space<vmem>>, vector<144x4xbf16>,
    %c46 = arith.constant 46 : index
    %c0_42 = arith.constant 0 : index
    %38 = vector.load %arg1[%c46, %c0_42] : memref<208x4xbf16, #tpu.memory_space<vmem>>, vector<144x4xbf16>
    %c0_43 = arith.constant 0 : index
    %c76 = arith.constant 76 : index
    %39 = vector.load %arg8[%c0_43, %c76] : memref<144x100xbf16, #tpu.memory_space<vmem>>, vector<144x4xbf16>
    tpu.vector_store %arg8[%c0_43, %c76], %38 {strides = array<i32>} : memref<144x100xbf16, #tpu.memory_space<vmem>>, vector<144x4xbf16>,
    %c54 = arith.constant 54 : index
    %c0_44 = arith.constant 0 : index
    %40 = vector.load %arg1[%c54, %c0_44] : memref<208x4xbf16, #tpu.memory_space<vmem>>, vector<144x4xbf16>
    %c0_45 = arith.constant 0 : index
    %c80 = arith.constant 80 : index
    %41 = vector.load %arg8[%c0_45, %c80] : memref<144x100xbf16, #tpu.memory_space<vmem>>, vector<144x4xbf16>
    tpu.vector_store %arg8[%c0_45, %c80], %40 {strides = array<i32>} : memref<144x100xbf16, #tpu.memory_space<vmem>>, vector<144x4xbf16>,
    %c55 = arith.constant 55 : index
    %c0_46 = arith.constant 0 : index
    %42 = vector.load %arg1[%c55, %c0_46] : memref<208x4xbf16, #tpu.memory_space<vmem>>, vector<144x4xbf16>
    %c0_47 = arith.constant 0 : index
    %c84 = arith.constant 84 : index
    %43 = vector.load %arg8[%c0_47, %c84] : memref<144x100xbf16, #tpu.memory_space<vmem>>, vector<144x4xbf16>
    tpu.vector_store %arg8[%c0_47, %c84], %42 {strides = array<i32>} : memref<144x100xbf16, #tpu.memory_space<vmem>>, vector<144x4xbf16>,
    %c56_48 = arith.constant 56 : index
    %c0_49 = arith.constant 0 : index
    %44 = vector.load %arg1[%c56_48, %c0_49] : memref<208x4xbf16, #tpu.memory_space<vmem>>, vector<144x4xbf16>
    %c0_50 = arith.constant 0 : index
    %c88 = arith.constant 88 : index
    %45 = vector.load %arg8[%c0_50, %c88] : memref<144x100xbf16, #tpu.memory_space<vmem>>, vector<144x4xbf16>
    tpu.vector_store %arg8[%c0_50, %c88], %44 {strides = array<i32>} : memref<144x100xbf16, #tpu.memory_space<vmem>>, vector<144x4xbf16>,
    %c57 = arith.constant 57 : index
    %c0_51 = arith.constant 0 : index
    %46 = vector.load %arg1[%c57, %c0_51] : memref<208x4xbf16, #tpu.memory_space<vmem>>, vector<144x4xbf16>
    %c0_52 = arith.constant 0 : index
    %c92 = arith.constant 92 : index
    %47 = vector.load %arg8[%c0_52, %c92] : memref<144x100xbf16, #tpu.memory_space<vmem>>, vector<144x4xbf16>
    tpu.vector_store %arg8[%c0_52, %c92], %46 {strides = array<i32>} : memref<144x100xbf16, #tpu.memory_space<vmem>>, vector<144x4xbf16>,
    %c58 = arith.constant 58 : index
    %c0_53 = arith.constant 0 : index
    %48 = vector.load %arg1[%c58, %c0_53] : memref<208x4xbf16, #tpu.memory_space<vmem>>, vector<144x4xbf16>
    %c0_54 = arith.constant 0 : index
    %c96 = arith.constant 96 : index
    %49 = vector.load %arg8[%c0_54, %c96] : memref<144x100xbf16, #tpu.memory_space<vmem>>, vector<144x4xbf16>
    tpu.vector_store %arg8[%c0_54, %c96], %48 {strides = array<i32>} : memref<144x100xbf16, #tpu.memory_space<vmem>>, vector<144x4xbf16>,
    %c0_55 = arith.constant 0 : index
    %c0_56 = arith.constant 0 : index
    %50 = vector.load %arg8[%c0_55, %c0_56] : memref<144x100xbf16, #tpu.memory_space<vmem>>, vector<144x100xbf16>
    %c0_57 = arith.constant 0 : index
    %c0_58 = arith.constant 0 : index
    %51 = vector.load %arg2[%c0_57, %c0_58] : memref<100x16xbf16, #tpu.memory_space<vmem>>, vector<100x16xbf16>
    %cst = arith.constant dense<0.000000e+00> : vector<144x16xf32>
    %52 = tpu.matmul %50, %51, %cst {dimension_numbers = #tpu.dot_dimension_numbers<[1], [0], [0], [1], [0, 0, 1, 1], [], []>} : vector<144x100xbf16>, vector<100x16xbf16>, vector<144x16xf32> -> vector<144x16xf32>
    %c0_59 = arith.constant 0 : index
    %c0_60 = arith.constant 0 : index
    %53 = vector.load %arg3[%c0_59, %c0_60] : memref<1x16xf32, #tpu.memory_space<vmem>>, vector<1x16xf32>
    %54 = vector.broadcast %53 : vector<1x16xf32> to vector<144x16xf32>
    %55 = arith.addf %52, %54 : vector<144x16xf32>
    %cst_61 = arith.constant 0.000000e+00 : f32
    %56 = vector.broadcast %cst_61 : f32 to vector<144x16xf32>
    %57 = arith.maximumf %55, %56 : vector<144x16xf32>
    %c0_62 = arith.constant 0 : index
    %c0_63 = arith.constant 0 : index
    %58 = vector.load %arg6[%c0_62, %c0_63] : memref<144x1xf32, #tpu.memory_space<vmem>>, vector<144x1xf32>
    %59 = vector.broadcast %58 : vector<144x1xf32> to vector<144x16xf32>
    %60 = arith.mulf %57, %59 : vector<144x16xf32>
    %cst_64 = arith.constant 0.000000e+00 : bf16
    %61 = vector.broadcast %cst_64 : bf16 to vector<16x16xbf16>
    %c0_65 = arith.constant 0 : index
    %c0_66 = arith.constant 0 : index
    %62 = vector.load %arg9[%c0_65, %c0_66] : memref<176x16xbf16, #tpu.memory_space<vmem>>, vector<16x16xbf16>
    tpu.vector_store %arg9[%c0_65, %c0_66], %61 {strides = array<i32>} : memref<176x16xbf16, #tpu.memory_space<vmem>>, vector<16x16xbf16>,
    %cst_67 = arith.constant 0.000000e+00 : bf16
    %63 = vector.broadcast %cst_67 : bf16 to vector<16x16xbf16>
    %c160 = arith.constant 160 : index
    %c0_68 = arith.constant 0 : index
    %64 = vector.load %arg9[%c160, %c0_68] : memref<176x16xbf16, #tpu.memory_space<vmem>>, vector<16x16xbf16>
    tpu.vector_store %arg9[%c160, %c0_68], %63 {strides = array<i32>} : memref<176x16xbf16, #tpu.memory_space<vmem>>, vector<16x16xbf16>,
    %65 = arith.truncf %60 : vector<144x16xf32> to vector<144x16xbf16>
    %c16_69 = arith.constant 16 : index
    %c0_70 = arith.constant 0 : index
    %66 = vector.load %arg9[%c16_69, %c0_70] : memref<176x16xbf16, #tpu.memory_space<vmem>>, vector<144x16xbf16>
    tpu.vector_store %arg9[%c16_69, %c0_70], %65 {strides = array<i32>} : memref<176x16xbf16, #tpu.memory_space<vmem>>, vector<144x16xbf16>,
    %c3 = arith.constant 3 : index
    %c0_71 = arith.constant 0 : index
    %67 = vector.load %arg9[%c3, %c0_71] : memref<176x16xbf16, #tpu.memory_space<vmem>>, vector<144x16xbf16>
    %c0_72 = arith.constant 0 : index
    %c0_73 = arith.constant 0 : index
    %68 = vector.load %arg10[%c0_72, %c0_73] : memref<144x144xbf16, #tpu.memory_space<vmem>>, vector<144x16xbf16>
    tpu.vector_store %arg10[%c0_72, %c0_73], %67 {strides = array<i32>} : memref<144x144xbf16, #tpu.memory_space<vmem>>, vector<144x16xbf16>,
    %c4_74 = arith.constant 4 : index
    %c0_75 = arith.constant 0 : index
    %69 = vector.load %arg9[%c4_74, %c0_75] : memref<176x16xbf16, #tpu.memory_space<vmem>>, vector<144x16xbf16>
    %c0_76 = arith.constant 0 : index
    %c16_77 = arith.constant 16 : index
    %70 = vector.load %arg10[%c0_76, %c16_77] : memref<144x144xbf16, #tpu.memory_space<vmem>>, vector<144x16xbf16>
    tpu.vector_store %arg10[%c0_76, %c16_77], %69 {strides = array<i32>} : memref<144x144xbf16, #tpu.memory_space<vmem>>, vector<144x16xbf16>,
    %c5 = arith.constant 5 : index
    %c0_78 = arith.constant 0 : index
    %71 = vector.load %arg9[%c5, %c0_78] : memref<176x16xbf16, #tpu.memory_space<vmem>>, vector<144x16xbf16>
    %c0_79 = arith.constant 0 : index
    %c32_80 = arith.constant 32 : index
    %72 = vector.load %arg10[%c0_79, %c32_80] : memref<144x144xbf16, #tpu.memory_space<vmem>>, vector<144x16xbf16>
    tpu.vector_store %arg10[%c0_79, %c32_80], %71 {strides = array<i32>} : memref<144x144xbf16, #tpu.memory_space<vmem>>, vector<144x16xbf16>,
    %c15 = arith.constant 15 : index
    %c0_81 = arith.constant 0 : index
    %73 = vector.load %arg9[%c15, %c0_81] : memref<176x16xbf16, #tpu.memory_space<vmem>>, vector<144x16xbf16>
    %c0_82 = arith.constant 0 : index
    %c48_83 = arith.constant 48 : index
    %74 = vector.load %arg10[%c0_82, %c48_83] : memref<144x144xbf16, #tpu.memory_space<vmem>>, vector<144x16xbf16>
    tpu.vector_store %arg10[%c0_82, %c48_83], %73 {strides = array<i32>} : memref<144x144xbf16, #tpu.memory_space<vmem>>, vector<144x16xbf16>,
    %c16_84 = arith.constant 16 : index
    %c0_85 = arith.constant 0 : index
    %75 = vector.load %arg9[%c16_84, %c0_85] : memref<176x16xbf16, #tpu.memory_space<vmem>>, vector<144x16xbf16>
    %c0_86 = arith.constant 0 : index
    %c64_87 = arith.constant 64 : index
    %76 = vector.load %arg10[%c0_86, %c64_87] : memref<144x144xbf16, #tpu.memory_space<vmem>>, vector<144x16xbf16>
    tpu.vector_store %arg10[%c0_86, %c64_87], %75 {strides = array<i32>} : memref<144x144xbf16, #tpu.memory_space<vmem>>, vector<144x16xbf16>,
    %c17 = arith.constant 17 : index
    %c0_88 = arith.constant 0 : index
    %77 = vector.load %arg9[%c17, %c0_88] : memref<176x16xbf16, #tpu.memory_space<vmem>>, vector<144x16xbf16>
    %c0_89 = arith.constant 0 : index
    %c80_90 = arith.constant 80 : index
    %78 = vector.load %arg10[%c0_89, %c80_90] : memref<144x144xbf16, #tpu.memory_space<vmem>>, vector<144x16xbf16>
    tpu.vector_store %arg10[%c0_89, %c80_90], %77 {strides = array<i32>} : memref<144x144xbf16, #tpu.memory_space<vmem>>, vector<144x16xbf16>,
    %c27 = arith.constant 27 : index
    %c0_91 = arith.constant 0 : index
    %79 = vector.load %arg9[%c27, %c0_91] : memref<176x16xbf16, #tpu.memory_space<vmem>>, vector<144x16xbf16>
    %c0_92 = arith.constant 0 : index
    %c96_93 = arith.constant 96 : index
    %80 = vector.load %arg10[%c0_92, %c96_93] : memref<144x144xbf16, #tpu.memory_space<vmem>>, vector<144x16xbf16>
    tpu.vector_store %arg10[%c0_92, %c96_93], %79 {strides = array<i32>} : memref<144x144xbf16, #tpu.memory_space<vmem>>, vector<144x16xbf16>,
    %c28_94 = arith.constant 28 : index
    %c0_95 = arith.constant 0 : index
    %81 = vector.load %arg9[%c28_94, %c0_95] : memref<176x16xbf16, #tpu.memory_space<vmem>>, vector<144x16xbf16>
    %c0_96 = arith.constant 0 : index
    %c112 = arith.constant 112 : index
    %82 = vector.load %arg10[%c0_96, %c112] : memref<144x144xbf16, #tpu.memory_space<vmem>>, vector<144x16xbf16>
    tpu.vector_store %arg10[%c0_96, %c112], %81 {strides = array<i32>} : memref<144x144xbf16, #tpu.memory_space<vmem>>, vector<144x16xbf16>,
    %c29 = arith.constant 29 : index
    %c0_97 = arith.constant 0 : index
    %83 = vector.load %arg9[%c29, %c0_97] : memref<176x16xbf16, #tpu.memory_space<vmem>>, vector<144x16xbf16>
    %c0_98 = arith.constant 0 : index
    %c128 = arith.constant 128 : index
    %84 = vector.load %arg10[%c0_98, %c128] : memref<144x144xbf16, #tpu.memory_space<vmem>>, vector<144x16xbf16>
    tpu.vector_store %arg10[%c0_98, %c128], %83 {strides = array<i32>} : memref<144x144xbf16, #tpu.memory_space<vmem>>, vector<144x16xbf16>,
    %c0_99 = arith.constant 0 : index
    %c0_100 = arith.constant 0 : index
    %85 = vector.load %arg10[%c0_99, %c0_100] : memref<144x144xbf16, #tpu.memory_space<vmem>>, vector<144x144xbf16>
    %c0_101 = arith.constant 0 : index
    %c0_102 = arith.constant 0 : index
    %86 = vector.load %arg4[%c0_101, %c0_102] : memref<144x32xbf16, #tpu.memory_space<vmem>>, vector<144x32xbf16>
    %cst_103 = arith.constant dense<0.000000e+00> : vector<144x32xf32>
    %87 = tpu.matmul %85, %86, %cst_103 {dimension_numbers = #tpu.dot_dimension_numbers<[1], [0], [0], [1], [0, 0, 1, 1], [], []>} : vector<144x144xbf16>, vector<144x32xbf16>, vector<144x32xf32> -> vector<144x32xf32>
    %c0_104 = arith.constant 0 : index
    %c0_105 = arith.constant 0 : index
    %88 = vector.load %arg5[%c0_104, %c0_105] : memref<1x32xf32, #tpu.memory_space<vmem>>, vector<1x32xf32>
    %89 = vector.broadcast %88 : vector<1x32xf32> to vector<144x32xf32>
    %90 = arith.addf %87, %89 : vector<144x32xf32>
    %cst_106 = arith.constant 0.000000e+00 : f32
    %91 = vector.broadcast %cst_106 : f32 to vector<144x32xf32>
    %92 = arith.maximumf %90, %91 : vector<144x32xf32>
    %93 = arith.truncf %92 : vector<144x32xf32> to vector<144x32xbf16>
    %94 = vector.extract_strided_slice %93 {offsets = [26, 0], sizes = [8, 32], strides = [1, 1]} : vector<144x32xbf16> to vector<8x32xbf16>
    %c0_107 = arith.constant 0 : index
    %c0_108 = arith.constant 0 : index
    %95 = vector.load %arg7[%c0_107, %c0_108] : memref<64x32xbf16, #tpu.memory_space<vmem>>, vector<8x32xbf16>
    tpu.vector_store %arg7[%c0_107, %c0_108], %94 {strides = array<i32>} : memref<64x32xbf16, #tpu.memory_space<vmem>>, vector<8x32xbf16>,
    %96 = vector.extract_strided_slice %93 {offsets = [38, 0], sizes = [8, 32], strides = [1, 1]} : vector<144x32xbf16> to vector<8x32xbf16>
    %c8_109 = arith.constant 8 : index
    %c0_110 = arith.constant 0 : index
    %97 = vector.load %arg7[%c8_109, %c0_110] : memref<64x32xbf16, #tpu.memory_space<vmem>>, vector<8x32xbf16>
    tpu.vector_store %arg7[%c8_109, %c0_110], %96 {strides = array<i32>} : memref<64x32xbf16, #tpu.memory_space<vmem>>, vector<8x32xbf16>,
    %98 = vector.extract_strided_slice %93 {offsets = [50, 0], sizes = [8, 32], strides = [1, 1]} : vector<144x32xbf16> to vector<8x32xbf16>
    %c16_111 = arith.constant 16 : index
    %c0_112 = arith.constant 0 : index
    %99 = vector.load %arg7[%c16_111, %c0_112] : memref<64x32xbf16, #tpu.memory_space<vmem>>, vector<8x32xbf16>
    tpu.vector_store %arg7[%c16_111, %c0_112], %98 {strides = array<i32>} : memref<64x32xbf16, #tpu.memory_space<vmem>>, vector<8x32xbf16>,
    %100 = vector.extract_strided_slice %93 {offsets = [62, 0], sizes = [8, 32], strides = [1, 1]} : vector<144x32xbf16> to vector<8x32xbf16>
    %c24_113 = arith.constant 24 : index
    %c0_114 = arith.constant 0 : index
    %101 = vector.load %arg7[%c24_113, %c0_114] : memref<64x32xbf16, #tpu.memory_space<vmem>>, vector<8x32xbf16>
    tpu.vector_store %arg7[%c24_113, %c0_114], %100 {strides = array<i32>} : memref<64x32xbf16, #tpu.memory_space<vmem>>, vector<8x32xbf16>,
    %102 = vector.extract_strided_slice %93 {offsets = [74, 0], sizes = [8, 32], strides = [1, 1]} : vector<144x32xbf16> to vector<8x32xbf16>
    %c32_115 = arith.constant 32 : index
    %c0_116 = arith.constant 0 : index
    %103 = vector.load %arg7[%c32_115, %c0_116] : memref<64x32xbf16, #tpu.memory_space<vmem>>, vector<8x32xbf16>
    tpu.vector_store %arg7[%c32_115, %c0_116], %102 {strides = array<i32>} : memref<64x32xbf16, #tpu.memory_space<vmem>>, vector<8x32xbf16>,
    %104 = vector.extract_strided_slice %93 {offsets = [86, 0], sizes = [8, 32], strides = [1, 1]} : vector<144x32xbf16> to vector<8x32xbf16>
    %c40_117 = arith.constant 40 : index
    %c0_118 = arith.constant 0 : index
    %105 = vector.load %arg7[%c40_117, %c0_118] : memref<64x32xbf16, #tpu.memory_space<vmem>>, vector<8x32xbf16>
    tpu.vector_store %arg7[%c40_117, %c0_118], %104 {strides = array<i32>} : memref<64x32xbf16, #tpu.memory_space<vmem>>, vector<8x32xbf16>,
    %106 = vector.extract_strided_slice %93 {offsets = [98, 0], sizes = [8, 32], strides = [1, 1]} : vector<144x32xbf16> to vector<8x32xbf16>
    %c48_119 = arith.constant 48 : index
    %c0_120 = arith.constant 0 : index
    %107 = vector.load %arg7[%c48_119, %c0_120] : memref<64x32xbf16, #tpu.memory_space<vmem>>, vector<8x32xbf16>
    tpu.vector_store %arg7[%c48_119, %c0_120], %106 {strides = array<i32>} : memref<64x32xbf16, #tpu.memory_space<vmem>>, vector<8x32xbf16>,
    %108 = vector.extract_strided_slice %93 {offsets = [110, 0], sizes = [8, 32], strides = [1, 1]} : vector<144x32xbf16> to vector<8x32xbf16>
    %c56_121 = arith.constant 56 : index
    %c0_122 = arith.constant 0 : index
    %109 = vector.load %arg7[%c56_121, %c0_122] : memref<64x32xbf16, #tpu.memory_space<vmem>>, vector<8x32xbf16>
    tpu.vector_store %arg7[%c56_121, %c0_122], %108 {strides = array<i32>} : memref<64x32xbf16, #tpu.memory_space<vmem>>, vector<8x32xbf16>,
    return
  }
  func.func @transform_0(%arg0: i32) -> (i32, i32) {
    %c0_i32 = arith.constant 0 : i32
    %c0_i32_0 = arith.constant 0 : i32
    return %arg0, %c0_i32 : i32, i32
  }
  func.func @transform_1(%arg0: i32) -> (i32, i32) {
    %c0_i32 = arith.constant 0 : i32
    %c0_i32_0 = arith.constant 0 : i32
    %c0_i32_1 = arith.constant 0 : i32
    return %c0_i32, %c0_i32_0 : i32, i32
  }
  func.func @transform_2(%arg0: i32) -> (i32, i32) {
    %c0_i32 = arith.constant 0 : i32
    %c0_i32_0 = arith.constant 0 : i32
    %c0_i32_1 = arith.constant 0 : i32
    return %c0_i32, %c0_i32_0 : i32, i32
  }
  func.func @transform_3(%arg0: i32) -> (i32, i32) {
    %c0_i32 = arith.constant 0 : i32
    %c0_i32_0 = arith.constant 0 : i32
    %c0_i32_1 = arith.constant 0 : i32
    return %c0_i32, %c0_i32_0 : i32, i32
  }
  func.func @transform_4(%arg0: i32) -> (i32, i32) {
    %c0_i32 = arith.constant 0 : i32
    %c0_i32_0 = arith.constant 0 : i32
    %c0_i32_1 = arith.constant 0 : i32
    return %c0_i32, %c0_i32_0 : i32, i32
  }
  func.func @transform_5(%arg0: i32) -> (i32, i32) {
    %c0_i32 = arith.constant 0 : i32
    %c0_i32_0 = arith.constant 0 : i32
    %c0_i32_1 = arith.constant 0 : i32
    return %c0_i32, %c0_i32_0 : i32, i32
  }
  func.func @transform_6(%arg0: i32) -> (i32, i32) {
    %c0_i32 = arith.constant 0 : i32
    %c0_i32_0 = arith.constant 0 : i32
    return %arg0, %c0_i32 : i32, i32
  }
}

</mosaic_0001>

<llo_original>
// kernel: dqn_forward.3
$region0: #{dqn_forward.3}
  #allocation0 [shape = 'u32[]', space=smem, size = 0x4, offset = 0x4, fixed_abs, tag = 'smem constant byte address 0x4 - core index']
  #allocation1 [shape = 'u32[144,128]{1,0:T(1,128)}', space=vmem, size = 0x12000, scoped, tag = 'internal scratch']
  #allocation2 [shape = 'f32[2,256]{1,0:T(2,128)}', space=vmem, size = 0x800, scoped, tag = 'scratch operand']
  %s0 = inlined_call_operand.vmem [shape: bf16[2,2048], index: 0, kind: input, shape index: {}]
  %s1 = inlined_call_operand.hbm [shape: bf16[2048,256], index: 1, kind: input, shape index: {}]
  %s2 = inlined_call_operand.vmem [shape: f32[1,256], index: 2, kind: input, shape index: {}]
  %s3 = inlined_call_operand.vmem [shape: bf16[256,128], index: 3, kind: input, shape index: {}]
  %s4 = inlined_call_operand.vmem [shape: f32[1,128], index: 4, kind: input, shape index: {}]
  %s5 = inlined_call_operand.hbm [shape: f32[2,128], index: 5, kind: output, shape index: {}]
  %s6 = sld [smem:[#allocation0]]
  $region65: #{dqn_forward.3} parent=0
    _
  %s8 = ssub.s32 1, %s6
  %s9 = scalar_select 0, %s8, %s6
  $region1: #{dqn_forward.3} parent=0
    #allocation3 [shape = 'u8[524288]{0}', space=vmem, size = 0x80000, scoped, tag = 'input window, operand 1']
    #allocation4 [shape = 's32[2]{0}', space=sflag, size = 0x8, scoped, tag = 'scoped memory for dqn_forward.3']
    #allocation5 [shape = 's32[2]{0}', space=sflag, size = 0x8, scoped, tag = 'scoped memory for dqn_forward.3']
    #allocation6 [shape = 'u8[1024]{0}', space=vmem, size = 0x400, scoped, tag = 'output window, operand 0, single buffered']
    %10 = vsyncpa [#allocation4], 0
    %s11 = scalar_lea.sflag [#allocation4], 1
    %12 = vsyncpa %s11, 0
    %13 = vsyncpa [#allocation5], 0
    loop: start=0, step=1, limit=6
    $region2: #{dqn_forward.3} parent=1 // loop_pre_header
      _
    $region3: #{dqn_forward.3} parent=1 // loop_header
      %s15 = sphi 0, %s19
      %p16 = scmp.ge.s32.totalorder %s15, 6
      %s25 = sphi 0, %s27
      %s28 = sphi 0, %s25
      %s29 = sphi 0, %s28
      %s45 = sphi 0, %s29
      %s51 = sphi 0, %s53
      %s54 = sphi 0, %s51
      %s55 = sphi 0, %s54
      %s71 = sphi 0, %s55
      %s75 = sphi 0, %s75
      %s77 = sphi 0, %s75
      %s78 = sphi 0, %s77
      %s92 = sphi 0, %s78
      %s96 = sphi 0, %s96
      %s98 = sphi 0, %s96
      %s99 = sphi 0, %s98
      %s113 = sphi 0, %s99
      %s117 = sphi 0, %s117
      %s119 = sphi 0, %s117
      %s120 = sphi 0, %s119
      %s134 = sphi 0, %s120
      %s138 = sphi 0, %s138
      %s140 = sphi 0, %s138
      %s141 = sphi 0, %s140
      %s155 = sphi 0, %s141
    $region4: #{dqn_forward.3} parent=1 // loop_header_branch
      %18 = sbr.rel (%p16) target = $region8
    $region5: #{dqn_forward.3} parent=1 // loop_body
      %s20 = ssub.s32 %s15, 1
      %s21 = ssub.s32 %s15, 2
      %s22 = sadd.s32 %s15, 1
      %s23 = ssub.s32 %s15, %s22
      %p24 = scmp.eq.s32.totalorder %s23, 0
      %s26 = sadd.s32 %s25, 1
      %s27 = scalar_select %p24, %s25, %s26
      %p30 = pneg %p24
      %p31 = scmp.eq.s32.totalorder %s15, 3
      %p32 = por %p30, %p31
      %p33 = scmp.ne.s32.totalorder %s25, %s28
      %p34 = scmp.eq.s32.totalorder %s15, 0
      %p35 = por %p33, %p34
      %p36 = scmp.ne.s32.totalorder %s25, %s28
      %p37 = scmp.eq.s32.totalorder %s20, 3
      %p38 = por %p36, %p37
      %p39 = scmp.ne.s32.totalorder %s28, %s29
      %p40 = scmp.eq.s32.totalorder %s20, 0
      %p41 = por %p39, %p40
      %p42 = scmp.ne.s32.totalorder %s28, %s29
      %p43 = scmp.eq.s32.totalorder %s21, 3
      %p44 = por %p42, %p43
      %p46 = scmp.ne.s32.totalorder %s29, %s45
      %p47 = scmp.eq.s32.totalorder %s21, 0
      %p48 = por %p46, %p47
      %s49 = ssub.s32 %s15, %s22
      %p50 = scmp.eq.s32.totalorder %s49, 0
      %s52 = sadd.s32 %s51, 1
      %s53 = scalar_select %p50, %s51, %s52
      %p56 = pneg %p50
      %p57 = scmp.eq.s32.totalorder %s15, 3
      %p58 = por %p56, %p57
      %p59 = scmp.ne.s32.totalorder %s51, %s54
      %p60 = scmp.eq.s32.totalorder %s15, 0
      %p61 = por %p59, %p60
      %p62 = scmp.ne.s32.totalorder %s51, %s54
      %p63 = scmp.eq.s32.totalorder %s20, 3
      %p64 = por %p62, %p63
      %p65 = scmp.ne.s32.totalorder %s54, %s55
      %p66 = scmp.eq.s32.totalorder %s20, 0
      %p67 = por %p65, %p66
      %p68 = scmp.ne.s32.totalorder %s54, %s55
      %p69 = scmp.eq.s32.totalorder %s21, 3
      %p70 = por %p68, %p69
      %p72 = scmp.ne.s32.totalorder %s55, %s71
      %p73 = scmp.eq.s32.totalorder %s21, 0
      %p74 = por %p72, %p73
      %s76 = sadd.s32 %s75, 1
      %p79 = scmp.eq.s32.totalorder %s15, 3
      %p80 = scmp.ne.s32.totalorder %s75, %s77
      %p81 = scmp.eq.s32.totalorder %s15, 0
      %p82 = por %p80, %p81
      %p83 = scmp.ne.s32.totalorder %s75, %s77
      %p84 = scmp.eq.s32.totalorder %s20, 3
      %p85 = por %p83, %p84
      %p86 = scmp.ne.s32.totalorder %s77, %s78
      %p87 = scmp.eq.s32.totalorder %s20, 0
      %p88 = por %p86, %p87
      %p89 = scmp.ne.s32.totalorder %s77, %s78
      %p90 = scmp.eq.s32.totalorder %s21, 3
      %p91 = por %p89, %p90
      %p93 = scmp.ne.s32.totalorder %s78, %s92
      %p94 = scmp.eq.s32.totalorder %s21, 0
      %p95 = por %p93, %p94
      %s97 = sadd.s32 %s96, 1
      %p100 = scmp.eq.s32.totalorder %s15, 3
      %p101 = scmp.ne.s32.totalorder %s96, %s98
      %p102 = scmp.eq.s32.totalorder %s15, 0
      %p103 = por %p101, %p102
      %p104 = scmp.ne.s32.totalorder %s96, %s98
      %p105 = scmp.eq.s32.totalorder %s20, 3
      %p106 = por %p104, %p105
      %p107 = scmp.ne.s32.totalorder %s98, %s99
      %p108 = scmp.eq.s32.totalorder %s20, 0
      %p109 = por %p107, %p108
      %p110 = scmp.ne.s32.totalorder %s98, %s99
      %p111 = scmp.eq.s32.totalorder %s21, 3
      %p112 = por %p110, %p111
      %p114 = scmp.ne.s32.totalorder %s99, %s113
      %p115 = scmp.eq.s32.totalorder %s21, 0
      %p116 = por %p114, %p115
      %s118 = sadd.s32 %s117, 1
      %p121 = scmp.eq.s32.totalorder %s15, 3
      %p122 = scmp.ne.s32.totalorder %s117, %s119
      %p123 = scmp.eq.s32.totalorder %s15, 0
      %p124 = por %p122, %p123
      %p125 = scmp.ne.s32.totalorder %s117, %s119
      %p126 = scmp.eq.s32.totalorder %s20, 3
      %p127 = por %p125, %p126
      %p128 = scmp.ne.s32.totalorder %s119, %s120
      %p129 = scmp.eq.s32.totalorder %s20, 0
      %p130 = por %p128, %p129
      %p131 = scmp.ne.s32.totalorder %s119, %s120
      %p132 = scmp.eq.s32.totalorder %s21, 3
      %p133 = por %p131, %p132
      %p135 = scmp.ne.s32.totalorder %s120, %s134
      %p136 = scmp.eq.s32.totalorder %s21, 0
      %p137 = por %p135, %p136
      %s139 = sadd.s32 %s138, 1
      %p142 = scmp.eq.s32.totalorder %s15, 3
      %p143 = scmp.ne.s32.totalorder %s138, %s140
      %p144 = scmp.eq.s32.totalorder %s15, 0
      %p145 = por %p143, %p144
      %p146 = scmp.ne.s32.totalorder %s138, %s140
      %p147 = scmp.eq.s32.totalorder %s20, 3
      %p148 = por %p146, %p147
      %p149 = scmp.ne.s32.totalorder %s140, %s141
      %p150 = scmp.eq.s32.totalorder %s20, 0
      %p151 = por %p149, %p150
      %p152 = scmp.ne.s32.totalorder %s140, %s141
      %p153 = scmp.eq.s32.totalorder %s21, 3
      %p154 = por %p152, %p153
      %p156 = scmp.ne.s32.totalorder %s141, %s155
      %p157 = scmp.eq.s32.totalorder %s21, 0
      %p158 = por %p156, %p157
      %p159 = scmp.le.s32.totalorder 1, %s15
      %p160 = scmp.lt.s32.totalorder %s15, 5
      %p161 = pnand %p159, %p160
      %p162 = pneg %p161
      // Predicated region
      $region9: #{dqn_forward.3} parent=5 // pred_check
        _
      $region10: #{dqn_forward.3} parent=5 // pred_check_branch
        %164 = sbr.rel (%p161) target = $region12
      $region11: #{dqn_forward.3} parent=5 // pred_region
        %s165 = ssub.s32 %s15, 1
        // Predicated region
        $region13: #{dqn_forward.3} parent=11 // pred_check
          %p166 = pneg %p88
        $region14: #{dqn_forward.3} parent=11 // pred_check_branch
          %168 = sbr.rel (%p166) target = $region16
        $region15: #{dqn_forward.3} parent=11 // pred_region
          _
        $region16: #{dqn_forward.3} parent=11 // pred_fallthru
          _
        // Predicated region
        $region17: #{dqn_forward.3} parent=11 // pred_check
          %p169 = pneg %p109
        $region18: #{dqn_forward.3} parent=11 // pred_check_branch
          %171 = sbr.rel (%p169) target = $region20
        $region19: #{dqn_forward.3} parent=11 // pred_region
          _
        $region20: #{dqn_forward.3} parent=11 // pred_fallthru
          _
        // Predicated region
        $region21: #{dqn_forward.3} parent=11 // pred_check
          %p172 = pneg %p130
        $region22: #{dqn_forward.3} parent=11 // pred_check_branch
          %174 = sbr.rel (%p172) target = $region24
        $region23: #{dqn_forward.3} parent=11 // pred_region
          _
        $region24: #{dqn_forward.3} parent=11 // pred_fallthru
          _
      $region12: #{dqn_forward.3} parent=5 // pred_fallthru
        _
      %p175 = scmp.lt.s32.totalorder %s15, 4
      // Predicated region
      $region25: #{dqn_forward.3} parent=5 // pred_check
        %p176 = pneg %p175
      $region26: #{dqn_forward.3} parent=5 // pred_check_branch
        %178 = sbr.rel (%p176) target = $region28
      $region27: #{dqn_forward.3} parent=5 // pred_region
        // Predicated region
        $region29: #{dqn_forward.3} parent=27 // pred_check
          %p179 = pneg %p35
        $region30: #{dqn_forward.3} parent=27 // pred_check_branch
          %181 = sbr.rel (%p179) target = $region32
        $region31: #{dqn_forward.3} parent=27 // pred_region
          %s182 = smul.u32 4, %s15
          %p183 = scmp.lt.s32.totalorder %s182, 15
          %s184 = scalar_select %p183, %s182, 15
          %s185 = scalar_lea.vmem %s0, %s184
          %s186 = smul.u32 4, %s15
        $region32: #{dqn_forward.3} parent=27 // pred_fallthru
          _
        // Predicated region
        $region33: #{dqn_forward.3} parent=27 // pred_check
          %p187 = pneg %p61
        $region34: #{dqn_forward.3} parent=27 // pred_check_branch
          %189 = sbr.rel (%p187) target = $region36
        $region35: #{dqn_forward.3} parent=27 // pred_region
          %s190 = sand.u32 %s51, 1
          %s191 = scalar_lea.sflag [#allocation4], %s190
          %s192 = sand.u32 %s51, 1
          %s193 = smul.addr %s192, 512
          %s194 = scalar_lea.vmem [#allocation3], %s193
          %s195 = smul.u32 64, %s15
          %s197 = ssub.s32 8192, 8192
          %198 = vsyncadd %s191, %s197
          %s199 = smul.addr %s195, 2
          %s200 = smul.addr %s199, 64
          %s201 = scalar_lea.hbm %s1, %s200
          %s202 = sshll.u32 %s194, 4
          %s203 = int_to_ptr.vmem [resolvable:$true] %s202
          %208 = dma.hbm_to_vmem [thread:$0]  %s201, 8192, %s203, %s191, 128, 128, 8
        $region36: #{dqn_forward.3} parent=27 // pred_fallthru
          _
      $region28: #{dqn_forward.3} parent=5 // pred_fallthru
        _
      %p209 = scmp.le.s32.totalorder 1, %s15
      %p210 = scmp.lt.s32.totalorder %s15, 5
      %p211 = pnand %p209, %p210
      %p212 = pneg %p211
      // Predicated region
      $region37: #{dqn_forward.3} parent=5 // pred_check
        _
      $region38: #{dqn_forward.3} parent=5 // pred_check_branch
        %214 = sbr.rel (%p211) target = $region40
      $region39: #{dqn_forward.3} parent=5 // pred_region
        %s215 = ssub.s32 %s15, 1
        %s216 = sand.u32 %s54, 1
        %s217 = scalar_lea.sflag [#allocation4], %s216
        %s218 = sand.u32 %s54, 1
        %s219 = smul.addr %s218, 512
        %s220 = scalar_lea.vmem [#allocation3], %s219
        // Predicated region
        $region41: #{dqn_forward.3} parent=39 // pred_check
          %p221 = pneg %p67
        $region42: #{dqn_forward.3} parent=39 // pred_check_branch
          %223 = sbr.rel (%p221) target = $region44
        $region43: #{dqn_forward.3} parent=39 // pred_region
          %224 = dma.done %s217, 8192
        $region44: #{dqn_forward.3} parent=39 // pred_fallthru
          _
        %s225 = smul.u32 4, %s20
        %p226 = scmp.lt.s32.totalorder %s225, 15
        %s227 = scalar_select %p226, %s225, 15
        %s228 = scalar_lea.vmem %s0, %s227
        %p229 = pneg %p41
        %p230 = pneg %p38
        %s231 = sand.u32 %s54, 1
        %s232 = scalar_lea.sflag [#allocation4], %s231
        %s233 = sand.u32 %s54, 1
        %s234 = smul.addr %s233, 512
        %s235 = scalar_lea.vmem [#allocation3], %s234
        %p236 = pneg %p67
        %p237 = pneg %p64
        %p238 = pneg %p88
        %p239 = pneg %p85
        %p240 = pneg %p109
        %p241 = pneg %p106
        %p242 = pneg %p130
        %p243 = pneg %p127
        %p244 = pneg %p151
        %p245 = pneg %p148
        %s246 = smul.u32 4, %s20
        %p247 = scmp.lt.s32.totalorder %s246, 15
        %s248 = scalar_select %p247, %s246, 15
        %s249 = scalar_lea.vmem %s0, %s248
        %s250 = smul.u32 4, %s20
        %s251 = smul.u32 64, %s20
        %p253 = scmp.eq.s32.totalorder %s20, 0
        // Predicated region
        $region45: #{dqn_forward.3} parent=39 // pred_check
          %p254 = pneg %p253
        $region46: #{dqn_forward.3} parent=39 // pred_check_branch
          %256 = sbr.rel (%p254) target = $region48
        $region47: #{dqn_forward.3} parent=39 // pred_region
          %257 = vst [vmem:[#allocation2] sm:$0xf] 0.0
        $region48: #{dqn_forward.3} parent=39 // pred_fallthru
          _
        %v258 = vld [vmem:[#allocation2] sm:$0xf]
        %v259 = vld [vmem:[%s249] sm:$0xf]
        %v260 = vld [vmem:[%s220] sm:$0xff]
        %v261 = vld [vmem:[%s220 + $0x8] sm:$0xff]
        %v262 = vld [vmem:[%s220 + $0x10] sm:$0xff]
        %v263 = vld [vmem:[%s220 + $0x18] sm:$0xff]
        %v264 = vld [vmem:[%s220 + $0x20] sm:$0xff]
        %v265 = vld [vmem:[%s220 + $0x28] sm:$0xff]
        %v266 = vld [vmem:[%s220 + $0x30] sm:$0xff]
        %v267 = vld [vmem:[%s220 + $0x38] sm:$0xff]
        %v268 = vld [vmem:[%s220 + $0x40] sm:$0xff]
        %v269 = vld [vmem:[%s220 + $0x48] sm:$0xff]
        %v270 = vld [vmem:[%s220 + $0x50] sm:$0xff]
        %v271 = vld [vmem:[%s220 + $0x58] sm:$0xff]
        %v272 = vld [vmem:[%s220 + $0x60] sm:$0xff]
        %v273 = vld [vmem:[%s220 + $0x68] sm:$0xff]
        %v274 = vld [vmem:[%s220 + $0x70] sm:$0xff]
        %v275 = vld [vmem:[%s220 + $0x78] sm:$0xff]
        %v276 = vld [vmem:[%s220 + $0x80] sm:$0xff]
        %v277 = vld [vmem:[%s220 + $0x88] sm:$0xff]
        %v278 = vld [vmem:[%s220 + $0x90] sm:$0xff]
        %v279 = vld [vmem:[%s220 + $0x98] sm:$0xff]
        %v280 = vld [vmem:[%s220 + $0xa0] sm:$0xff]
        %v281 = vld [vmem:[%s220 + $0xa8] sm:$0xff]
        %v282 = vld [vmem:[%s220 + $0xb0] sm:$0xff]
        %v283 = vld [vmem:[%s220 + $0xb8] sm:$0xff]
        %v284 = vld [vmem:[%s220 + $0xc0] sm:$0xff]
        %v285 = vld [vmem:[%s220 + $0xc8] sm:$0xff]
        %v286 = vld [vmem:[%s220 + $0xd0] sm:$0xff]
        %v287 = vld [vmem:[%s220 + $0xd8] sm:$0xff]
        %v288 = vld [vmem:[%s220 + $0xe0] sm:$0xff]
        %v289 = vld [vmem:[%s220 + $0xe8] sm:$0xff]
        %v290 = vld [vmem:[%s220 + $0xf0] sm:$0xff]
        %v291 = vld [vmem:[%s220 + $0xf8] sm:$0xff]
        %v292 = vld [vmem:[%s220 + $0x100] sm:$0xff]
        %v293 = vld [vmem:[%s220 + $0x108] sm:$0xff]
        %v294 = vld [vmem:[%s220 + $0x110] sm:$0xff]
        %v295 = vld [vmem:[%s220 + $0x118] sm:$0xff]
        %v296 = vld [vmem:[%s220 + $0x120] sm:$0xff]
        %v297 = vld [vmem:[%s220 + $0x128] sm:$0xff]
        %v298 = vld [vmem:[%s220 + $0x130] sm:$0xff]
        %v299 = vld [vmem:[%s220 + $0x138] sm:$0xff]
        %v300 = vld [vmem:[%s220 + $0x140] sm:$0xff]
        %v301 = vld [vmem:[%s220 + $0x148] sm:$0xff]
        %v302 = vld [vmem:[%s220 + $0x150] sm:$0xff]
        %v303 = vld [vmem:[%s220 + $0x158] sm:$0xff]
        %v304 = vld [vmem:[%s220 + $0x160] sm:$0xff]
        %v305 = vld [vmem:[%s220 + $0x168] sm:$0xff]
        %v306 = vld [vmem:[%s220 + $0x170] sm:$0xff]
        %v307 = vld [vmem:[%s220 + $0x178] sm:$0xff]
        %v308 = vld [vmem:[%s220 + $0x180] sm:$0xff]
        %v309 = vld [vmem:[%s220 + $0x188] sm:$0xff]
        %v310 = vld [vmem:[%s220 + $0x190] sm:$0xff]
        %v311 = vld [vmem:[%s220 + $0x198] sm:$0xff]
        %v312 = vld [vmem:[%s220 + $0x1a0] sm:$0xff]
        %v313 = vld [vmem:[%s220 + $0x1a8] sm:$0xff]
        %v314 = vld [vmem:[%s220 + $0x1b0] sm:$0xff]
        %v315 = vld [vmem:[%s220 + $0x1b8] sm:$0xff]
        %v316 = vld [vmem:[%s220 + $0x1c0] sm:$0xff]
        %v317 = vld [vmem:[%s220 + $0x1c8] sm:$0xff]
        %v318 = vld [vmem:[%s220 + $0x1d0] sm:$0xff]
        %v319 = vld [vmem:[%s220 + $0x1d8] sm:$0xff]
        %v320 = vld [vmem:[%s220 + $0x1e0] sm:$0xff]
        %v321 = vld [vmem:[%s220 + $0x1e8] sm:$0xff]
        %v322 = vld [vmem:[%s220 + $0x1f0] sm:$0xff]
        %v323 = vld [vmem:[%s220 + $0x1f8] sm:$0xff]
        %v326 = vunpack.c.l.s4 1966171168
        %v327 = vunpack.c.0.s8 %v326
        %v328 = vlaneseq
        %v329 = vshrl.u32 %v328, 7
        %v330 = vsub.s32 %v327, %v329
        %v331 = vrot.slane %v259, %v330
        %v332 = vcombine.high %v331, %v331
        %v334 = vunpack.c.l.s4 1966171168
        %v335 = vunpack.c.0.s8 %v334
        %v336 = vlaneseq
        %v337 = vshrl.u32 %v336, 7
        %v338 = vsub.s32 %v335, %v337
        %v339 = vrot.slane %v331, %v338
        %v341 = vunpack.c.l.s4 1966171168
        %v342 = vunpack.c.0.s8 %v341
        %v343 = vlaneseq
        %v344 = vshrl.u32 %v343, 7
        %v345 = vsub.s32 %v342, %v344
        %v346 = vrot.slane %v332, %v345
        %v347 = vcombine.high %v339, %v339
        %v348 = vcombine.high %v346, %v346
        %v417 = vunpack.c.l.b16 %v260
        %v418 = vunpack.c.h.b16 %v260
        %v419 = vunpack.c.l.b16 %v261
        %v420 = vunpack.c.h.b16 %v261
        %v421 = vunpack.c.l.b16 %v262
        %v422 = vunpack.c.h.b16 %v262
        %v423 = vunpack.c.l.b16 %v263
        %v424 = vunpack.c.h.b16 %v263
        %v425 = vunpack.c.l.b16 %v264
        %v426 = vunpack.c.h.b16 %v264
        %v427 = vunpack.c.l.b16 %v265
        %v428 = vunpack.c.h.b16 %v265
        %v429 = vunpack.c.l.b16 %v266
        %v430 = vunpack.c.h.b16 %v266
        %v431 = vunpack.c.l.b16 %v267
        %v432 = vunpack.c.h.b16 %v267
        %v433 = vunpack.c.l.b16 %v268
        %v434 = vunpack.c.h.b16 %v268
        %v435 = vunpack.c.l.b16 %v269
        %v436 = vunpack.c.h.b16 %v269
        %v437 = vunpack.c.l.b16 %v270
        %v438 = vunpack.c.h.b16 %v270
        %v439 = vunpack.c.l.b16 %v271
        %v440 = vunpack.c.h.b16 %v271
        %v441 = vunpack.c.l.b16 %v272
        %v442 = vunpack.c.h.b16 %v272
        %v443 = vunpack.c.l.b16 %v273
        %v444 = vunpack.c.h.b16 %v273
        %v445 = vunpack.c.l.b16 %v274
        %v446 = vunpack.c.h.b16 %v274
        %v447 = vunpack.c.l.b16 %v275
        %v448 = vunpack.c.h.b16 %v275
        %v449 = vunpack.c.l.b16 %v276
        %v450 = vunpack.c.h.b16 %v276
        %v451 = vunpack.c.l.b16 %v277
        %v452 = vunpack.c.h.b16 %v277
        %v453 = vunpack.c.l.b16 %v278
        %v454 = vunpack.c.h.b16 %v278
        %v455 = vunpack.c.l.b16 %v279
        %v456 = vunpack.c.h.b16 %v279
        %v457 = vunpack.c.l.b16 %v280
        %v458 = vunpack.c.h.b16 %v280
        %v459 = vunpack.c.l.b16 %v281
        %v460 = vunpack.c.h.b16 %v281
        %v461 = vunpack.c.l.b16 %v282
        %v462 = vunpack.c.h.b16 %v282
        %v463 = vunpack.c.l.b16 %v283
        %v464 = vunpack.c.h.b16 %v283
        %v465 = vunpack.c.l.b16 %v284
        %v466 = vunpack.c.h.b16 %v284
        %v467 = vunpack.c.l.b16 %v285
        %v468 = vunpack.c.h.b16 %v285
        %v469 = vunpack.c.l.b16 %v286
        %v470 = vunpack.c.h.b16 %v286
        %v471 = vunpack.c.l.b16 %v287
        %v472 = vunpack.c.h.b16 %v287
        %v473 = vunpack.c.l.b16 %v288
        %v474 = vunpack.c.h.b16 %v288
        %v475 = vunpack.c.l.b16 %v289
        %v476 = vunpack.c.h.b16 %v289
        %v477 = vunpack.c.l.b16 %v290
        %v478 = vunpack.c.h.b16 %v290
        %v479 = vunpack.c.l.b16 %v291
        %v480 = vunpack.c.h.b16 %v291
        %v481 = vunpack.c.l.b16 %v292
        %v482 = vunpack.c.h.b16 %v292
        %v483 = vunpack.c.l.b16 %v293
        %v484 = vunpack.c.h.b16 %v293
        %v485 = vunpack.c.l.b16 %v294
        %v486 = vunpack.c.h.b16 %v294
        %v487 = vunpack.c.l.b16 %v295
        %v488 = vunpack.c.h.b16 %v295
        %v489 = vunpack.c.l.b16 %v296
        %v490 = vunpack.c.h.b16 %v296
        %v491 = vunpack.c.l.b16 %v297
        %v492 = vunpack.c.h.b16 %v297
        %v493 = vunpack.c.l.b16 %v298
        %v494 = vunpack.c.h.b16 %v298
        %v495 = vunpack.c.l.b16 %v299
        %v496 = vunpack.c.h.b16 %v299
        %v497 = vunpack.c.l.b16 %v300
        %v498 = vunpack.c.h.b16 %v300
        %v499 = vunpack.c.l.b16 %v301
        %v500 = vunpack.c.h.b16 %v301
        %v501 = vunpack.c.l.b16 %v302
        %v502 = vunpack.c.h.b16 %v302
        %v503 = vunpack.c.l.b16 %v303
        %v504 = vunpack.c.h.b16 %v303
        %v505 = vunpack.c.l.b16 %v304
        %v506 = vunpack.c.h.b16 %v304
        %v507 = vunpack.c.l.b16 %v305
        %v508 = vunpack.c.h.b16 %v305
        %v509 = vunpack.c.l.b16 %v306
        %v510 = vunpack.c.h.b16 %v306
        %v511 = vunpack.c.l.b16 %v307
        %v512 = vunpack.c.h.b16 %v307
        %v513 = vunpack.c.l.b16 %v308
        %v514 = vunpack.c.h.b16 %v308
        %v515 = vunpack.c.l.b16 %v309
        %v516 = vunpack.c.h.b16 %v309
        %v517 = vunpack.c.l.b16 %v310
        %v518 = vunpack.c.h.b16 %v310
        %v519 = vunpack.c.l.b16 %v311
        %v520 = vunpack.c.h.b16 %v311
        %v521 = vunpack.c.l.b16 %v312
        %v522 = vunpack.c.h.b16 %v312
        %v523 = vunpack.c.l.b16 %v313
        %v524 = vunpack.c.h.b16 %v313
        %v525 = vunpack.c.l.b16 %v314
        %v526 = vunpack.c.h.b16 %v314
        %v527 = vunpack.c.l.b16 %v315
        %v528 = vunpack.c.h.b16 %v315
        %v529 = vunpack.c.l.b16 %v316
        %v530 = vunpack.c.h.b16 %v316
        %v531 = vunpack.c.l.b16 %v317
        %v532 = vunpack.c.h.b16 %v317
        %v533 = vunpack.c.l.b16 %v318
        %v534 = vunpack.c.h.b16 %v318
        %v535 = vunpack.c.l.b16 %v319
        %v536 = vunpack.c.h.b16 %v319
        %v537 = vunpack.c.l.b16 %v320
        %v538 = vunpack.c.h.b16 %v320
        %v539 = vunpack.c.l.b16 %v321
        %v540 = vunpack.c.h.b16 %v321
        %v541 = vunpack.c.l.b16 %v322
        %v542 = vunpack.c.h.b16 %v322
        %v543 = vunpack.c.l.b16 %v323
        %v544 = vunpack.c.h.b16 %v323
        %v545 = vpack.c.b16 %v419, %v417
        %v546 = vpack.c.b16 %v420, %v418
        %v547 = vpack.c.b16 %v423, %v421
        %v548 = vpack.c.b16 %v424, %v422
        %v549 = vpack.c.b16 %v427, %v425
        %v550 = vpack.c.b16 %v428, %v426
        %v551 = vpack.c.b16 %v431, %v429
        %v552 = vpack.c.b16 %v432, %v430
        %v553 = vpack.c.b16 %v435, %v433
        %v554 = vpack.c.b16 %v436, %v434
        %v555 = vpack.c.b16 %v439, %v437
        %v556 = vpack.c.b16 %v440, %v438
        %v557 = vpack.c.b16 %v443, %v441
        %v558 = vpack.c.b16 %v444, %v442
        %v559 = vpack.c.b16 %v447, %v445
        %v560 = vpack.c.b16 %v448, %v446
        %v561 = vpack.c.b16 %v451, %v449
        %v562 = vpack.c.b16 %v452, %v450
        %v563 = vpack.c.b16 %v455, %v453
        %v564 = vpack.c.b16 %v456, %v454
        %v565 = vpack.c.b16 %v459, %v457
        %v566 = vpack.c.b16 %v460, %v458
        %v567 = vpack.c.b16 %v463, %v461
        %v568 = vpack.c.b16 %v464, %v462
        %v569 = vpack.c.b16 %v467, %v465
        %v570 = vpack.c.b16 %v468, %v466
        %v571 = vpack.c.b16 %v471, %v469
        %v572 = vpack.c.b16 %v472, %v470
        %v573 = vpack.c.b16 %v475, %v473
        %v574 = vpack.c.b16 %v476, %v474
        %v575 = vpack.c.b16 %v479, %v477
        %v576 = vpack.c.b16 %v480, %v478
        %v577 = vpack.c.b16 %v483, %v481
        %v578 = vpack.c.b16 %v484, %v482
        %v579 = vpack.c.b16 %v487, %v485
        %v580 = vpack.c.b16 %v488, %v486
        %v581 = vpack.c.b16 %v491, %v489
        %v582 = vpack.c.b16 %v492, %v490
        %v583 = vpack.c.b16 %v495, %v493
        %v584 = vpack.c.b16 %v496, %v494
        %v585 = vpack.c.b16 %v499, %v497
        %v586 = vpack.c.b16 %v500, %v498
        %v587 = vpack.c.b16 %v503, %v501
        %v588 = vpack.c.b16 %v504, %v502
        %v589 = vpack.c.b16 %v507, %v505
        %v590 = vpack.c.b16 %v508, %v506
        %v591 = vpack.c.b16 %v511, %v509
        %v592 = vpack.c.b16 %v512, %v510
        %v593 = vpack.c.b16 %v515, %v513
        %v594 = vpack.c.b16 %v516, %v514
        %v595 = vpack.c.b16 %v519, %v517
        %v596 = vpack.c.b16 %v520, %v518
        %v597 = vpack.c.b16 %v523, %v521
        %v598 = vpack.c.b16 %v524, %v522
        %v599 = vpack.c.b16 %v527, %v525
        %v600 = vpack.c.b16 %v528, %v526
        %v601 = vpack.c.b16 %v531, %v529
        %v602 = vpack.c.b16 %v532, %v530
        %v603 = vpack.c.b16 %v535, %v533
        %v604 = vpack.c.b16 %v536, %v534
        %v605 = vpack.c.b16 %v539, %v537
        %v606 = vpack.c.b16 %v540, %v538
        %v607 = vpack.c.b16 %v543, %v541
        %v608 = vpack.c.b16 %v544, %v542
        %673 = vmatprep.subr.bf16.mxu0 %v546
        %674 = vmatpush1.bf16.msra.mxu0 %v545
        %675 = vmatprep.subr.bf16.mxu0 %v548
        %676 = vmatpush1.bf16.msra.mxu0 %v547
        %677 = vmatprep.subr.bf16.mxu0 %v550
        %678 = vmatpush1.bf16.msra.mxu0 %v549
        %679 = vmatprep.subr.bf16.mxu0 %v552
        %680 = vmatpush1.bf16.msra.mxu0 %v551
        %681 = vmatprep.subr.bf16.mxu0 %v554
        %682 = vmatpush1.bf16.msra.mxu0 %v553
        %683 = vmatprep.subr.bf16.mxu0 %v556
        %684 = vmatpush1.bf16.msra.mxu0 %v555
        %685 = vmatprep.subr.bf16.mxu0 %v558
        %686 = vmatpush1.bf16.msra.mxu0 %v557
        %687 = vmatprep.subr.bf16.mxu0 %v560
        %688 = vmatpush1.bf16.msra.mxu0 %v559
        %689 = vmatprep.subr.bf16.mxu0 %v562
        %690 = vmatpush1.bf16.msra.mxu0 %v561
        %691 = vmatprep.subr.bf16.mxu0 %v564
        %692 = vmatpush1.bf16.msra.mxu0 %v563
        %693 = vmatprep.subr.bf16.mxu0 %v566
        %694 = vmatpush1.bf16.msra.mxu0 %v565
        %695 = vmatprep.subr.bf16.mxu0 %v568
        %696 = vmatpush1.bf16.msra.mxu0 %v567
        %697 = vmatprep.subr.bf16.mxu0 %v570
        %698 = vmatpush1.bf16.msra.mxu0 %v569
        %699 = vmatprep.subr.bf16.mxu0 %v572
        %700 = vmatpush1.bf16.msra.mxu0 %v571
        %701 = vmatprep.subr.bf16.mxu0 %v574
        %702 = vmatpush1.bf16.msra.mxu0 %v573
        %703 = vmatprep.subr.bf16.mxu0 %v576
        %704 = vmatpush1.bf16.msra.mxu0 %v575
        %705 = vmatprep.mubr.bf16.mxu0 %v346
        %706 = vmatmul.mubr.bf16.gmra.mrb[0].mxu0 %v339
        %v707 = vpop.f32.mrb[0].mxu0
        %v708 = vadd.f32 0.0, %v707
        %v709 = vpop.f32.mrb[0].mxu0
        %v710 = vadd.f32 0.0, %v709
        %v711 = vpop.f32.mrb[0].mxu0
        %v712 = vpop.f32.mrb[0].mxu0
        %713 = vdwg.mxu0
        %714 = vmatprep.subr.bf16.mxu0 %v578
        %715 = vmatpush1.bf16.msra.mxu0 %v577
        %716 = vmatprep.subr.bf16.mxu0 %v580
        %717 = vmatpush1.bf16.msra.mxu0 %v579
        %718 = vmatprep.subr.bf16.mxu0 %v582
        %719 = vmatpush1.bf16.msra.mxu0 %v581
        %720 = vmatprep.subr.bf16.mxu0 %v584
        %721 = vmatpush1.bf16.msra.mxu0 %v583
        %722 = vmatprep.subr.bf16.mxu0 %v586
        %723 = vmatpush1.bf16.msra.mxu0 %v585
        %724 = vmatprep.subr.bf16.mxu0 %v588
        %725 = vmatpush1.bf16.msra.mxu0 %v587
        %726 = vmatprep.subr.bf16.mxu0 %v590
        %727 = vmatpush1.bf16.msra.mxu0 %v589
        %728 = vmatprep.subr.bf16.mxu0 %v592
        %729 = vmatpush1.bf16.msra.mxu0 %v591
        %730 = vmatprep.subr.bf16.mxu0 %v594
        %731 = vmatpush1.bf16.msra.mxu0 %v593
        %732 = vmatprep.subr.bf16.mxu0 %v596
        %733 = vmatpush1.bf16.msra.mxu0 %v595
        %734 = vmatprep.subr.bf16.mxu0 %v598
        %735 = vmatpush1.bf16.msra.mxu0 %v597
        %736 = vmatprep.subr.bf16.mxu0 %v600
        %737 = vmatpush1.bf16.msra.mxu0 %v599
        %738 = vmatprep.subr.bf16.mxu0 %v602
        %739 = vmatpush1.bf16.msra.mxu0 %v601
        %740 = vmatprep.subr.bf16.mxu0 %v604
        %741 = vmatpush1.bf16.msra.mxu0 %v603
        %742 = vmatprep.subr.bf16.mxu0 %v606
        %743 = vmatpush1.bf16.msra.mxu0 %v605
        %744 = vmatprep.subr.bf16.mxu0 %v608
        %745 = vmatpush1.bf16.msra.mxu0 %v607
        %746 = vmatprep.mubr.bf16.mxu0 %v348
        %747 = vmatmul.mubr.bf16.gmra.mrb[0].mxu0 %v347
        %v748 = vpop.f32.mrb[0].mxu0
        %v749 = vadd.f32 %v708, %v748
        %v750 = vpop.f32.mrb[0].mxu0
        %v751 = vadd.f32 %v710, %v750
        %v752 = vpop.f32.mrb[0].mxu0
        %v753 = vpop.f32.mrb[0].mxu0
        %754 = vdwg.mxu0
        %v757 = vcombine.low %v749, %v751
        %v759 = vunpack.c.l.s4 1983009808
        %v760 = vunpack.c.0.s8 %v759
        %v761 = vlaneseq
        %v762 = vshrl.u32 %v761, 7
        %v763 = vsub.s32 %v760, %v762
        %v764 = vrot.slane %v757, %v763
        %v766 = vadd.f32 %v258, %v764
        %767 = vst [vmem:[#allocation2] sm:$0xf] %v766
        %p768 = scmp.eq.s32.totalorder %s20, 3
        // Predicated region
        $region49: #{dqn_forward.3} parent=39 // pred_check
          %p769 = pneg %p768
        $region50: #{dqn_forward.3} parent=39 // pred_check_branch
          %771 = sbr.rel (%p769) target = $region52
        $region51: #{dqn_forward.3} parent=39 // pred_region
          %v772 = vld [vmem:[#allocation2] sm:$0xf]
          %v773 = vld [vmem:[%s2] sm:$0x3]
          %v775 = vlaneseq
          %v776 = vshrl.u32 %v775, 7
          %v777 = vsub.s32 0, %v776
          %v778 = vrot.slane %v773, %v777
          %v779 = vlaneseq
          %v780 = vshrl.u32 %v779, 7
          %v781 = vsub.s32 1, %v780
          %v782 = vrot.slane %v773, %v781
          %v783 = vcombine.low %v778, %v782
          %v785 = vunpack.c.l.s4 1983009808
          %v786 = vunpack.c.0.s8 %v785
          %v787 = vlaneseq
          %v788 = vshrl.u32 %v787, 7
          %v789 = vsub.s32 %v786, %v788
          %v790 = vrot.slane %v783, %v789
          %v792 = vadd.f32 %v772, %v790
          %v793 = vmax.f32 %v792, 0.0
          %v796 = vunpack.c.l.s4 1983009808
          %v797 = vunpack.c.0.s8 %v796
          %v798 = vlaneseq
          %v799 = vshrl.u32 %v798, 7
          %v800 = vsub.s32 %v797, %v799
          %v801 = vrot.slane %v793, %v800
          %v802 = vcombine.high %v801, %v801
          %v805 = vpack.c.bf16 %v801, %v801
          %v806 = vpack.c.bf16 %v802, %v802
          %v807 = vld [vmem:[%s3] sm:$0xf]
          %v808 = vld [vmem:[%s3 + $0x4] sm:$0xf]
          %v809 = vld [vmem:[%s3 + $0x8] sm:$0xf]
          %v810 = vld [vmem:[%s3 + $0xc] sm:$0xf]
          %v811 = vld [vmem:[%s3 + $0x10] sm:$0xf]
          %v812 = vld [vmem:[%s3 + $0x14] sm:$0xf]
          %v813 = vld [vmem:[%s3 + $0x18] sm:$0xf]
          %v814 = vld [vmem:[%s3 + $0x1c] sm:$0xf]
          %v815 = vld [vmem:[%s3 + $0x20] sm:$0xf]
          %v816 = vld [vmem:[%s3 + $0x24] sm:$0xf]
          %v817 = vld [vmem:[%s3 + $0x28] sm:$0xf]
          %v818 = vld [vmem:[%s3 + $0x2c] sm:$0xf]
          %v819 = vld [vmem:[%s3 + $0x30] sm:$0xf]
          %v820 = vld [vmem:[%s3 + $0x34] sm:$0xf]
          %v821 = vld [vmem:[%s3 + $0x38] sm:$0xf]
          %v822 = vld [vmem:[%s3 + $0x3c] sm:$0xf]
          %v823 = vld [vmem:[%s3 + $0x40] sm:$0xf]
          %v824 = vld [vmem:[%s3 + $0x44] sm:$0xf]
          %v825 = vld [vmem:[%s3 + $0x48] sm:$0xf]
          %v826 = vld [vmem:[%s3 + $0x4c] sm:$0xf]
          %v827 = vld [vmem:[%s3 + $0x50] sm:$0xf]
          %v828 = vld [vmem:[%s3 + $0x54] sm:$0xf]
          %v829 = vld [vmem:[%s3 + $0x58] sm:$0xf]
          %v830 = vld [vmem:[%s3 + $0x5c] sm:$0xf]
          %v831 = vld [vmem:[%s3 + $0x60] sm:$0xf]
          %v832 = vld [vmem:[%s3 + $0x64] sm:$0xf]
          %v833 = vld [vmem:[%s3 + $0x68] sm:$0xf]
          %v834 = vld [vmem:[%s3 + $0x6c] sm:$0xf]
          %v835 = vld [vmem:[%s3 + $0x70] sm:$0xf]
          %v836 = vld [vmem:[%s3 + $0x74] sm:$0xf]
          %v837 = vld [vmem:[%s3 + $0x78] sm:$0xf]
          %v838 = vld [vmem:[%s3 + $0x7c] sm:$0xf]
          %v839 = vld [vmem:[%s4] sm:$0x1]
          %v841 = vlaneseq
          %v842 = vshrl.u32 %v841, 7
          %v843 = vsub.s32 0, %v842
          %v844 = vrot.slane %v839, %v843
          %v878 = vunpack.c.l.b16 %v807
          %v879 = vunpack.c.l.b16 %v808
          %v880 = vunpack.c.l.b16 %v809
          %v881 = vunpack.c.l.b16 %v810
          %v882 = vunpack.c.l.b16 %v811
          %v883 = vunpack.c.l.b16 %v812
          %v884 = vunpack.c.l.b16 %v813
          %v885 = vunpack.c.l.b16 %v814
          %v886 = vunpack.c.l.b16 %v815
          %v887 = vunpack.c.l.b16 %v816
          %v888 = vunpack.c.l.b16 %v817
          %v889 = vunpack.c.l.b16 %v818
          %v890 = vunpack.c.l.b16 %v819
          %v891 = vunpack.c.l.b16 %v820
          %v892 = vunpack.c.l.b16 %v821
          %v893 = vunpack.c.l.b16 %v822
          %v894 = vunpack.c.l.b16 %v823
          %v895 = vunpack.c.l.b16 %v824
          %v896 = vunpack.c.l.b16 %v825
          %v897 = vunpack.c.l.b16 %v826
          %v898 = vunpack.c.l.b16 %v827
          %v899 = vunpack.c.l.b16 %v828
          %v900 = vunpack.c.l.b16 %v829
          %v901 = vunpack.c.l.b16 %v830
          %v902 = vunpack.c.l.b16 %v831
          %v903 = vunpack.c.l.b16 %v832
          %v904 = vunpack.c.l.b16 %v833
          %v905 = vunpack.c.l.b16 %v834
          %v906 = vunpack.c.l.b16 %v835
          %v907 = vunpack.c.l.b16 %v836
          %v908 = vunpack.c.l.b16 %v837
          %v909 = vunpack.c.l.b16 %v838
          %v910 = vpack.c.b16 %v879, %v878
          %v911 = vpack.c.b16 %v881, %v880
          %v912 = vpack.c.b16 %v883, %v882
          %v913 = vpack.c.b16 %v885, %v884
          %v914 = vpack.c.b16 %v887, %v886
          %v915 = vpack.c.b16 %v889, %v888
          %v916 = vpack.c.b16 %v891, %v890
          %v917 = vpack.c.b16 %v893, %v892
          %v918 = vpack.c.b16 %v895, %v894
          %v919 = vpack.c.b16 %v897, %v896
          %v920 = vpack.c.b16 %v899, %v898
          %v921 = vpack.c.b16 %v901, %v900
          %v922 = vpack.c.b16 %v903, %v902
          %v923 = vpack.c.b16 %v905, %v904
          %v924 = vpack.c.b16 %v907, %v906
          %v925 = vpack.c.b16 %v909, %v908
          %942 = vmatprep.subr.bf16.mxu0 0
          %943 = vmatpush1.bf16.msra.mxu0 %v910
          %944 = vmatprep.subr.bf16.mxu0 0
          %945 = vmatpush1.bf16.msra.mxu0 %v911
          %946 = vmatprep.subr.bf16.mxu0 0
          %947 = vmatpush1.bf16.msra.mxu0 %v912
          %948 = vmatprep.subr.bf16.mxu0 0
          %949 = vmatpush1.bf16.msra.mxu0 %v913
          %950 = vmatprep.subr.bf16.mxu0 0
          %951 = vmatpush1.bf16.msra.mxu0 %v914
          %952 = vmatprep.subr.bf16.mxu0 0
          %953 = vmatpush1.bf16.msra.mxu0 %v915
          %954 = vmatprep.subr.bf16.mxu0 0
          %955 = vmatpush1.bf16.msra.mxu0 %v916
          %956 = vmatprep.subr.bf16.mxu0 0
          %957 = vmatpush1.bf16.msra.mxu0 %v917
          %958 = vmatprep.subr.bf16.mxu0 0
          %959 = vmatpush1.bf16.msra.mxu0 %v918
          %960 = vmatprep.subr.bf16.mxu0 0
          %961 = vmatpush1.bf16.msra.mxu0 %v919
          %962 = vmatprep.subr.bf16.mxu0 0
          %963 = vmatpush1.bf16.msra.mxu0 %v920
          %964 = vmatprep.subr.bf16.mxu0 0
          %965 = vmatpush1.bf16.msra.mxu0 %v921
          %966 = vmatprep.subr.bf16.mxu0 0
          %967 = vmatpush1.bf16.msra.mxu0 %v922
          %968 = vmatprep.subr.bf16.mxu0 0
          %969 = vmatpush1.bf16.msra.mxu0 %v923
          %970 = vmatprep.subr.bf16.mxu0 0
          %971 = vmatpush1.bf16.msra.mxu0 %v924
          %972 = vmatprep.subr.bf16.mxu0 0
          %973 = vmatpush1.bf16.msra.mxu0 %v925
          %974 = vmatprep.mubr.bf16.mxu0 %v806
          %975 = vmatmul.mubr.bf16.gmra.mrb[0].mxu0 %v805
          %v976 = vpop.f32.mrb[0].mxu0
          %v977 = vadd.f32 %v844, %v976
          %v978 = vpop.f32.mrb[0].mxu0
          %v979 = vpop.f32.mrb[0].mxu0
          %v980 = vpop.f32.mrb[0].mxu0
          %981 = vdwg.mxu0
          %982 = vst [vmem:[#allocation6] sm:$0x3] %v977
        $region52: #{dqn_forward.3} parent=39 // pred_fallthru
          _
        // Predicated region
        $region53: #{dqn_forward.3} parent=39 // pred_check
          %p983 = pneg %p148
        $region54: #{dqn_forward.3} parent=39 // pred_check_branch
          %985 = sbr.rel (%p983) target = $region56
        $region55: #{dqn_forward.3} parent=39 // pred_region
          %s987 = ssub.s32 32, 32
          %988 = vsyncadd [#allocation5], %s987
          %s990 = sshll.u32 [#allocation6], 4
          %s991 = int_to_ptr.vmem [resolvable:$true] %s990
          %993 = dma.vmem_to_hbm [thread:$0]  %s991, 32, %s5, [#allocation5]
        $region56: #{dqn_forward.3} parent=39 // pred_fallthru
          _
        // Predicated region
        $region57: #{dqn_forward.3} parent=39 // pred_check
          %p994 = pneg %p148
        $region58: #{dqn_forward.3} parent=39 // pred_check_branch
          %996 = sbr.rel (%p994) target = $region60
        $region59: #{dqn_forward.3} parent=39 // pred_region
          %997 = dma.done [#allocation5], 32
        $region60: #{dqn_forward.3} parent=39 // pred_fallthru
          _
      $region40: #{dqn_forward.3} parent=5 // pred_fallthru
        _
      %p998 = scmp.le.s32.totalorder 2, %s15
      // Predicated region
      $region61: #{dqn_forward.3} parent=5 // pred_check
        %p999 = pneg %p998
      $region62: #{dqn_forward.3} parent=5 // pred_check_branch
        %1001 = sbr.rel (%p999) target = $region64
      $region63: #{dqn_forward.3} parent=5 // pred_region
        %s1002 = ssub.s32 %s15, 2
      $region64: #{dqn_forward.3} parent=5 // pred_fallthru
        _
    $region6: #{dqn_forward.3} parent=1 // loop_footer
      %s19 = sadd.s32 1, %s15
    $region7: #{dqn_forward.3} parent=1 // loop_footer_branch
      %14 = sbr.rel target = $region3
    $region8: #{dqn_forward.3} parent=1 // loop_exit
      _
    %1003 = vsyncpa [#allocation4], 1
    %s1004 = scalar_lea.sflag [#allocation4], 1
    %1005 = vsyncpa %s1004, 1
    %1006 = vsyncpa [#allocation5], 1
    %s1007 = scalar_lea.sflag [#allocation5], 1
    %1008 = vsyncpa %s1007, 1

// kernel: dqn_forward.2
$region0: #{dqn_forward.2}
  #allocation0 [shape = 'u32[]', space=smem, size = 0x4, offset = 0x4, fixed_abs, tag = 'smem constant byte address 0x4 - core index']
  #allocation1 [shape = 'u32[144,128]{1,0:T(1,128)}', space=vmem, size = 0x12000, scoped, tag = 'internal scratch']
  #allocation2 [shape = 'bf16[144,100]{1,0:T(16,128)(2,1)}', space=vmem, size = 0x9000, scoped, tag = 'scratch operand']
  #allocation3 [shape = 'bf16[176,16]{1,0:T(16,128)(2,1)}', space=vmem, size = 0xb000, scoped, tag = 'scratch operand']
  #allocation4 [shape = 'bf16[144,144]{1,0:T(16,128)(2,1)}', space=vmem, size = 0x12000, scoped, tag = 'scratch operand']
  %s0 = inlined_call_operand.vmem [shape: bf16[416,4], index: 0, kind: input, shape index: {}]
  %s1 = inlined_call_operand.vmem [shape: bf16[100,16], index: 1, kind: input, shape index: {}]
  %s2 = inlined_call_operand.vmem [shape: f32[1,16], index: 2, kind: input, shape index: {}]
  %s3 = inlined_call_operand.vmem [shape: bf16[144,32], index: 3, kind: input, shape index: {}]
  %s4 = inlined_call_operand.vmem [shape: f32[1,32], index: 4, kind: input, shape index: {}]
  %s5 = inlined_call_operand.vmem [shape: f32[144,1], index: 5, kind: input, shape index: {}]
  %s6 = inlined_call_operand.vmem [shape: bf16[128,32], index: 6, kind: output, shape index: {}]
  %s7 = sld [smem:[#allocation0]]
  $region57: #{dqn_forward.2} parent=0
    _
  %s9 = ssub.s32 1, %s7
  %s10 = scalar_select 0, %s9, %s7
  loop: start=0, step=1, limit=4
  $region2: #{dqn_forward.2} parent=0 // loop_pre_header
    _
  $region3: #{dqn_forward.2} parent=0 // loop_header
    %s12 = sphi 0, %s16
    %p13 = scmp.ge.s32.totalorder %s12, 4
    %s22 = sphi 0, %s24
    %s25 = sphi 0, %s22
    %s26 = sphi 0, %s25
    %s42 = sphi 0, %s26
    %s46 = sphi 0, %s46
    %s48 = sphi 0, %s46
    %s49 = sphi 0, %s48
    %s63 = sphi 0, %s49
    %s67 = sphi 0, %s67
    %s69 = sphi 0, %s67
    %s70 = sphi 0, %s69
    %s84 = sphi 0, %s70
    %s88 = sphi 0, %s88
    %s90 = sphi 0, %s88
    %s91 = sphi 0, %s90
    %s105 = sphi 0, %s91
    %s109 = sphi 0, %s109
    %s111 = sphi 0, %s109
    %s112 = sphi 0, %s111
    %s126 = sphi 0, %s112
    %s130 = sphi 0, %s130
    %s132 = sphi 0, %s130
    %s133 = sphi 0, %s132
    %s147 = sphi 0, %s133
    %s153 = sphi 0, %s155
    %s156 = sphi 0, %s153
    %s157 = sphi 0, %s156
    %s173 = sphi 0, %s157
  $region4: #{dqn_forward.2} parent=0 // loop_header_branch
    %15 = sbr.rel (%p13) target = $region8
  $region5: #{dqn_forward.2} parent=0 // loop_body
    %s17 = ssub.s32 %s12, 1
    %s18 = ssub.s32 %s12, 2
    %s19 = sadd.s32 %s12, 1
    %s20 = ssub.s32 %s12, %s19
    %p21 = scmp.eq.s32.totalorder %s20, 0
    %s23 = sadd.s32 %s22, 1
    %s24 = scalar_select %p21, %s22, %s23
    %p27 = pneg %p21
    %p28 = scmp.eq.s32.totalorder %s12, 1
    %p29 = por %p27, %p28
    %p30 = scmp.ne.s32.totalorder %s22, %s25
    %p31 = scmp.eq.s32.totalorder %s12, 0
    %p32 = por %p30, %p31
    %p33 = scmp.ne.s32.totalorder %s22, %s25
    %p34 = scmp.eq.s32.totalorder %s17, 1
    %p35 = por %p33, %p34
    %p36 = scmp.ne.s32.totalorder %s25, %s26
    %p37 = scmp.eq.s32.totalorder %s17, 0
    %p38 = por %p36, %p37
    %p39 = scmp.ne.s32.totalorder %s25, %s26
    %p40 = scmp.eq.s32.totalorder %s18, 1
    %p41 = por %p39, %p40
    %p43 = scmp.ne.s32.totalorder %s26, %s42
    %p44 = scmp.eq.s32.totalorder %s18, 0
    %p45 = por %p43, %p44
    %s47 = sadd.s32 %s46, 1
    %p50 = scmp.eq.s32.totalorder %s12, 1
    %p51 = scmp.ne.s32.totalorder %s46, %s48
    %p52 = scmp.eq.s32.totalorder %s12, 0
    %p53 = por %p51, %p52
    %p54 = scmp.ne.s32.totalorder %s46, %s48
    %p55 = scmp.eq.s32.totalorder %s17, 1
    %p56 = por %p54, %p55
    %p57 = scmp.ne.s32.totalorder %s48, %s49
    %p58 = scmp.eq.s32.totalorder %s17, 0
    %p59 = por %p57, %p58
    %p60 = scmp.ne.s32.totalorder %s48, %s49
    %p61 = scmp.eq.s32.totalorder %s18, 1
    %p62 = por %p60, %p61
    %p64 = scmp.ne.s32.totalorder %s49, %s63
    %p65 = scmp.eq.s32.totalorder %s18, 0
    %p66 = por %p64, %p65
    %s68 = sadd.s32 %s67, 1
    %p71 = scmp.eq.s32.totalorder %s12, 1
    %p72 = scmp.ne.s32.totalorder %s67, %s69
    %p73 = scmp.eq.s32.totalorder %s12, 0
    %p74 = por %p72, %p73
    %p75 = scmp.ne.s32.totalorder %s67, %s69
    %p76 = scmp.eq.s32.totalorder %s17, 1
    %p77 = por %p75, %p76
    %p78 = scmp.ne.s32.totalorder %s69, %s70
    %p79 = scmp.eq.s32.totalorder %s17, 0
    %p80 = por %p78, %p79
    %p81 = scmp.ne.s32.totalorder %s69, %s70
    %p82 = scmp.eq.s32.totalorder %s18, 1
    %p83 = por %p81, %p82
    %p85 = scmp.ne.s32.totalorder %s70, %s84
    %p86 = scmp.eq.s32.totalorder %s18, 0
    %p87 = por %p85, %p86
    %s89 = sadd.s32 %s88, 1
    %p92 = scmp.eq.s32.totalorder %s12, 1
    %p93 = scmp.ne.s32.totalorder %s88, %s90
    %p94 = scmp.eq.s32.totalorder %s12, 0
    %p95 = por %p93, %p94
    %p96 = scmp.ne.s32.totalorder %s88, %s90
    %p97 = scmp.eq.s32.totalorder %s17, 1
    %p98 = por %p96, %p97
    %p99 = scmp.ne.s32.totalorder %s90, %s91
    %p100 = scmp.eq.s32.totalorder %s17, 0
    %p101 = por %p99, %p100
    %p102 = scmp.ne.s32.totalorder %s90, %s91
    %p103 = scmp.eq.s32.totalorder %s18, 1
    %p104 = por %p102, %p103
    %p106 = scmp.ne.s32.totalorder %s91, %s105
    %p107 = scmp.eq.s32.totalorder %s18, 0
    %p108 = por %p106, %p107
    %s110 = sadd.s32 %s109, 1
    %p113 = scmp.eq.s32.totalorder %s12, 1
    %p114 = scmp.ne.s32.totalorder %s109, %s111
    %p115 = scmp.eq.s32.totalorder %s12, 0
    %p116 = por %p114, %p115
    %p117 = scmp.ne.s32.totalorder %s109, %s111
    %p118 = scmp.eq.s32.totalorder %s17, 1
    %p119 = por %p117, %p118
    %p120 = scmp.ne.s32.totalorder %s111, %s112
    %p121 = scmp.eq.s32.totalorder %s17, 0
    %p122 = por %p120, %p121
    %p123 = scmp.ne.s32.totalorder %s111, %s112
    %p124 = scmp.eq.s32.totalorder %s18, 1
    %p125 = por %p123, %p124
    %p127 = scmp.ne.s32.totalorder %s112, %s126
    %p128 = scmp.eq.s32.totalorder %s18, 0
    %p129 = por %p127, %p128
    %s131 = sadd.s32 %s130, 1
    %p134 = scmp.eq.s32.totalorder %s12, 1
    %p135 = scmp.ne.s32.totalorder %s130, %s132
    %p136 = scmp.eq.s32.totalorder %s12, 0
    %p137 = por %p135, %p136
    %p138 = scmp.ne.s32.totalorder %s130, %s132
    %p139 = scmp.eq.s32.totalorder %s17, 1
    %p140 = por %p138, %p139
    %p141 = scmp.ne.s32.totalorder %s132, %s133
    %p142 = scmp.eq.s32.totalorder %s17, 0
    %p143 = por %p141, %p142
    %p144 = scmp.ne.s32.totalorder %s132, %s133
    %p145 = scmp.eq.s32.totalorder %s18, 1
    %p146 = por %p144, %p145
    %p148 = scmp.ne.s32.totalorder %s133, %s147
    %p149 = scmp.eq.s32.totalorder %s18, 0
    %p150 = por %p148, %p149
    %s151 = ssub.s32 %s12, %s19
    %p152 = scmp.eq.s32.totalorder %s151, 0
    %s154 = sadd.s32 %s153, 1
    %s155 = scalar_select %p152, %s153, %s154
    %p158 = pneg %p152
    %p159 = scmp.eq.s32.totalorder %s12, 1
    %p160 = por %p158, %p159
    %p161 = scmp.ne.s32.totalorder %s153, %s156
    %p162 = scmp.eq.s32.totalorder %s12, 0
    %p163 = por %p161, %p162
    %p164 = scmp.ne.s32.totalorder %s153, %s156
    %p165 = scmp.eq.s32.totalorder %s17, 1
    %p166 = por %p164, %p165
    %p167 = scmp.ne.s32.totalorder %s156, %s157
    %p168 = scmp.eq.s32.totalorder %s17, 0
    %p169 = por %p167, %p168
    %p170 = scmp.ne.s32.totalorder %s156, %s157
    %p171 = scmp.eq.s32.totalorder %s18, 1
    %p172 = por %p170, %p171
    %p174 = scmp.ne.s32.totalorder %s157, %s173
    %p175 = scmp.eq.s32.totalorder %s18, 0
    %p176 = por %p174, %p175
    %p177 = scmp.le.s32.totalorder 1, %s12
    %p178 = scmp.lt.s32.totalorder %s12, 3
    %p179 = pnand %p177, %p178
    %p180 = pneg %p179
    // Predicated region
    $region9: #{dqn_forward.2} parent=5 // pred_check
      _
    $region10: #{dqn_forward.2} parent=5 // pred_check_branch
      %182 = sbr.rel (%p179) target = $region12
    $region11: #{dqn_forward.2} parent=5 // pred_region
      %s183 = ssub.s32 %s12, 1
      // Predicated region
      $region13: #{dqn_forward.2} parent=11 // pred_check
        %p184 = pneg %p59
      $region14: #{dqn_forward.2} parent=11 // pred_check_branch
        %186 = sbr.rel (%p184) target = $region16
      $region15: #{dqn_forward.2} parent=11 // pred_region
        _
      $region16: #{dqn_forward.2} parent=11 // pred_fallthru
        _
      // Predicated region
      $region17: #{dqn_forward.2} parent=11 // pred_check
        %p187 = pneg %p80
      $region18: #{dqn_forward.2} parent=11 // pred_check_branch
        %189 = sbr.rel (%p187) target = $region20
      $region19: #{dqn_forward.2} parent=11 // pred_region
        _
      $region20: #{dqn_forward.2} parent=11 // pred_fallthru
        _
      // Predicated region
      $region21: #{dqn_forward.2} parent=11 // pred_check
        %p190 = pneg %p101
      $region22: #{dqn_forward.2} parent=11 // pred_check_branch
        %192 = sbr.rel (%p190) target = $region24
      $region23: #{dqn_forward.2} parent=11 // pred_region
        _
      $region24: #{dqn_forward.2} parent=11 // pred_fallthru
        _
      // Predicated region
      $region25: #{dqn_forward.2} parent=11 // pred_check
        %p193 = pneg %p122
      $region26: #{dqn_forward.2} parent=11 // pred_check_branch
        %195 = sbr.rel (%p193) target = $region28
      $region27: #{dqn_forward.2} parent=11 // pred_region
        _
      $region28: #{dqn_forward.2} parent=11 // pred_fallthru
        _
      // Predicated region
      $region29: #{dqn_forward.2} parent=11 // pred_check
        %p196 = pneg %p143
      $region30: #{dqn_forward.2} parent=11 // pred_check_branch
        %198 = sbr.rel (%p196) target = $region32
      $region31: #{dqn_forward.2} parent=11 // pred_region
        _
      $region32: #{dqn_forward.2} parent=11 // pred_fallthru
        _
    $region12: #{dqn_forward.2} parent=5 // pred_fallthru
      _
    %p199 = scmp.lt.s32.totalorder %s12, 2
    // Predicated region
    $region33: #{dqn_forward.2} parent=5 // pred_check
      %p200 = pneg %p199
    $region34: #{dqn_forward.2} parent=5 // pred_check_branch
      %202 = sbr.rel (%p200) target = $region36
    $region35: #{dqn_forward.2} parent=5 // pred_region
      // Predicated region
      $region37: #{dqn_forward.2} parent=35 // pred_check
        %p203 = pneg %p32
      $region38: #{dqn_forward.2} parent=35 // pred_check_branch
        %205 = sbr.rel (%p203) target = $region40
      $region39: #{dqn_forward.2} parent=35 // pred_region
        %s206 = smul.u32 26, %s12
        %p207 = scmp.lt.s32.totalorder %s206, 51
        %s208 = scalar_select %p207, %s206, 51
        %s209 = smul.addr %s208, 4
        %s210 = scalar_lea.vmem %s0, %s209
        %s211 = smul.u32 26, %s12
      $region40: #{dqn_forward.2} parent=35 // pred_fallthru
        _
    $region36: #{dqn_forward.2} parent=5 // pred_fallthru
      _
    %p212 = scmp.le.s32.totalorder 1, %s12
    %p213 = scmp.lt.s32.totalorder %s12, 3
    %p214 = pnand %p212, %p213
    %p215 = pneg %p214
    // Predicated region
    $region41: #{dqn_forward.2} parent=5 // pred_check
      _
    $region42: #{dqn_forward.2} parent=5 // pred_check_branch
      %217 = sbr.rel (%p214) target = $region44
    $region43: #{dqn_forward.2} parent=5 // pred_region
      %s218 = ssub.s32 %s12, 1
      %s219 = smul.u32 26, %s17
      %p220 = scmp.lt.s32.totalorder %s219, 51
      %s221 = scalar_select %p220, %s219, 51
      %s222 = smul.addr %s221, 4
      %s223 = scalar_lea.vmem %s0, %s222
      %p224 = pneg %p38
      %p225 = pneg %p35
      %p226 = pneg %p59
      %p227 = pneg %p56
      %p228 = pneg %p80
      %p229 = pneg %p77
      %p230 = pneg %p101
      %p231 = pneg %p98
      %p232 = pneg %p122
      %p233 = pneg %p119
      %p234 = pneg %p143
      %p235 = pneg %p140
      %p236 = pneg %p169
      %p237 = pneg %p166
      %s238 = smul.u32 8, %s17
      %p239 = scmp.lt.s32.totalorder %s238, 15
      %s240 = scalar_select %p239, %s238, 15
      %s241 = smul.addr %s240, 4
      %s242 = scalar_lea.vmem %s6, %s241
      %s243 = smul.u32 26, %s17
      %p244 = scmp.lt.s32.totalorder %s243, 51
      %s245 = scalar_select %p244, %s243, 51
      %s246 = smul.addr %s245, 4
      %s247 = scalar_lea.vmem %s0, %s246
      %s248 = smul.u32 26, %s17
      %s249 = smul.u32 8, %s17
      %p250 = scmp.lt.s32.totalorder %s249, 15
      %s251 = scalar_select %p250, %s249, 15
      %s252 = smul.addr %s251, 4
      %s253 = scalar_lea.vmem %s6, %s252
      %s254 = smul.u32 8, %s17
      %v256 = vld [vmem:[%s247] sm:$0x8]
      %v257 = vld [vmem:[%s247 + $0x4] sm:$0xf]
      %v258 = vld [vmem:[%s247 + $0x8] sm:$0xf]
      %v259 = vld [vmem:[%s247 + $0xc] sm:$0xf]
      %v260 = vld [vmem:[%s247 + $0x10] sm:$0xf]
      %v261 = vld [vmem:[%s247 + $0x14] sm:$0xf]
      %v262 = vld [vmem:[%s247 + $0x18] sm:$0xf]
      %v263 = vld [vmem:[%s247 + $0x1c] sm:$0xf]
      %v264 = vld [vmem:[%s247 + $0x20] sm:$0xf]
      %v265 = vld [vmem:[%s247 + $0x24] sm:$0xf]
      %v266 = vld [vmem:[%s247 + $0x28] sm:$0xf]
      %v267 = vld [vmem:[%s247 + $0x2c] sm:$0xf]
      %v268 = vld [vmem:[%s247 + $0x30] sm:$0xf]
      %v269 = vld [vmem:[%s247 + $0x34] sm:$0xf]
      %v270 = vld [vmem:[%s247 + $0x38] sm:$0xf]
      %v271 = vld [vmem:[%s247 + $0x3c] sm:$0xf]
      %v272 = vld [vmem:[%s247 + $0x40] sm:$0xf]
      %v273 = vld [vmem:[%s247 + $0x44] sm:$0xf]
      %v274 = vld [vmem:[%s247 + $0x48] sm:$0x7]
      %v294 = vunpack.c.l.b16 %v256
      %v295 = vunpack.c.l.b16 %v257
      %v296 = vunpack.c.l.b16 %v258
      %v297 = vunpack.c.l.b16 %v259
      %v298 = vunpack.c.l.b16 %v260
      %v299 = vunpack.c.l.b16 %v261
      %v300 = vunpack.c.l.b16 %v262
      %v301 = vunpack.c.l.b16 %v263
      %v302 = vunpack.c.l.b16 %v264
      %v303 = vunpack.c.l.b16 %v265
      %v304 = vunpack.c.l.b16 %v266
      %v305 = vunpack.c.l.b16 %v267
      %v306 = vunpack.c.l.b16 %v268
      %v307 = vunpack.c.l.b16 %v269
      %v308 = vunpack.c.l.b16 %v270
      %v309 = vunpack.c.l.b16 %v271
      %v310 = vunpack.c.l.b16 %v272
      %v311 = vunpack.c.l.b16 %v273
      %v312 = vunpack.c.l.b16 %v274
      %v313 = vpack.c.b16 %v295, %v294
      %v314 = vpack.c.b16 %v297, %v296
      %v315 = vpack.c.b16 %v299, %v298
      %v316 = vpack.c.b16 %v301, %v300
      %v317 = vpack.c.b16 %v303, %v302
      %v318 = vpack.c.b16 %v305, %v304
      %v319 = vpack.c.b16 %v307, %v306
      %v320 = vpack.c.b16 %v309, %v308
      %v321 = vpack.c.b16 %v311, %v310
      %v322 = vpack.c.b16 %v312, %v312
      %vm323 = vcmask 1044480
      %v324 = vrot.slane %v313, 3
      %v325 = vrot.slane %v314, 3
      %v326 = vsel %vm323, %v324, %v325
      %v327 = vrot.slane %v315, 3
      %v328 = vsel %vm323, %v325, %v327
      %v329 = vrot.slane %v316, 3
      %v330 = vsel %vm323, %v327, %v329
      %v331 = vrot.slane %v317, 3
      %v332 = vsel %vm323, %v329, %v331
      %v333 = vrot.slane %v318, 3
      %v334 = vsel %vm323, %v331, %v333
      %v335 = vrot.slane %v319, 3
      %v336 = vsel %vm323, %v333, %v335
      %v337 = vrot.slane %v320, 3
      %v338 = vsel %vm323, %v335, %v337
      %v339 = vrot.slane %v321, 3
      %v340 = vsel %vm323, %v337, %v339
      %v341 = vrot.slane %v322, 3
      %v342 = vsel %vm323, %v339, %v341
      %vm352 = vcmask 31744
      %353 = vst.msk [vmem:[#allocation2] sm:$0xff] %vm352, %v326
      %354 = vst.msk [vmem:[#allocation2 + $0x8] sm:$0xff] %vm352, %v328
      %355 = vst.msk [vmem:[#allocation2 + $0x10] sm:$0xff] %vm352, %v330
      %356 = vst.msk [vmem:[#allocation2 + $0x18] sm:$0xff] %vm352, %v332
      %357 = vst.msk [vmem:[#allocation2 + $0x20] sm:$0xff] %vm352, %v334
      %358 = vst.msk [vmem:[#allocation2 + $0x28] sm:$0xff] %vm352, %v336
      %359 = vst.msk [vmem:[#allocation2 + $0x30] sm:$0xff] %vm352, %v338
      %360 = vst.msk [vmem:[#allocation2 + $0x38] sm:$0xff] %vm352, %v340
      %361 = vst.msk [vmem:[#allocation2 + $0x40] sm:$0xff] %vm352, %v342
      %v362 = vld [vmem:[%s247] sm:$0x8]
      %v363 = vld [vmem:[%s247 + $0x4] sm:$0xf]
      %v364 = vld [vmem:[%s247 + $0x8] sm:$0xf]
      %v365 = vld [vmem:[%s247 + $0xc] sm:$0xf]
      %v366 = vld [vmem:[%s247 + $0x10] sm:$0xf]
      %v367 = vld [vmem:[%s247 + $0x14] sm:$0xf]
      %v368 = vld [vmem:[%s247 + $0x18] sm:$0xf]
      %v369 = vld [vmem:[%s247 + $0x1c] sm:$0xf]
      %v370 = vld [vmem:[%s247 + $0x20] sm:$0xf]
      %v371 = vld [vmem:[%s247 + $0x24] sm:$0xf]
      %v372 = vld [vmem:[%s247 + $0x28] sm:$0xf]
      %v373 = vld [vmem:[%s247 + $0x2c] sm:$0xf]
      %v374 = vld [vmem:[%s247 + $0x30] sm:$0xf]
      %v375 = vld [vmem:[%s247 + $0x34] sm:$0xf]
      %v376 = vld [vmem:[%s247 + $0x38] sm:$0xf]
      %v377 = vld [vmem:[%s247 + $0x3c] sm:$0xf]
      %v378 = vld [vmem:[%s247 + $0x40] sm:$0xf]
      %v379 = vld [vmem:[%s247 + $0x44] sm:$0xf]
      %v380 = vld [vmem:[%s247 + $0x48] sm:$0xf]
      %v400 = vunpack.c.l.b16 %v362
      %v401 = vunpack.c.l.b16 %v363
      %v402 = vunpack.c.l.b16 %v364
      %v403 = vunpack.c.l.b16 %v365
      %v404 = vunpack.c.l.b16 %v366
      %v405 = vunpack.c.l.b16 %v367
      %v406 = vunpack.c.l.b16 %v368
      %v407 = vunpack.c.l.b16 %v369
      %v408 = vunpack.c.l.b16 %v370
      %v409 = vunpack.c.l.b16 %v371
      %v410 = vunpack.c.l.b16 %v372
      %v411 = vunpack.c.l.b16 %v373
      %v412 = vunpack.c.l.b16 %v374
      %v413 = vunpack.c.l.b16 %v375
      %v414 = vunpack.c.l.b16 %v376
      %v415 = vunpack.c.l.b16 %v377
      %v416 = vunpack.c.l.b16 %v378
      %v417 = vunpack.c.l.b16 %v379
      %v418 = vunpack.c.l.b16 %v380
      %v419 = vpack.c.b16 %v401, %v400
      %v420 = vpack.c.b16 %v403, %v402
      %v421 = vpack.c.b16 %v405, %v404
      %v422 = vpack.c.b16 %v407, %v406
      %v423 = vpack.c.b16 %v409, %v408
      %v424 = vpack.c.b16 %v411, %v410
      %v425 = vpack.c.b16 %v413, %v412
      %v426 = vpack.c.b16 %v415, %v414
      %v427 = vpack.c.b16 %v417, %v416
      %v428 = vpack.c.b16 %v418, %v418
      %vm429 = vsmask.f32 4352
      %v431 = vshrl.u32 %v419, 16
      %v433 = vrot.slane %v431, 3
      %v434 = vshll.u32 %v419, 16
      %v436 = vrot.slane %v434, 4
      %v437 = vor.u32 %v433, %v436
      %v439 = vshrl.u32 %v420, 16
      %v441 = vrot.slane %v439, 3
      %v442 = vshll.u32 %v420, 16
      %v444 = vrot.slane %v442, 4
      %v445 = vor.u32 %v441, %v444
      %v446 = vsel %vm429, %v437, %v445
      %v448 = vshrl.u32 %v421, 16
      %v450 = vrot.slane %v448, 3
      %v451 = vshll.u32 %v421, 16
      %v453 = vrot.slane %v451, 4
      %v454 = vor.u32 %v450, %v453
      %v455 = vsel %vm429, %v445, %v454
      %v457 = vshrl.u32 %v422, 16
      %v459 = vrot.slane %v457, 3
      %v460 = vshll.u32 %v422, 16
      %v462 = vrot.slane %v460, 4
      %v463 = vor.u32 %v459, %v462
      %v464 = vsel %vm429, %v454, %v463
      %v466 = vshrl.u32 %v423, 16
      %v468 = vrot.slane %v466, 3
      %v469 = vshll.u32 %v423, 16
      %v471 = vrot.slane %v469, 4
      %v472 = vor.u32 %v468, %v471
      %v473 = vsel %vm429, %v463, %v472
      %v475 = vshrl.u32 %v424, 16
      %v477 = vrot.slane %v475, 3
      %v478 = vshll.u32 %v424, 16
      %v480 = vrot.slane %v478, 4
      %v481 = vor.u32 %v477, %v480
      %v482 = vsel %vm429, %v472, %v481
      %v484 = vshrl.u32 %v425, 16
      %v486 = vrot.slane %v484, 3
      %v487 = vshll.u32 %v425, 16
      %v489 = vrot.slane %v487, 4
      %v490 = vor.u32 %v486, %v489
      %v491 = vsel %vm429, %v481, %v490
      %v493 = vshrl.u32 %v426, 16
      %v495 = vrot.slane %v493, 3
      %v496 = vshll.u32 %v426, 16
      %v498 = vrot.slane %v496, 4
      %v499 = vor.u32 %v495, %v498
      %v500 = vsel %vm429, %v490, %v499
      %v502 = vshrl.u32 %v427, 16
      %v504 = vrot.slane %v502, 3
      %v505 = vshll.u32 %v427, 16
      %v507 = vrot.slane %v505, 4
      %v508 = vor.u32 %v504, %v507
      %v509 = vsel %vm429, %v499, %v508
      %v511 = vshrl.u32 %v428, 16
      %v513 = vrot.slane %v511, 3
      %v514 = vshll.u32 %v428, 16
      %v516 = vrot.slane %v514, 4
      %v517 = vor.u32 %v513, %v516
      %v518 = vsel %vm429, %v508, %v517
      %519 = vrot.lane.b32.xlu0 %v446, 4
      %v520 = vpop.permute.xlu0 %519
      %521 = vrot.lane.b32.xlu0 %v455, 4
      %v522 = vpop.permute.xlu0 %521
      %523 = vrot.lane.b32.xlu0 %v464, 4
      %v524 = vpop.permute.xlu0 %523
      %525 = vrot.lane.b32.xlu0 %v473, 4
      %v526 = vpop.permute.xlu0 %525
      %527 = vrot.lane.b32.xlu0 %v482, 4
      %v528 = vpop.permute.xlu0 %527
      %529 = vrot.lane.b32.xlu0 %v491, 4
      %v530 = vpop.permute.xlu0 %529
      %531 = vrot.lane.b32.xlu0 %v500, 4
      %v532 = vpop.permute.xlu0 %531
      %533 = vrot.lane.b32.xlu0 %v509, 4
      %v534 = vpop.permute.xlu0 %533
      %535 = vrot.lane.b32.xlu0 %v518, 4
      %v536 = vpop.permute.xlu0 %535
      %vm546 = vcmask 64544
      %547 = vst.msk [vmem:[#allocation2] sm:$0xff] %vm546, %v520
      %548 = vst.msk [vmem:[#allocation2 + $0x8] sm:$0xff] %vm546, %v522
      %549 = vst.msk [vmem:[#allocation2 + $0x10] sm:$0xff] %vm546, %v524
      %550 = vst.msk [vmem:[#allocation2 + $0x18] sm:$0xff] %vm546, %v526
      %551 = vst.msk [vmem:[#allocation2 + $0x20] sm:$0xff] %vm546, %v528
      %552 = vst.msk [vmem:[#allocation2 + $0x28] sm:$0xff] %vm546, %v530
      %553 = vst.msk [vmem:[#allocation2 + $0x30] sm:$0xff] %vm546, %v532
      %554 = vst.msk [vmem:[#allocation2 + $0x38] sm:$0xff] %vm546, %v534
      %555 = vst.msk [vmem:[#allocation2 + $0x40] sm:$0xff] %vm546, %v536
      %v556 = vld [vmem:[%s247 + $0x4] sm:$0xf]
      %v557 = vld [vmem:[%s247 + $0x8] sm:$0xf]
      %v558 = vld [vmem:[%s247 + $0xc] sm:$0xf]
      %v559 = vld [vmem:[%s247 + $0x10] sm:$0xf]
      %v560 = vld [vmem:[%s247 + $0x14] sm:$0xf]
      %v561 = vld [vmem:[%s247 + $0x18] sm:$0xf]
      %v562 = vld [vmem:[%s247 + $0x1c] sm:$0xf]
      %v563 = vld [vmem:[%s247 + $0x20] sm:$0xf]
      %v564 = vld [vmem:[%s247 + $0x24] sm:$0xf]
      %v565 = vld [vmem:[%s247 + $0x28] sm:$0xf]
      %v566 = vld [vmem:[%s247 + $0x2c] sm:$0xf]
      %v567 = vld [vmem:[%s247 + $0x30] sm:$0xf]
      %v568 = vld [vmem:[%s247 + $0x34] sm:$0xf]
      %v569 = vld [vmem:[%s247 + $0x38] sm:$0xf]
      %v570 = vld [vmem:[%s247 + $0x3c] sm:$0xf]
      %v571 = vld [vmem:[%s247 + $0x40] sm:$0xf]
      %v572 = vld [vmem:[%s247 + $0x44] sm:$0xf]
      %v573 = vld [vmem:[%s247 + $0x48] sm:$0xf]
      %v592 = vunpack.c.l.b16 %v556
      %v593 = vunpack.c.l.b16 %v557
      %v594 = vunpack.c.l.b16 %v558
      %v595 = vunpack.c.l.b16 %v559
      %v596 = vunpack.c.l.b16 %v560
      %v597 = vunpack.c.l.b16 %v561
      %v598 = vunpack.c.l.b16 %v562
      %v599 = vunpack.c.l.b16 %v563
      %v600 = vunpack.c.l.b16 %v564
      %v601 = vunpack.c.l.b16 %v565
      %v602 = vunpack.c.l.b16 %v566
      %v603 = vunpack.c.l.b16 %v567
      %v604 = vunpack.c.l.b16 %v568
      %v605 = vunpack.c.l.b16 %v569
      %v606 = vunpack.c.l.b16 %v570
      %v607 = vunpack.c.l.b16 %v571
      %v608 = vunpack.c.l.b16 %v572
      %v609 = vunpack.c.l.b16 %v573
      %v610 = vpack.c.b16 %v593, %v592
      %v611 = vpack.c.b16 %v595, %v594
      %v612 = vpack.c.b16 %v597, %v596
      %v613 = vpack.c.b16 %v599, %v598
      %v614 = vpack.c.b16 %v601, %v600
      %v615 = vpack.c.b16 %v603, %v602
      %v616 = vpack.c.b16 %v605, %v604
      %v617 = vpack.c.b16 %v607, %v606
      %v618 = vpack.c.b16 %v609, %v608
      %619 = vrot.lane.b32.xlu0 %v610, 8
      %v620 = vpop.permute.xlu0 %619
      %621 = vrot.lane.b32.xlu0 %v611, 8
      %v622 = vpop.permute.xlu0 %621
      %623 = vrot.lane.b32.xlu0 %v612, 8
      %v624 = vpop.permute.xlu0 %623
      %625 = vrot.lane.b32.xlu0 %v613, 8
      %v626 = vpop.permute.xlu0 %625
      %627 = vrot.lane.b32.xlu0 %v614, 8
      %v628 = vpop.permute.xlu0 %627
      %629 = vrot.lane.b32.xlu0 %v615, 8
      %v630 = vpop.permute.xlu0 %629
      %631 = vrot.lane.b32.xlu0 %v616, 8
      %v632 = vpop.permute.xlu0 %631
      %633 = vrot.lane.b32.xlu0 %v617, 8
      %v634 = vpop.permute.xlu0 %633
      %635 = vrot.lane.b32.xlu0 %v618, 8
      %v636 = vpop.permute.xlu0 %635
      %vm646 = vcmask 97344
      %647 = vst.msk [vmem:[#allocation2] sm:$0xff] %vm646, %v620
      %648 = vst.msk [vmem:[#allocation2 + $0x8] sm:$0xff] %vm646, %v622
      %649 = vst.msk [vmem:[#allocation2 + $0x10] sm:$0xff] %vm646, %v624
      %650 = vst.msk [vmem:[#allocation2 + $0x18] sm:$0xff] %vm646, %v626
      %651 = vst.msk [vmem:[#allocation2 + $0x20] sm:$0xff] %vm646, %v628
      %652 = vst.msk [vmem:[#allocation2 + $0x28] sm:$0xff] %vm646, %v630
      %653 = vst.msk [vmem:[#allocation2 + $0x30] sm:$0xff] %vm646, %v632
      %654 = vst.msk [vmem:[#allocation2 + $0x38] sm:$0xff] %vm646, %v634
      %655 = vst.msk [vmem:[#allocation2 + $0x40] sm:$0xff] %vm646, %v636
      %v656 = vld [vmem:[%s247 + $0x4] sm:$0xf]
      %v657 = vld [vmem:[%s247 + $0x8] sm:$0xf]
      %v658 = vld [vmem:[%s247 + $0xc] sm:$0xf]
      %v659 = vld [vmem:[%s247 + $0x10] sm:$0xf]
      %v660 = vld [vmem:[%s247 + $0x14] sm:$0xf]
      %v661 = vld [vmem:[%s247 + $0x18] sm:$0xf]
      %v662 = vld [vmem:[%s247 + $0x1c] sm:$0xf]
      %v663 = vld [vmem:[%s247 + $0x20] sm:$0xf]
      %v664 = vld [vmem:[%s247 + $0x24] sm:$0xf]
      %v665 = vld [vmem:[%s247 + $0x28] sm:$0xf]
      %v666 = vld [vmem:[%s247 + $0x2c] sm:$0xf]
      %v667 = vld [vmem:[%s247 + $0x30] sm:$0xf]
      %v668 = vld [vmem:[%s247 + $0x34] sm:$0xf]
      %v669 = vld [vmem:[%s247 + $0x38] sm:$0xf]
      %v670 = vld [vmem:[%s247 + $0x3c] sm:$0xf]
      %v671 = vld [vmem:[%s247 + $0x40] sm:$0xf]
      %v672 = vld [vmem:[%s247 + $0x44] sm:$0xf]
      %v673 = vld [vmem:[%s247 + $0x48] sm:$0xf]
      %v674 = vld [vmem:[%s247 + $0x4c] sm:$0x1]
      %v694 = vunpack.c.l.b16 %v656
      %v695 = vunpack.c.l.b16 %v657
      %v696 = vunpack.c.l.b16 %v658
      %v697 = vunpack.c.l.b16 %v659
      %v698 = vunpack.c.l.b16 %v660
      %v699 = vunpack.c.l.b16 %v661
      %v700 = vunpack.c.l.b16 %v662
      %v701 = vunpack.c.l.b16 %v663
      %v702 = vunpack.c.l.b16 %v664
      %v703 = vunpack.c.l.b16 %v665
      %v704 = vunpack.c.l.b16 %v666
      %v705 = vunpack.c.l.b16 %v667
      %v706 = vunpack.c.l.b16 %v668
      %v707 = vunpack.c.l.b16 %v669
      %v708 = vunpack.c.l.b16 %v670
      %v709 = vunpack.c.l.b16 %v671
      %v710 = vunpack.c.l.b16 %v672
      %v711 = vunpack.c.l.b16 %v673
      %v712 = vunpack.c.l.b16 %v674
      %v713 = vpack.c.b16 %v695, %v694
      %v714 = vpack.c.b16 %v697, %v696
      %v715 = vpack.c.b16 %v699, %v698
      %v716 = vpack.c.b16 %v701, %v700
      %v717 = vpack.c.b16 %v703, %v702
      %v718 = vpack.c.b16 %v705, %v704
      %v719 = vpack.c.b16 %v707, %v706
      %v720 = vpack.c.b16 %v709, %v708
      %v721 = vpack.c.b16 %v711, %v710
      %v722 = vpack.c.b16 %v712, %v712
      %vm723 = vsmask.f32 7424
      %v725 = vshrl.u32 %v713, 16
      %v727 = vshll.u32 %v713, 16
      %v729 = vrot.slane %v727, 1
      %v730 = vor.u32 %v725, %v729
      %v732 = vshll.u32 %v714, 16
      %v734 = vrot.slane %v732, 1
      %v735 = vsel %vm723, %v730, %v734
      %v736 = vshrl.u32 %v714, 16
      %v738 = vor.u32 %v736, %v734
      %v740 = vshll.u32 %v715, 16
      %v742 = vrot.slane %v740, 1
      %v743 = vsel %vm723, %v738, %v742
      %v744 = vshrl.u32 %v715, 16
      %v746 = vor.u32 %v744, %v742
      %v748 = vshll.u32 %v716, 16
      %v750 = vrot.slane %v748, 1
      %v751 = vsel %vm723, %v746, %v750
      %v752 = vshrl.u32 %v716, 16
      %v754 = vor.u32 %v752, %v750
      %v756 = vshll.u32 %v717, 16
      %v758 = vrot.slane %v756, 1
      %v759 = vsel %vm723, %v754, %v758
      %v760 = vshrl.u32 %v717, 16
      %v762 = vor.u32 %v760, %v758
      %v764 = vshll.u32 %v718, 16
      %v766 = vrot.slane %v764, 1
      %v767 = vsel %vm723, %v762, %v766
      %v768 = vshrl.u32 %v718, 16
      %v770 = vor.u32 %v768, %v766
      %v772 = vshll.u32 %v719, 16
      %v774 = vrot.slane %v772, 1
      %v775 = vsel %vm723, %v770, %v774
      %v776 = vshrl.u32 %v719, 16
      %v778 = vor.u32 %v776, %v774
      %v780 = vshll.u32 %v720, 16
      %v782 = vrot.slane %v780, 1
      %v783 = vsel %vm723, %v778, %v782
      %v784 = vshrl.u32 %v720, 16
      %v786 = vor.u32 %v784, %v782
      %v788 = vshll.u32 %v721, 16
      %v790 = vrot.slane %v788, 1
      %v791 = vsel %vm723, %v786, %v790
      %v792 = vshrl.u32 %v721, 16
      %v794 = vor.u32 %v792, %v790
      %v796 = vshll.u32 %v722, 16
      %v798 = vrot.slane %v796, 1
      %v799 = vsel %vm723, %v794, %v798
      %800 = vrot.lane.b32.xlu0 %v735, 12
      %v801 = vpop.permute.xlu0 %800
      %802 = vrot.lane.b32.xlu0 %v743, 12
      %v803 = vpop.permute.xlu0 %802
      %804 = vrot.lane.b32.xlu0 %v751, 12
      %v805 = vpop.permute.xlu0 %804
      %806 = vrot.lane.b32.xlu0 %v759, 12
      %v807 = vpop.permute.xlu0 %806
      %808 = vrot.lane.b32.xlu0 %v767, 12
      %v809 = vpop.permute.xlu0 %808
      %810 = vrot.lane.b32.xlu0 %v775, 12
      %v811 = vpop.permute.xlu0 %810
      %812 = vrot.lane.b32.xlu0 %v783, 12
      %v813 = vpop.permute.xlu0 %812
      %814 = vrot.lane.b32.xlu0 %v791, 12
      %v815 = vpop.permute.xlu0 %814
      %816 = vrot.lane.b32.xlu0 %v799, 12
      %v817 = vpop.permute.xlu0 %816
      %vm827 = vcmask 130144
      %828 = vst.msk [vmem:[#allocation2] sm:$0xff] %vm827, %v801
      %829 = vst.msk [vmem:[#allocation2 + $0x8] sm:$0xff] %vm827, %v803
      %830 = vst.msk [vmem:[#allocation2 + $0x10] sm:$0xff] %vm827, %v805
      %831 = vst.msk [vmem:[#allocation2 + $0x18] sm:$0xff] %vm827, %v807
      %832 = vst.msk [vmem:[#allocation2 + $0x20] sm:$0xff] %vm827, %v809
      %833 = vst.msk [vmem:[#allocation2 + $0x28] sm:$0xff] %vm827, %v811
      %834 = vst.msk [vmem:[#allocation2 + $0x30] sm:$0xff] %vm827, %v813
      %835 = vst.msk [vmem:[#allocation2 + $0x38] sm:$0xff] %vm827, %v815
      %836 = vst.msk [vmem:[#allocation2 + $0x40] sm:$0xff] %vm827, %v817
      %v837 = vld [vmem:[%s247 + $0x4] sm:$0xe]
      %v838 = vld [vmem:[%s247 + $0x8] sm:$0xf]
      %v839 = vld [vmem:[%s247 + $0xc] sm:$0xf]
      %v840 = vld [vmem:[%s247 + $0x10] sm:$0xf]
      %v841 = vld [vmem:[%s247 + $0x14] sm:$0xf]
      %v842 = vld [vmem:[%s247 + $0x18] sm:$0xf]
      %v843 = vld [vmem:[%s247 + $0x1c] sm:$0xf]
      %v844 = vld [vmem:[%s247 + $0x20] sm:$0xf]
      %v845 = vld [vmem:[%s247 + $0x24] sm:$0xf]
      %v846 = vld [vmem:[%s247 + $0x28] sm:$0xf]
      %v847 = vld [vmem:[%s247 + $0x2c] sm:$0xf]
      %v848 = vld [vmem:[%s247 + $0x30] sm:$0xf]
      %v849 = vld [vmem:[%s247 + $0x34] sm:$0xf]
      %v850 = vld [vmem:[%s247 + $0x38] sm:$0xf]
      %v851 = vld [vmem:[%s247 + $0x3c] sm:$0xf]
      %v852 = vld [vmem:[%s247 + $0x40] sm:$0xf]
      %v853 = vld [vmem:[%s247 + $0x44] sm:$0xf]
      %v854 = vld [vmem:[%s247 + $0x48] sm:$0xf]
      %v855 = vld [vmem:[%s247 + $0x4c] sm:$0x1]
      %v875 = vunpack.c.l.b16 %v837
      %v876 = vunpack.c.l.b16 %v838
      %v877 = vunpack.c.l.b16 %v839
      %v878 = vunpack.c.l.b16 %v840
      %v879 = vunpack.c.l.b16 %v841
      %v880 = vunpack.c.l.b16 %v842
      %v881 = vunpack.c.l.b16 %v843
      %v882 = vunpack.c.l.b16 %v844
      %v883 = vunpack.c.l.b16 %v845
      %v884 = vunpack.c.l.b16 %v846
      %v885 = vunpack.c.l.b16 %v847
      %v886 = vunpack.c.l.b16 %v848
      %v887 = vunpack.c.l.b16 %v849
      %v888 = vunpack.c.l.b16 %v850
      %v889 = vunpack.c.l.b16 %v851
      %v890 = vunpack.c.l.b16 %v852
      %v891 = vunpack.c.l.b16 %v853
      %v892 = vunpack.c.l.b16 %v854
      %v893 = vunpack.c.l.b16 %v855
      %v894 = vpack.c.b16 %v876, %v875
      %v895 = vpack.c.b16 %v878, %v877
      %v896 = vpack.c.b16 %v880, %v879
      %v897 = vpack.c.b16 %v882, %v881
      %v898 = vpack.c.b16 %v884, %v883
      %v899 = vpack.c.b16 %v886, %v885
      %v900 = vpack.c.b16 %v888, %v887
      %v901 = vpack.c.b16 %v890, %v889
      %v902 = vpack.c.b16 %v892, %v891
      %v903 = vpack.c.b16 %v893, %v893
      %vm904 = vcmask 1046528
      %v905 = vrot.slane %v894, 1
      %v906 = vrot.slane %v895, 1
      %v907 = vsel %vm904, %v905, %v906
      %v908 = vrot.slane %v896, 1
      %v909 = vsel %vm904, %v906, %v908
      %v910 = vrot.slane %v897, 1
      %v911 = vsel %vm904, %v908, %v910
      %v912 = vrot.slane %v898, 1
      %v913 = vsel %vm904, %v910, %v912
      %v914 = vrot.slane %v899, 1
      %v915 = vsel %vm904, %v912, %v914
      %v916 = vrot.slane %v900, 1
      %v917 = vsel %vm904, %v914, %v916
      %v918 = vrot.slane %v901, 1
      %v919 = vsel %vm904, %v916, %v918
      %v920 = vrot.slane %v902, 1
      %v921 = vsel %vm904, %v918, %v920
      %v922 = vrot.slane %v903, 1
      %v923 = vsel %vm904, %v920, %v922
      %924 = vrot.lane.b32.xlu0 %v907, 16
      %v925 = vpop.permute.xlu0 %924
      %926 = vrot.lane.b32.xlu0 %v909, 16
      %v927 = vpop.permute.xlu0 %926
      %928 = vrot.lane.b32.xlu0 %v911, 16
      %v929 = vpop.permute.xlu0 %928
      %930 = vrot.lane.b32.xlu0 %v913, 16
      %v931 = vpop.permute.xlu0 %930
      %932 = vrot.lane.b32.xlu0 %v915, 16
      %v933 = vpop.permute.xlu0 %932
      %934 = vrot.lane.b32.xlu0 %v917, 16
      %v935 = vpop.permute.xlu0 %934
      %936 = vrot.lane.b32.xlu0 %v919, 16
      %v937 = vpop.permute.xlu0 %936
      %938 = vrot.lane.b32.xlu0 %v921, 16
      %v939 = vpop.permute.xlu0 %938
      %940 = vrot.lane.b32.xlu0 %v923, 16
      %v941 = vpop.permute.xlu0 %940
      %vm951 = vcmask 162944
      %952 = vst.msk [vmem:[#allocation2] sm:$0xff] %vm951, %v925
      %953 = vst.msk [vmem:[#allocation2 + $0x8] sm:$0xff] %vm951, %v927
      %954 = vst.msk [vmem:[#allocation2 + $0x10] sm:$0xff] %vm951, %v929
      %955 = vst.msk [vmem:[#allocation2 + $0x18] sm:$0xff] %vm951, %v931
      %956 = vst.msk [vmem:[#allocation2 + $0x20] sm:$0xff] %vm951, %v933
      %957 = vst.msk [vmem:[#allocation2 + $0x28] sm:$0xff] %vm951, %v935
      %958 = vst.msk [vmem:[#allocation2 + $0x30] sm:$0xff] %vm951, %v937
      %959 = vst.msk [vmem:[#allocation2 + $0x38] sm:$0xff] %vm951, %v939
      %960 = vst.msk [vmem:[#allocation2 + $0x40] sm:$0xff] %vm951, %v941
      %v961 = vld [vmem:[%s247 + $0x8] sm:$0xe]
      %v962 = vld [vmem:[%s247 + $0xc] sm:$0xf]
      %v963 = vld [vmem:[%s247 + $0x10] sm:$0xf]
      %v964 = vld [vmem:[%s247 + $0x14] sm:$0xf]
      %v965 = vld [vmem:[%s247 + $0x18] sm:$0xf]
      %v966 = vld [vmem:[%s247 + $0x1c] sm:$0xf]
      %v967 = vld [vmem:[%s247 + $0x20] sm:$0xf]
      %v968 = vld [vmem:[%s247 + $0x24] sm:$0xf]
      %v969 = vld [vmem:[%s247 + $0x28] sm:$0xf]
      %v970 = vld [vmem:[%s247 + $0x2c] sm:$0xf]
      %v971 = vld [vmem:[%s247 + $0x30] sm:$0xf]
      %v972 = vld [vmem:[%s247 + $0x34] sm:$0xf]
      %v973 = vld [vmem:[%s247 + $0x38] sm:$0xf]
      %v974 = vld [vmem:[%s247 + $0x3c] sm:$0xf]
      %v975 = vld [vmem:[%s247 + $0x40] sm:$0xf]
      %v976 = vld [vmem:[%s247 + $0x44] sm:$0xf]
      %v977 = vld [vmem:[%s247 + $0x48] sm:$0xf]
      %v978 = vld [vmem:[%s247 + $0x4c] sm:$0xf]
      %v979 = vld [vmem:[%s247 + $0x50] sm:$0x1]
      %v999 = vunpack.c.l.b16 %v961
      %v1000 = vunpack.c.l.b16 %v962
      %v1001 = vunpack.c.l.b16 %v963
      %v1002 = vunpack.c.l.b16 %v964
      %v1003 = vunpack.c.l.b16 %v965
      %v1004 = vunpack.c.l.b16 %v966
      %v1005 = vunpack.c.l.b16 %v967
      %v1006 = vunpack.c.l.b16 %v968
      %v1007 = vunpack.c.l.b16 %v969
      %v1008 = vunpack.c.l.b16 %v970
      %v1009 = vunpack.c.l.b16 %v971
      %v1010 = vunpack.c.l.b16 %v972
      %v1011 = vunpack.c.l.b16 %v973
      %v1012 = vunpack.c.l.b16 %v974
      %v1013 = vunpack.c.l.b16 %v975
      %v1014 = vunpack.c.l.b16 %v976
      %v1015 = vunpack.c.l.b16 %v977
      %v1016 = vunpack.c.l.b16 %v978
      %v1017 = vunpack.c.l.b16 %v979
      %v1018 = vpack.c.b16 %v1000, %v999
      %v1019 = vpack.c.b16 %v1002, %v1001
      %v1020 = vpack.c.b16 %v1004, %v1003
      %v1021 = vpack.c.b16 %v1006, %v1005
      %v1022 = vpack.c.b16 %v1008, %v1007
      %v1023 = vpack.c.b16 %v1010, %v1009
      %v1024 = vpack.c.b16 %v1012, %v1011
      %v1025 = vpack.c.b16 %v1014, %v1013
      %v1026 = vpack.c.b16 %v1016, %v1015
      %v1027 = vpack.c.b16 %v1017, %v1017
      %v1028 = vrot.slane %v1018, 1
      %v1029 = vrot.slane %v1019, 1
      %v1030 = vsel %vm904, %v1028, %v1029
      %v1031 = vrot.slane %v1020, 1
      %v1032 = vsel %vm904, %v1029, %v1031
      %v1033 = vrot.slane %v1021, 1
      %v1034 = vsel %vm904, %v1031, %v1033
      %v1035 = vrot.slane %v1022, 1
      %v1036 = vsel %vm904, %v1033, %v1035
      %v1037 = vrot.slane %v1023, 1
      %v1038 = vsel %vm904, %v1035, %v1037
      %v1039 = vrot.slane %v1024, 1
      %v1040 = vsel %vm904, %v1037, %v1039
      %v1041 = vrot.slane %v1025, 1
      %v1042 = vsel %vm904, %v1039, %v1041
      %v1043 = vrot.slane %v1026, 1
      %v1044 = vsel %vm904, %v1041, %v1043
      %v1045 = vrot.slane %v1027, 1
      %v1046 = vsel %vm904, %v1043, %v1045
      %1047 = vrot.lane.b32.xlu0 %v1030, 20
      %v1048 = vpop.permute.xlu0 %1047
      %1049 = vrot.lane.b32.xlu0 %v1032, 20
      %v1050 = vpop.permute.xlu0 %1049
      %1051 = vrot.lane.b32.xlu0 %v1034, 20
      %v1052 = vpop.permute.xlu0 %1051
      %1053 = vrot.lane.b32.xlu0 %v1036, 20
      %v1054 = vpop.permute.xlu0 %1053
      %1055 = vrot.lane.b32.xlu0 %v1038, 20
      %v1056 = vpop.permute.xlu0 %1055
      %1057 = vrot.lane.b32.xlu0 %v1040, 20
      %v1058 = vpop.permute.xlu0 %1057
      %1059 = vrot.lane.b32.xlu0 %v1042, 20
      %v1060 = vpop.permute.xlu0 %1059
      %1061 = vrot.lane.b32.xlu0 %v1044, 20
      %v1062 = vpop.permute.xlu0 %1061
      %1063 = vrot.lane.b32.xlu0 %v1046, 20
      %v1064 = vpop.permute.xlu0 %1063
      %vm1074 = vcmask 195744
      %1075 = vst.msk [vmem:[#allocation2] sm:$0xff] %vm1074, %v1048
      %1076 = vst.msk [vmem:[#allocation2 + $0x8] sm:$0xff] %vm1074, %v1050
      %1077 = vst.msk [vmem:[#allocation2 + $0x10] sm:$0xff] %vm1074, %v1052
      %1078 = vst.msk [vmem:[#allocation2 + $0x18] sm:$0xff] %vm1074, %v1054
      %1079 = vst.msk [vmem:[#allocation2 + $0x20] sm:$0xff] %vm1074, %v1056
      %1080 = vst.msk [vmem:[#allocation2 + $0x28] sm:$0xff] %vm1074, %v1058
      %1081 = vst.msk [vmem:[#allocation2 + $0x30] sm:$0xff] %vm1074, %v1060
      %1082 = vst.msk [vmem:[#allocation2 + $0x38] sm:$0xff] %vm1074, %v1062
      %1083 = vst.msk [vmem:[#allocation2 + $0x40] sm:$0xff] %vm1074, %v1064
      %v1084 = vld [vmem:[%s247 + $0x8] sm:$0xe]
      %v1085 = vld [vmem:[%s247 + $0xc] sm:$0xf]
      %v1086 = vld [vmem:[%s247 + $0x10] sm:$0xf]
      %v1087 = vld [vmem:[%s247 + $0x14] sm:$0xf]
      %v1088 = vld [vmem:[%s247 + $0x18] sm:$0xf]
      %v1089 = vld [vmem:[%s247 + $0x1c] sm:$0xf]
      %v1090 = vld [vmem:[%s247 + $0x20] sm:$0xf]
      %v1091 = vld [vmem:[%s247 + $0x24] sm:$0xf]
      %v1092 = vld [vmem:[%s247 + $0x28] sm:$0xf]
      %v1093 = vld [vmem:[%s247 + $0x2c] sm:$0xf]
      %v1094 = vld [vmem:[%s247 + $0x30] sm:$0xf]
      %v1095 = vld [vmem:[%s247 + $0x34] sm:$0xf]
      %v1096 = vld [vmem:[%s247 + $0x38] sm:$0xf]
      %v1097 = vld [vmem:[%s247 + $0x3c] sm:$0xf]
      %v1098 = vld [vmem:[%s247 + $0x40] sm:$0xf]
      %v1099 = vld [vmem:[%s247 + $0x44] sm:$0xf]
      %v1100 = vld [vmem:[%s247 + $0x48] sm:$0xf]
      %v1101 = vld [vmem:[%s247 + $0x4c] sm:$0xf]
      %v1102 = vld [vmem:[%s247 + $0x50] sm:$0x3]
      %v1122 = vunpack.c.l.b16 %v1084
      %v1123 = vunpack.c.l.b16 %v1085
      %v1124 = vunpack.c.l.b16 %v1086
      %v1125 = vunpack.c.l.b16 %v1087
      %v1126 = vunpack.c.l.b16 %v1088
      %v1127 = vunpack.c.l.b16 %v1089
      %v1128 = vunpack.c.l.b16 %v1090
      %v1129 = vunpack.c.l.b16 %v1091
      %v1130 = vunpack.c.l.b16 %v1092
      %v1131 = vunpack.c.l.b16 %v1093
      %v1132 = vunpack.c.l.b16 %v1094
      %v1133 = vunpack.c.l.b16 %v1095
      %v1134 = vunpack.c.l.b16 %v1096
      %v1135 = vunpack.c.l.b16 %v1097
      %v1136 = vunpack.c.l.b16 %v1098
      %v1137 = vunpack.c.l.b16 %v1099
      %v1138 = vunpack.c.l.b16 %v1100
      %v1139 = vunpack.c.l.b16 %v1101
      %v1140 = vunpack.c.l.b16 %v1102
      %v1141 = vpack.c.b16 %v1123, %v1122
      %v1142 = vpack.c.b16 %v1125, %v1124
      %v1143 = vpack.c.b16 %v1127, %v1126
      %v1144 = vpack.c.b16 %v1129, %v1128
      %v1145 = vpack.c.b16 %v1131, %v1130
      %v1146 = vpack.c.b16 %v1133, %v1132
      %v1147 = vpack.c.b16 %v1135, %v1134
      %v1148 = vpack.c.b16 %v1137, %v1136
      %v1149 = vpack.c.b16 %v1139, %v1138
      %v1150 = vpack.c.b16 %v1140, %v1140
      %vm1151 = vsmask.f32 6400
      %v1153 = vshrl.u32 %v1141, 16
      %v1155 = vrot.slane %v1153, 1
      %v1156 = vshll.u32 %v1141, 16
      %v1158 = vrot.slane %v1156, 2
      %v1159 = vor.u32 %v1155, %v1158
      %v1161 = vshrl.u32 %v1142, 16
      %v1163 = vrot.slane %v1161, 1
      %v1164 = vshll.u32 %v1142, 16
      %v1166 = vrot.slane %v1164, 2
      %v1167 = vor.u32 %v1163, %v1166
      %v1168 = vsel %vm1151, %v1159, %v1167
      %v1170 = vshrl.u32 %v1143, 16
      %v1172 = vrot.slane %v1170, 1
      %v1173 = vshll.u32 %v1143, 16
      %v1175 = vrot.slane %v1173, 2
      %v1176 = vor.u32 %v1172, %v1175
      %v1177 = vsel %vm1151, %v1167, %v1176
      %v1179 = vshrl.u32 %v1144, 16
      %v1181 = vrot.slane %v1179, 1
      %v1182 = vshll.u32 %v1144, 16
      %v1184 = vrot.slane %v1182, 2
      %v1185 = vor.u32 %v1181, %v1184
      %v1186 = vsel %vm1151, %v1176, %v1185
      %v1188 = vshrl.u32 %v1145, 16
      %v1190 = vrot.slane %v1188, 1
      %v1191 = vshll.u32 %v1145, 16
      %v1193 = vrot.slane %v1191, 2
      %v1194 = vor.u32 %v1190, %v1193
      %v1195 = vsel %vm1151, %v1185, %v1194
      %v1197 = vshrl.u32 %v1146, 16
      %v1199 = vrot.slane %v1197, 1
      %v1200 = vshll.u32 %v1146, 16
      %v1202 = vrot.slane %v1200, 2
      %v1203 = vor.u32 %v1199, %v1202
      %v1204 = vsel %vm1151, %v1194, %v1203
      %v1206 = vshrl.u32 %v1147, 16
      %v1208 = vrot.slane %v1206, 1
      %v1209 = vshll.u32 %v1147, 16
      %v1211 = vrot.slane %v1209, 2
      %v1212 = vor.u32 %v1208, %v1211
      %v1213 = vsel %vm1151, %v1203, %v1212
      %v1215 = vshrl.u32 %v1148, 16
      %v1217 = vrot.slane %v1215, 1
      %v1218 = vshll.u32 %v1148, 16
      %v1220 = vrot.slane %v1218, 2
      %v1221 = vor.u32 %v1217, %v1220
      %v1222 = vsel %vm1151, %v1212, %v1221
      %v1224 = vshrl.u32 %v1149, 16
      %v1226 = vrot.slane %v1224, 1
      %v1227 = vshll.u32 %v1149, 16
      %v1229 = vrot.slane %v1227, 2
      %v1230 = vor.u32 %v1226, %v1229
      %v1231 = vsel %vm1151, %v1221, %v1230
      %v1233 = vshrl.u32 %v1150, 16
      %v1235 = vrot.slane %v1233, 1
      %v1236 = vshll.u32 %v1150, 16
      %v1238 = vrot.slane %v1236, 2
      %v1239 = vor.u32 %v1235, %v1238
      %v1240 = vsel %vm1151, %v1230, %v1239
      %1241 = vrot.lane.b32.xlu0 %v1168, 24
      %v1242 = vpop.permute.xlu0 %1241
      %1243 = vrot.lane.b32.xlu0 %v1177, 24
      %v1244 = vpop.permute.xlu0 %1243
      %1245 = vrot.lane.b32.xlu0 %v1186, 24
      %v1246 = vpop.permute.xlu0 %1245
      %1247 = vrot.lane.b32.xlu0 %v1195, 24
      %v1248 = vpop.permute.xlu0 %1247
      %1249 = vrot.lane.b32.xlu0 %v1204, 24
      %v1250 = vpop.permute.xlu0 %1249
      %1251 = vrot.lane.b32.xlu0 %v1213, 24
      %v1252 = vpop.permute.xlu0 %1251
      %1253 = vrot.lane.b32.xlu0 %v1222, 24
      %v1254 = vpop.permute.xlu0 %1253
      %1255 = vrot.lane.b32.xlu0 %v1231, 24
      %v1256 = vpop.permute.xlu0 %1255
      %1257 = vrot.lane.b32.xlu0 %v1240, 24
      %v1258 = vpop.permute.xlu0 %1257
      %vm1268 = vcmask 228544
      %1269 = vst.msk [vmem:[#allocation2] sm:$0xff] %vm1268, %v1242
      %1270 = vst.msk [vmem:[#allocation2 + $0x8] sm:$0xff] %vm1268, %v1244
      %1271 = vst.msk [vmem:[#allocation2 + $0x10] sm:$0xff] %vm1268, %v1246
      %1272 = vst.msk [vmem:[#allocation2 + $0x18] sm:$0xff] %vm1268, %v1248
      %1273 = vst.msk [vmem:[#allocation2 + $0x20] sm:$0xff] %vm1268, %v1250
      %1274 = vst.msk [vmem:[#allocation2 + $0x28] sm:$0xff] %vm1268, %v1252
      %1275 = vst.msk [vmem:[#allocation2 + $0x30] sm:$0xff] %vm1268, %v1254
      %1276 = vst.msk [vmem:[#allocation2 + $0x38] sm:$0xff] %vm1268, %v1256
      %1277 = vst.msk [vmem:[#allocation2 + $0x40] sm:$0xff] %vm1268, %v1258
      %v1278 = vld [vmem:[%s247 + $0x8] sm:$0xc]
      %v1279 = vld [vmem:[%s247 + $0xc] sm:$0xf]
      %v1280 = vld [vmem:[%s247 + $0x10] sm:$0xf]
      %v1281 = vld [vmem:[%s247 + $0x14] sm:$0xf]
      %v1282 = vld [vmem:[%s247 + $0x18] sm:$0xf]
      %v1283 = vld [vmem:[%s247 + $0x1c] sm:$0xf]
      %v1284 = vld [vmem:[%s247 + $0x20] sm:$0xf]
      %v1285 = vld [vmem:[%s247 + $0x24] sm:$0xf]
      %v1286 = vld [vmem:[%s247 + $0x28] sm:$0xf]
      %v1287 = vld [vmem:[%s247 + $0x2c] sm:$0xf]
      %v1288 = vld [vmem:[%s247 + $0x30] sm:$0xf]
      %v1289 = vld [vmem:[%s247 + $0x34] sm:$0xf]
      %v1290 = vld [vmem:[%s247 + $0x38] sm:$0xf]
      %v1291 = vld [vmem:[%s247 + $0x3c] sm:$0xf]
      %v1292 = vld [vmem:[%s247 + $0x40] sm:$0xf]
      %v1293 = vld [vmem:[%s247 + $0x44] sm:$0xf]
      %v1294 = vld [vmem:[%s247 + $0x48] sm:$0xf]
      %v1295 = vld [vmem:[%s247 + $0x4c] sm:$0xf]
      %v1296 = vld [vmem:[%s247 + $0x50] sm:$0x3]
      %v1316 = vunpack.c.l.b16 %v1278
      %v1317 = vunpack.c.l.b16 %v1279
      %v1318 = vunpack.c.l.b16 %v1280
      %v1319 = vunpack.c.l.b16 %v1281
      %v1320 = vunpack.c.l.b16 %v1282
      %v1321 = vunpack.c.l.b16 %v1283
      %v1322 = vunpack.c.l.b16 %v1284
      %v1323 = vunpack.c.l.b16 %v1285
      %v1324 = vunpack.c.l.b16 %v1286
      %v1325 = vunpack.c.l.b16 %v1287
      %v1326 = vunpack.c.l.b16 %v1288
      %v1327 = vunpack.c.l.b16 %v1289
      %v1328 = vunpack.c.l.b16 %v1290
      %v1329 = vunpack.c.l.b16 %v1291
      %v1330 = vunpack.c.l.b16 %v1292
      %v1331 = vunpack.c.l.b16 %v1293
      %v1332 = vunpack.c.l.b16 %v1294
      %v1333 = vunpack.c.l.b16 %v1295
      %v1334 = vunpack.c.l.b16 %v1296
      %v1335 = vpack.c.b16 %v1317, %v1316
      %v1336 = vpack.c.b16 %v1319, %v1318
      %v1337 = vpack.c.b16 %v1321, %v1320
      %v1338 = vpack.c.b16 %v1323, %v1322
      %v1339 = vpack.c.b16 %v1325, %v1324
      %v1340 = vpack.c.b16 %v1327, %v1326
      %v1341 = vpack.c.b16 %v1329, %v1328
      %v1342 = vpack.c.b16 %v1331, %v1330
      %v1343 = vpack.c.b16 %v1333, %v1332
      %v1344 = vpack.c.b16 %v1334, %v1334
      %vm1345 = vcmask 1045504
      %v1346 = vrot.slane %v1335, 2
      %v1347 = vrot.slane %v1336, 2
      %v1348 = vsel %vm1345, %v1346, %v1347
      %v1349 = vrot.slane %v1337, 2
      %v1350 = vsel %vm1345, %v1347, %v1349
      %v1351 = vrot.slane %v1338, 2
      %v1352 = vsel %vm1345, %v1349, %v1351
      %v1353 = vrot.slane %v1339, 2
      %v1354 = vsel %vm1345, %v1351, %v1353
      %v1355 = vrot.slane %v1340, 2
      %v1356 = vsel %vm1345, %v1353, %v1355
      %v1357 = vrot.slane %v1341, 2
      %v1358 = vsel %vm1345, %v1355, %v1357
      %v1359 = vrot.slane %v1342, 2
      %v1360 = vsel %vm1345, %v1357, %v1359
      %v1361 = vrot.slane %v1343, 2
      %v1362 = vsel %vm1345, %v1359, %v1361
      %v1363 = vrot.slane %v1344, 2
      %v1364 = vsel %vm1345, %v1361, %v1363
      %1365 = vrot.lane.b32.xlu0 %v1348, 28
      %v1366 = vpop.permute.xlu0 %1365
      %1367 = vrot.lane.b32.xlu0 %v1350, 28
      %v1368 = vpop.permute.xlu0 %1367
      %1369 = vrot.lane.b32.xlu0 %v1352, 28
      %v1370 = vpop.permute.xlu0 %1369
      %1371 = vrot.lane.b32.xlu0 %v1354, 28
      %v1372 = vpop.permute.xlu0 %1371
      %1373 = vrot.lane.b32.xlu0 %v1356, 28
      %v1374 = vpop.permute.xlu0 %1373
      %1375 = vrot.lane.b32.xlu0 %v1358, 28
      %v1376 = vpop.permute.xlu0 %1375
      %1377 = vrot.lane.b32.xlu0 %v1360, 28
      %v1378 = vpop.permute.xlu0 %1377
      %1379 = vrot.lane.b32.xlu0 %v1362, 28
      %v1380 = vpop.permute.xlu0 %1379
      %1381 = vrot.lane.b32.xlu0 %v1364, 28
      %v1382 = vpop.permute.xlu0 %1381
      %vm1392 = vcmask 261344
      %1393 = vst.msk [vmem:[#allocation2] sm:$0xff] %vm1392, %v1366
      %1394 = vst.msk [vmem:[#allocation2 + $0x8] sm:$0xff] %vm1392, %v1368
      %1395 = vst.msk [vmem:[#allocation2 + $0x10] sm:$0xff] %vm1392, %v1370
      %1396 = vst.msk [vmem:[#allocation2 + $0x18] sm:$0xff] %vm1392, %v1372
      %1397 = vst.msk [vmem:[#allocation2 + $0x20] sm:$0xff] %vm1392, %v1374
      %1398 = vst.msk [vmem:[#allocation2 + $0x28] sm:$0xff] %vm1392, %v1376
      %1399 = vst.msk [vmem:[#allocation2 + $0x30] sm:$0xff] %vm1392, %v1378
      %1400 = vst.msk [vmem:[#allocation2 + $0x38] sm:$0xff] %vm1392, %v1380
      %1401 = vst.msk [vmem:[#allocation2 + $0x40] sm:$0xff] %vm1392, %v1382
      %v1402 = vld [vmem:[%s247 + $0x8] sm:$0xc]
      %v1403 = vld [vmem:[%s247 + $0xc] sm:$0xf]
      %v1404 = vld [vmem:[%s247 + $0x10] sm:$0xf]
      %v1405 = vld [vmem:[%s247 + $0x14] sm:$0xf]
      %v1406 = vld [vmem:[%s247 + $0x18] sm:$0xf]
      %v1407 = vld [vmem:[%s247 + $0x1c] sm:$0xf]
      %v1408 = vld [vmem:[%s247 + $0x20] sm:$0xf]
      %v1409 = vld [vmem:[%s247 + $0x24] sm:$0xf]
      %v1410 = vld [vmem:[%s247 + $0x28] sm:$0xf]
      %v1411 = vld [vmem:[%s247 + $0x2c] sm:$0xf]
      %v1412 = vld [vmem:[%s247 + $0x30] sm:$0xf]
      %v1413 = vld [vmem:[%s247 + $0x34] sm:$0xf]
      %v1414 = vld [vmem:[%s247 + $0x38] sm:$0xf]
      %v1415 = vld [vmem:[%s247 + $0x3c] sm:$0xf]
      %v1416 = vld [vmem:[%s247 + $0x40] sm:$0xf]
      %v1417 = vld [vmem:[%s247 + $0x44] sm:$0xf]
      %v1418 = vld [vmem:[%s247 + $0x48] sm:$0xf]
      %v1419 = vld [vmem:[%s247 + $0x4c] sm:$0xf]
      %v1420 = vld [vmem:[%s247 + $0x50] sm:$0x7]
      %v1440 = vunpack.c.l.b16 %v1402
      %v1441 = vunpack.c.l.b16 %v1403
      %v1442 = vunpack.c.l.b16 %v1404
      %v1443 = vunpack.c.l.b16 %v1405
      %v1444 = vunpack.c.l.b16 %v1406
      %v1445 = vunpack.c.l.b16 %v1407
      %v1446 = vunpack.c.l.b16 %v1408
      %v1447 = vunpack.c.l.b16 %v1409
      %v1448 = vunpack.c.l.b16 %v1410
      %v1449 = vunpack.c.l.b16 %v1411
      %v1450 = vunpack.c.l.b16 %v1412
      %v1451 = vunpack.c.l.b16 %v1413
      %v1452 = vunpack.c.l.b16 %v1414
      %v1453 = vunpack.c.l.b16 %v1415
      %v1454 = vunpack.c.l.b16 %v1416
      %v1455 = vunpack.c.l.b16 %v1417
      %v1456 = vunpack.c.l.b16 %v1418
      %v1457 = vunpack.c.l.b16 %v1419
      %v1458 = vunpack.c.l.b16 %v1420
      %v1459 = vpack.c.b16 %v1441, %v1440
      %v1460 = vpack.c.b16 %v1443, %v1442
      %v1461 = vpack.c.b16 %v1445, %v1444
      %v1462 = vpack.c.b16 %v1447, %v1446
      %v1463 = vpack.c.b16 %v1449, %v1448
      %v1464 = vpack.c.b16 %v1451, %v1450
      %v1465 = vpack.c.b16 %v1453, %v1452
      %v1466 = vpack.c.b16 %v1455, %v1454
      %v1467 = vpack.c.b16 %v1457, %v1456
      %v1468 = vpack.c.b16 %v1458, %v1458
      %vm1469 = vsmask.f32 5376
      %v1471 = vshrl.u32 %v1459, 16
      %v1473 = vrot.slane %v1471, 2
      %v1474 = vshll.u32 %v1459, 16
      %v1476 = vrot.slane %v1474, 3
      %v1477 = vor.u32 %v1473, %v1476
      %v1479 = vshrl.u32 %v1460, 16
      %v1481 = vrot.slane %v1479, 2
      %v1482 = vshll.u32 %v1460, 16
      %v1484 = vrot.slane %v1482, 3
      %v1485 = vor.u32 %v1481, %v1484
      %v1486 = vsel %vm1469, %v1477, %v1485
      %v1488 = vshrl.u32 %v1461, 16
      %v1490 = vrot.slane %v1488, 2
      %v1491 = vshll.u32 %v1461, 16
      %v1493 = vrot.slane %v1491, 3
      %v1494 = vor.u32 %v1490, %v1493
      %v1495 = vsel %vm1469, %v1485, %v1494
      %v1497 = vshrl.u32 %v1462, 16
      %v1499 = vrot.slane %v1497, 2
      %v1500 = vshll.u32 %v1462, 16
      %v1502 = vrot.slane %v1500, 3
      %v1503 = vor.u32 %v1499, %v1502
      %v1504 = vsel %vm1469, %v1494, %v1503
      %v1506 = vshrl.u32 %v1463, 16
      %v1508 = vrot.slane %v1506, 2
      %v1509 = vshll.u32 %v1463, 16
      %v1511 = vrot.slane %v1509, 3
      %v1512 = vor.u32 %v1508, %v1511
      %v1513 = vsel %vm1469, %v1503, %v1512
      %v1515 = vshrl.u32 %v1464, 16
      %v1517 = vrot.slane %v1515, 2
      %v1518 = vshll.u32 %v1464, 16
      %v1520 = vrot.slane %v1518, 3
      %v1521 = vor.u32 %v1517, %v1520
      %v1522 = vsel %vm1469, %v1512, %v1521
      %v1524 = vshrl.u32 %v1465, 16
      %v1526 = vrot.slane %v1524, 2
      %v1527 = vshll.u32 %v1465, 16
      %v1529 = vrot.slane %v1527, 3
      %v1530 = vor.u32 %v1526, %v1529
      %v1531 = vsel %vm1469, %v1521, %v1530
      %v1533 = vshrl.u32 %v1466, 16
      %v1535 = vrot.slane %v1533, 2
      %v1536 = vshll.u32 %v1466, 16
      %v1538 = vrot.slane %v1536, 3
      %v1539 = vor.u32 %v1535, %v1538
      %v1540 = vsel %vm1469, %v1530, %v1539
      %v1542 = vshrl.u32 %v1467, 16
      %v1544 = vrot.slane %v1542, 2
      %v1545 = vshll.u32 %v1467, 16
      %v1547 = vrot.slane %v1545, 3
      %v1548 = vor.u32 %v1544, %v1547
      %v1549 = vsel %vm1469, %v1539, %v1548
      %v1551 = vshrl.u32 %v1468, 16
      %v1553 = vrot.slane %v1551, 2
      %v1554 = vshll.u32 %v1468, 16
      %v1556 = vrot.slane %v1554, 3
      %v1557 = vor.u32 %v1553, %v1556
      %v1558 = vsel %vm1469, %v1548, %v1557
      %1559 = vrot.lane.b32.xlu0 %v1486, 32
      %v1560 = vpop.permute.xlu0 %1559
      %1561 = vrot.lane.b32.xlu0 %v1495, 32
      %v1562 = vpop.permute.xlu0 %1561
      %1563 = vrot.lane.b32.xlu0 %v1504, 32
      %v1564 = vpop.permute.xlu0 %1563
      %1565 = vrot.lane.b32.xlu0 %v1513, 32
      %v1566 = vpop.permute.xlu0 %1565
      %1567 = vrot.lane.b32.xlu0 %v1522, 32
      %v1568 = vpop.permute.xlu0 %1567
      %1569 = vrot.lane.b32.xlu0 %v1531, 32
      %v1570 = vpop.permute.xlu0 %1569
      %1571 = vrot.lane.b32.xlu0 %v1540, 32
      %v1572 = vpop.permute.xlu0 %1571
      %1573 = vrot.lane.b32.xlu0 %v1549, 32
      %v1574 = vpop.permute.xlu0 %1573
      %1575 = vrot.lane.b32.xlu0 %v1558, 32
      %v1576 = vpop.permute.xlu0 %1575
      %vm1586 = vcmask 294144
      %1587 = vst.msk [vmem:[#allocation2] sm:$0xff] %vm1586, %v1560
      %1588 = vst.msk [vmem:[#allocation2 + $0x8] sm:$0xff] %vm1586, %v1562
      %1589 = vst.msk [vmem:[#allocation2 + $0x10] sm:$0xff] %vm1586, %v1564
      %1590 = vst.msk [vmem:[#allocation2 + $0x18] sm:$0xff] %vm1586, %v1566
      %1591 = vst.msk [vmem:[#allocation2 + $0x20] sm:$0xff] %vm1586, %v1568
      %1592 = vst.msk [vmem:[#allocation2 + $0x28] sm:$0xff] %vm1586, %v1570
      %1593 = vst.msk [vmem:[#allocation2 + $0x30] sm:$0xff] %vm1586, %v1572
      %1594 = vst.msk [vmem:[#allocation2 + $0x38] sm:$0xff] %vm1586, %v1574
      %1595 = vst.msk [vmem:[#allocation2 + $0x40] sm:$0xff] %vm1586, %v1576
      %v1596 = vld [vmem:[%s247 + $0x8] sm:$0x8]
      %v1597 = vld [vmem:[%s247 + $0xc] sm:$0xf]
      %v1598 = vld [vmem:[%s247 + $0x10] sm:$0xf]
      %v1599 = vld [vmem:[%s247 + $0x14] sm:$0xf]
      %v1600 = vld [vmem:[%s247 + $0x18] sm:$0xf]
      %v1601 = vld [vmem:[%s247 + $0x1c] sm:$0xf]
      %v1602 = vld [vmem:[%s247 + $0x20] sm:$0xf]
      %v1603 = vld [vmem:[%s247 + $0x24] sm:$0xf]
      %v1604 = vld [vmem:[%s247 + $0x28] sm:$0xf]
      %v1605 = vld [vmem:[%s247 + $0x2c] sm:$0xf]
      %v1606 = vld [vmem:[%s247 + $0x30] sm:$0xf]
      %v1607 = vld [vmem:[%s247 + $0x34] sm:$0xf]
      %v1608 = vld [vmem:[%s247 + $0x38] sm:$0xf]
      %v1609 = vld [vmem:[%s247 + $0x3c] sm:$0xf]
      %v1610 = vld [vmem:[%s247 + $0x40] sm:$0xf]
      %v1611 = vld [vmem:[%s247 + $0x44] sm:$0xf]
      %v1612 = vld [vmem:[%s247 + $0x48] sm:$0xf]
      %v1613 = vld [vmem:[%s247 + $0x4c] sm:$0xf]
      %v1614 = vld [vmem:[%s247 + $0x50] sm:$0x7]
      %v1634 = vunpack.c.l.b16 %v1596
      %v1635 = vunpack.c.l.b16 %v1597
      %v1636 = vunpack.c.l.b16 %v1598
      %v1637 = vunpack.c.l.b16 %v1599
      %v1638 = vunpack.c.l.b16 %v1600
      %v1639 = vunpack.c.l.b16 %v1601
      %v1640 = vunpack.c.l.b16 %v1602
      %v1641 = vunpack.c.l.b16 %v1603
      %v1642 = vunpack.c.l.b16 %v1604
      %v1643 = vunpack.c.l.b16 %v1605
      %v1644 = vunpack.c.l.b16 %v1606
      %v1645 = vunpack.c.l.b16 %v1607
      %v1646 = vunpack.c.l.b16 %v1608
      %v1647 = vunpack.c.l.b16 %v1609
      %v1648 = vunpack.c.l.b16 %v1610
      %v1649 = vunpack.c.l.b16 %v1611
      %v1650 = vunpack.c.l.b16 %v1612
      %v1651 = vunpack.c.l.b16 %v1613
      %v1652 = vunpack.c.l.b16 %v1614
      %v1653 = vpack.c.b16 %v1635, %v1634
      %v1654 = vpack.c.b16 %v1637, %v1636
      %v1655 = vpack.c.b16 %v1639, %v1638
      %v1656 = vpack.c.b16 %v1641, %v1640
      %v1657 = vpack.c.b16 %v1643, %v1642
      %v1658 = vpack.c.b16 %v1645, %v1644
      %v1659 = vpack.c.b16 %v1647, %v1646
      %v1660 = vpack.c.b16 %v1649, %v1648
      %v1661 = vpack.c.b16 %v1651, %v1650
      %v1662 = vpack.c.b16 %v1652, %v1652
      %v1663 = vrot.slane %v1653, 3
      %v1664 = vrot.slane %v1654, 3
      %v1665 = vsel %vm323, %v1663, %v1664
      %v1666 = vrot.slane %v1655, 3
      %v1667 = vsel %vm323, %v1664, %v1666
      %v1668 = vrot.slane %v1656, 3
      %v1669 = vsel %vm323, %v1666, %v1668
      %v1670 = vrot.slane %v1657, 3
      %v1671 = vsel %vm323, %v1668, %v1670
      %v1672 = vrot.slane %v1658, 3
      %v1673 = vsel %vm323, %v1670, %v1672
      %v1674 = vrot.slane %v1659, 3
      %v1675 = vsel %vm323, %v1672, %v1674
      %v1676 = vrot.slane %v1660, 3
      %v1677 = vsel %vm323, %v1674, %v1676
      %v1678 = vrot.slane %v1661, 3
      %v1679 = vsel %vm323, %v1676, %v1678
      %v1680 = vrot.slane %v1662, 3
      %v1681 = vsel %vm323, %v1678, %v1680
      %1682 = vrot.lane.b32.xlu0 %v1665, 36
      %v1683 = vpop.permute.xlu0 %1682
      %1684 = vrot.lane.b32.xlu0 %v1667, 36
      %v1685 = vpop.permute.xlu0 %1684
      %1686 = vrot.lane.b32.xlu0 %v1669, 36
      %v1687 = vpop.permute.xlu0 %1686
      %1688 = vrot.lane.b32.xlu0 %v1671, 36
      %v1689 = vpop.permute.xlu0 %1688
      %1690 = vrot.lane.b32.xlu0 %v1673, 36
      %v1691 = vpop.permute.xlu0 %1690
      %1692 = vrot.lane.b32.xlu0 %v1675, 36
      %v1693 = vpop.permute.xlu0 %1692
      %1694 = vrot.lane.b32.xlu0 %v1677, 36
      %v1695 = vpop.permute.xlu0 %1694
      %1696 = vrot.lane.b32.xlu0 %v1679, 36
      %v1697 = vpop.permute.xlu0 %1696
      %1698 = vrot.lane.b32.xlu0 %v1681, 36
      %v1699 = vpop.permute.xlu0 %1698
      %vm1709 = vcmask 326944
      %1710 = vst.msk [vmem:[#allocation2] sm:$0xff] %vm1709, %v1683
      %1711 = vst.msk [vmem:[#allocation2 + $0x8] sm:$0xff] %vm1709, %v1685
      %1712 = vst.msk [vmem:[#allocation2 + $0x10] sm:$0xff] %vm1709, %v1687
      %1713 = vst.msk [vmem:[#allocation2 + $0x18] sm:$0xff] %vm1709, %v1689
      %1714 = vst.msk [vmem:[#allocation2 + $0x20] sm:$0xff] %vm1709, %v1691
      %1715 = vst.msk [vmem:[#allocation2 + $0x28] sm:$0xff] %vm1709, %v1693
      %1716 = vst.msk [vmem:[#allocation2 + $0x30] sm:$0xff] %vm1709, %v1695
      %1717 = vst.msk [vmem:[#allocation2 + $0x38] sm:$0xff] %vm1709, %v1697
      %1718 = vst.msk [vmem:[#allocation2 + $0x40] sm:$0xff] %vm1709, %v1699
      %v1719 = vld [vmem:[%s247 + $0xc] sm:$0x8]
      %v1720 = vld [vmem:[%s247 + $0x10] sm:$0xf]
      %v1721 = vld [vmem:[%s247 + $0x14] sm:$0xf]
      %v1722 = vld [vmem:[%s247 + $0x18] sm:$0xf]
      %v1723 = vld [vmem:[%s247 + $0x1c] sm:$0xf]
      %v1724 = vld [vmem:[%s247 + $0x20] sm:$0xf]
      %v1725 = vld [vmem:[%s247 + $0x24] sm:$0xf]
      %v1726 = vld [vmem:[%s247 + $0x28] sm:$0xf]
      %v1727 = vld [vmem:[%s247 + $0x2c] sm:$0xf]
      %v1728 = vld [vmem:[%s247 + $0x30] sm:$0xf]
      %v1729 = vld [vmem:[%s247 + $0x34] sm:$0xf]
      %v1730 = vld [vmem:[%s247 + $0x38] sm:$0xf]
      %v1731 = vld [vmem:[%s247 + $0x3c] sm:$0xf]
      %v1732 = vld [vmem:[%s247 + $0x40] sm:$0xf]
      %v1733 = vld [vmem:[%s247 + $0x44] sm:$0xf]
      %v1734 = vld [vmem:[%s247 + $0x48] sm:$0xf]
      %v1735 = vld [vmem:[%s247 + $0x4c] sm:$0xf]
      %v1736 = vld [vmem:[%s247 + $0x50] sm:$0xf]
      %v1737 = vld [vmem:[%s247 + $0x54] sm:$0x7]
      %v1757 = vunpack.c.l.b16 %v1719
      %v1758 = vunpack.c.l.b16 %v1720
      %v1759 = vunpack.c.l.b16 %v1721
      %v1760 = vunpack.c.l.b16 %v1722
      %v1761 = vunpack.c.l.b16 %v1723
      %v1762 = vunpack.c.l.b16 %v1724
      %v1763 = vunpack.c.l.b16 %v1725
      %v1764 = vunpack.c.l.b16 %v1726
      %v1765 = vunpack.c.l.b16 %v1727
      %v1766 = vunpack.c.l.b16 %v1728
      %v1767 = vunpack.c.l.b16 %v1729
      %v1768 = vunpack.c.l.b16 %v1730
      %v1769 = vunpack.c.l.b16 %v1731
      %v1770 = vunpack.c.l.b16 %v1732
      %v1771 = vunpack.c.l.b16 %v1733
      %v1772 = vunpack.c.l.b16 %v1734
      %v1773 = vunpack.c.l.b16 %v1735
      %v1774 = vunpack.c.l.b16 %v1736
      %v1775 = vunpack.c.l.b16 %v1737
      %v1776 = vpack.c.b16 %v1758, %v1757
      %v1777 = vpack.c.b16 %v1760, %v1759
      %v1778 = vpack.c.b16 %v1762, %v1761
      %v1779 = vpack.c.b16 %v1764, %v1763
      %v1780 = vpack.c.b16 %v1766, %v1765
      %v1781 = vpack.c.b16 %v1768, %v1767
      %v1782 = vpack.c.b16 %v1770, %v1769
      %v1783 = vpack.c.b16 %v1772, %v1771
      %v1784 = vpack.c.b16 %v1774, %v1773
      %v1785 = vpack.c.b16 %v1775, %v1775
      %v1786 = vrot.slane %v1776, 3
      %v1787 = vrot.slane %v1777, 3
      %v1788 = vsel %vm323, %v1786, %v1787
      %v1789 = vrot.slane %v1778, 3
      %v1790 = vsel %vm323, %v1787, %v1789
      %v1791 = vrot.slane %v1779, 3
      %v1792 = vsel %vm323, %v1789, %v1791
      %v1793 = vrot.slane %v1780, 3
      %v1794 = vsel %vm323, %v1791, %v1793
      %v1795 = vrot.slane %v1781, 3
      %v1796 = vsel %vm323, %v1793, %v1795
      %v1797 = vrot.slane %v1782, 3
      %v1798 = vsel %vm323, %v1795, %v1797
      %v1799 = vrot.slane %v1783, 3
      %v1800 = vsel %vm323, %v1797, %v1799
      %v1801 = vrot.slane %v1784, 3
      %v1802 = vsel %vm323, %v1799, %v1801
      %v1803 = vrot.slane %v1785, 3
      %v1804 = vsel %vm323, %v1801, %v1803
      %1805 = vrot.lane.b32.xlu0 %v1788, 40
      %v1806 = vpop.permute.xlu0 %1805
      %1807 = vrot.lane.b32.xlu0 %v1790, 40
      %v1808 = vpop.permute.xlu0 %1807
      %1809 = vrot.lane.b32.xlu0 %v1792, 40
      %v1810 = vpop.permute.xlu0 %1809
      %1811 = vrot.lane.b32.xlu0 %v1794, 40
      %v1812 = vpop.permute.xlu0 %1811
      %1813 = vrot.lane.b32.xlu0 %v1796, 40
      %v1814 = vpop.permute.xlu0 %1813
      %1815 = vrot.lane.b32.xlu0 %v1798, 40
      %v1816 = vpop.permute.xlu0 %1815
      %1817 = vrot.lane.b32.xlu0 %v1800, 40
      %v1818 = vpop.permute.xlu0 %1817
      %1819 = vrot.lane.b32.xlu0 %v1802, 40
      %v1820 = vpop.permute.xlu0 %1819
      %1821 = vrot.lane.b32.xlu0 %v1804, 40
      %v1822 = vpop.permute.xlu0 %1821
      %vm1832 = vcmask 359744
      %1833 = vst.msk [vmem:[#allocation2] sm:$0xff] %vm1832, %v1806
      %1834 = vst.msk [vmem:[#allocation2 + $0x8] sm:$0xff] %vm1832, %v1808
      %1835 = vst.msk [vmem:[#allocation2 + $0x10] sm:$0xff] %vm1832, %v1810
      %1836 = vst.msk [vmem:[#allocation2 + $0x18] sm:$0xff] %vm1832, %v1812
      %1837 = vst.msk [vmem:[#allocation2 + $0x20] sm:$0xff] %vm1832, %v1814
      %1838 = vst.msk [vmem:[#allocation2 + $0x28] sm:$0xff] %vm1832, %v1816
      %1839 = vst.msk [vmem:[#allocation2 + $0x30] sm:$0xff] %vm1832, %v1818
      %1840 = vst.msk [vmem:[#allocation2 + $0x38] sm:$0xff] %vm1832, %v1820
      %1841 = vst.msk [vmem:[#allocation2 + $0x40] sm:$0xff] %vm1832, %v1822
      %v1842 = vld [vmem:[%s247 + $0xc] sm:$0x8]
      %v1843 = vld [vmem:[%s247 + $0x10] sm:$0xf]
      %v1844 = vld [vmem:[%s247 + $0x14] sm:$0xf]
      %v1845 = vld [vmem:[%s247 + $0x18] sm:$0xf]
      %v1846 = vld [vmem:[%s247 + $0x1c] sm:$0xf]
      %v1847 = vld [vmem:[%s247 + $0x20] sm:$0xf]
      %v1848 = vld [vmem:[%s247 + $0x24] sm:$0xf]
      %v1849 = vld [vmem:[%s247 + $0x28] sm:$0xf]
      %v1850 = vld [vmem:[%s247 + $0x2c] sm:$0xf]
      %v1851 = vld [vmem:[%s247 + $0x30] sm:$0xf]
      %v1852 = vld [vmem:[%s247 + $0x34] sm:$0xf]
      %v1853 = vld [vmem:[%s247 + $0x38] sm:$0xf]
      %v1854 = vld [vmem:[%s247 + $0x3c] sm:$0xf]
      %v1855 = vld [vmem:[%s247 + $0x40] sm:$0xf]
      %v1856 = vld [vmem:[%s247 + $0x44] sm:$0xf]
      %v1857 = vld [vmem:[%s247 + $0x48] sm:$0xf]
      %v1858 = vld [vmem:[%s247 + $0x4c] sm:$0xf]
      %v1859 = vld [vmem:[%s247 + $0x50] sm:$0xf]
      %v1860 = vld [vmem:[%s247 + $0x54] sm:$0xf]
      %v1880 = vunpack.c.l.b16 %v1842
      %v1881 = vunpack.c.l.b16 %v1843
      %v1882 = vunpack.c.l.b16 %v1844
      %v1883 = vunpack.c.l.b16 %v1845
      %v1884 = vunpack.c.l.b16 %v1846
      %v1885 = vunpack.c.l.b16 %v1847
      %v1886 = vunpack.c.l.b16 %v1848
      %v1887 = vunpack.c.l.b16 %v1849
      %v1888 = vunpack.c.l.b16 %v1850
      %v1889 = vunpack.c.l.b16 %v1851
      %v1890 = vunpack.c.l.b16 %v1852
      %v1891 = vunpack.c.l.b16 %v1853
      %v1892 = vunpack.c.l.b16 %v1854
      %v1893 = vunpack.c.l.b16 %v1855
      %v1894 = vunpack.c.l.b16 %v1856
      %v1895 = vunpack.c.l.b16 %v1857
      %v1896 = vunpack.c.l.b16 %v1858
      %v1897 = vunpack.c.l.b16 %v1859
      %v1898 = vunpack.c.l.b16 %v1860
      %v1899 = vpack.c.b16 %v1881, %v1880
      %v1900 = vpack.c.b16 %v1883, %v1882
      %v1901 = vpack.c.b16 %v1885, %v1884
      %v1902 = vpack.c.b16 %v1887, %v1886
      %v1903 = vpack.c.b16 %v1889, %v1888
      %v1904 = vpack.c.b16 %v1891, %v1890
      %v1905 = vpack.c.b16 %v1893, %v1892
      %v1906 = vpack.c.b16 %v1895, %v1894
      %v1907 = vpack.c.b16 %v1897, %v1896
      %v1908 = vpack.c.b16 %v1898, %v1898
      %v1910 = vshrl.u32 %v1899, 16
      %v1912 = vrot.slane %v1910, 3
      %v1913 = vshll.u32 %v1899, 16
      %v1915 = vrot.slane %v1913, 4
      %v1916 = vor.u32 %v1912, %v1915
      %v1918 = vshrl.u32 %v1900, 16
      %v1920 = vrot.slane %v1918, 3
      %v1921 = vshll.u32 %v1900, 16
      %v1923 = vrot.slane %v1921, 4
      %v1924 = vor.u32 %v1920, %v1923
      %v1925 = vsel %vm429, %v1916, %v1924
      %v1927 = vshrl.u32 %v1901, 16
      %v1929 = vrot.slane %v1927, 3
      %v1930 = vshll.u32 %v1901, 16
      %v1932 = vrot.slane %v1930, 4
      %v1933 = vor.u32 %v1929, %v1932
      %v1934 = vsel %vm429, %v1924, %v1933
      %v1936 = vshrl.u32 %v1902, 16
      %v1938 = vrot.slane %v1936, 3
      %v1939 = vshll.u32 %v1902, 16
      %v1941 = vrot.slane %v1939, 4
      %v1942 = vor.u32 %v1938, %v1941
      %v1943 = vsel %vm429, %v1933, %v1942
      %v1945 = vshrl.u32 %v1903, 16
      %v1947 = vrot.slane %v1945, 3
      %v1948 = vshll.u32 %v1903, 16
      %v1950 = vrot.slane %v1948, 4
      %v1951 = vor.u32 %v1947, %v1950
      %v1952 = vsel %vm429, %v1942, %v1951
      %v1954 = vshrl.u32 %v1904, 16
      %v1956 = vrot.slane %v1954, 3
      %v1957 = vshll.u32 %v1904, 16
      %v1959 = vrot.slane %v1957, 4
      %v1960 = vor.u32 %v1956, %v1959
      %v1961 = vsel %vm429, %v1951, %v1960
      %v1963 = vshrl.u32 %v1905, 16
      %v1965 = vrot.slane %v1963, 3
      %v1966 = vshll.u32 %v1905, 16
      %v1968 = vrot.slane %v1966, 4
      %v1969 = vor.u32 %v1965, %v1968
      %v1970 = vsel %vm429, %v1960, %v1969
      %v1972 = vshrl.u32 %v1906, 16
      %v1974 = vrot.slane %v1972, 3
      %v1975 = vshll.u32 %v1906, 16
      %v1977 = vrot.slane %v1975, 4
      %v1978 = vor.u32 %v1974, %v1977
      %v1979 = vsel %vm429, %v1969, %v1978
      %v1981 = vshrl.u32 %v1907, 16
      %v1983 = vrot.slane %v1981, 3
      %v1984 = vshll.u32 %v1907, 16
      %v1986 = vrot.slane %v1984, 4
      %v1987 = vor.u32 %v1983, %v1986
      %v1988 = vsel %vm429, %v1978, %v1987
      %v1990 = vshrl.u32 %v1908, 16
      %v1992 = vrot.slane %v1990, 3
      %v1993 = vshll.u32 %v1908, 16
      %v1995 = vrot.slane %v1993, 4
      %v1996 = vor.u32 %v1992, %v1995
      %v1997 = vsel %vm429, %v1987, %v1996
      %1998 = vrot.lane.b32.xlu0 %v1925, 44
      %v1999 = vpop.permute.xlu0 %1998
      %2000 = vrot.lane.b32.xlu0 %v1934, 44
      %v2001 = vpop.permute.xlu0 %2000
      %2002 = vrot.lane.b32.xlu0 %v1943, 44
      %v2003 = vpop.permute.xlu0 %2002
      %2004 = vrot.lane.b32.xlu0 %v1952, 44
      %v2005 = vpop.permute.xlu0 %2004
      %2006 = vrot.lane.b32.xlu0 %v1961, 44
      %v2007 = vpop.permute.xlu0 %2006
      %2008 = vrot.lane.b32.xlu0 %v1970, 44
      %v2009 = vpop.permute.xlu0 %2008
      %2010 = vrot.lane.b32.xlu0 %v1979, 44
      %v2011 = vpop.permute.xlu0 %2010
      %2012 = vrot.lane.b32.xlu0 %v1988, 44
      %v2013 = vpop.permute.xlu0 %2012
      %2014 = vrot.lane.b32.xlu0 %v1997, 44
      %v2015 = vpop.permute.xlu0 %2014
      %vm2025 = vcmask 392544
      %2026 = vst.msk [vmem:[#allocation2] sm:$0xff] %vm2025, %v1999
      %2027 = vst.msk [vmem:[#allocation2 + $0x8] sm:$0xff] %vm2025, %v2001
      %2028 = vst.msk [vmem:[#allocation2 + $0x10] sm:$0xff] %vm2025, %v2003
      %2029 = vst.msk [vmem:[#allocation2 + $0x18] sm:$0xff] %vm2025, %v2005
      %2030 = vst.msk [vmem:[#allocation2 + $0x20] sm:$0xff] %vm2025, %v2007
      %2031 = vst.msk [vmem:[#allocation2 + $0x28] sm:$0xff] %vm2025, %v2009
      %2032 = vst.msk [vmem:[#allocation2 + $0x30] sm:$0xff] %vm2025, %v2011
      %2033 = vst.msk [vmem:[#allocation2 + $0x38] sm:$0xff] %vm2025, %v2013
      %2034 = vst.msk [vmem:[#allocation2 + $0x40] sm:$0xff] %vm2025, %v2015
      %v2035 = vld [vmem:[%s247 + $0x10] sm:$0xf]
      %v2036 = vld [vmem:[%s247 + $0x14] sm:$0xf]
      %v2037 = vld [vmem:[%s247 + $0x18] sm:$0xf]
      %v2038 = vld [vmem:[%s247 + $0x1c] sm:$0xf]
      %v2039 = vld [vmem:[%s247 + $0x20] sm:$0xf]
      %v2040 = vld [vmem:[%s247 + $0x24] sm:$0xf]
      %v2041 = vld [vmem:[%s247 + $0x28] sm:$0xf]
      %v2042 = vld [vmem:[%s247 + $0x2c] sm:$0xf]
      %v2043 = vld [vmem:[%s247 + $0x30] sm:$0xf]
      %v2044 = vld [vmem:[%s247 + $0x34] sm:$0xf]
      %v2045 = vld [vmem:[%s247 + $0x38] sm:$0xf]
      %v2046 = vld [vmem:[%s247 + $0x3c] sm:$0xf]
      %v2047 = vld [vmem:[%s247 + $0x40] sm:$0xf]
      %v2048 = vld [vmem:[%s247 + $0x44] sm:$0xf]
      %v2049 = vld [vmem:[%s247 + $0x48] sm:$0xf]
      %v2050 = vld [vmem:[%s247 + $0x4c] sm:$0xf]
      %v2051 = vld [vmem:[%s247 + $0x50] sm:$0xf]
      %v2052 = vld [vmem:[%s247 + $0x54] sm:$0xf]
      %v2071 = vunpack.c.l.b16 %v2035
      %v2072 = vunpack.c.l.b16 %v2036
      %v2073 = vunpack.c.l.b16 %v2037
      %v2074 = vunpack.c.l.b16 %v2038
      %v2075 = vunpack.c.l.b16 %v2039
      %v2076 = vunpack.c.l.b16 %v2040
      %v2077 = vunpack.c.l.b16 %v2041
      %v2078 = vunpack.c.l.b16 %v2042
      %v2079 = vunpack.c.l.b16 %v2043
      %v2080 = vunpack.c.l.b16 %v2044
      %v2081 = vunpack.c.l.b16 %v2045
      %v2082 = vunpack.c.l.b16 %v2046
      %v2083 = vunpack.c.l.b16 %v2047
      %v2084 = vunpack.c.l.b16 %v2048
      %v2085 = vunpack.c.l.b16 %v2049
      %v2086 = vunpack.c.l.b16 %v2050
      %v2087 = vunpack.c.l.b16 %v2051
      %v2088 = vunpack.c.l.b16 %v2052
      %v2089 = vpack.c.b16 %v2072, %v2071
      %v2090 = vpack.c.b16 %v2074, %v2073
      %v2091 = vpack.c.b16 %v2076, %v2075
      %v2092 = vpack.c.b16 %v2078, %v2077
      %v2093 = vpack.c.b16 %v2080, %v2079
      %v2094 = vpack.c.b16 %v2082, %v2081
      %v2095 = vpack.c.b16 %v2084, %v2083
      %v2096 = vpack.c.b16 %v2086, %v2085
      %v2097 = vpack.c.b16 %v2088, %v2087
      %2098 = vrot.lane.b32.xlu0 %v2089, 48
      %v2099 = vpop.permute.xlu0 %2098
      %2100 = vrot.lane.b32.xlu0 %v2090, 48
      %v2101 = vpop.permute.xlu0 %2100
      %2102 = vrot.lane.b32.xlu0 %v2091, 48
      %v2103 = vpop.permute.xlu0 %2102
      %2104 = vrot.lane.b32.xlu0 %v2092, 48
      %v2105 = vpop.permute.xlu0 %2104
      %2106 = vrot.lane.b32.xlu0 %v2093, 48
      %v2107 = vpop.permute.xlu0 %2106
      %2108 = vrot.lane.b32.xlu0 %v2094, 48
      %v2109 = vpop.permute.xlu0 %2108
      %2110 = vrot.lane.b32.xlu0 %v2095, 48
      %v2111 = vpop.permute.xlu0 %2110
      %2112 = vrot.lane.b32.xlu0 %v2096, 48
      %v2113 = vpop.permute.xlu0 %2112
      %2114 = vrot.lane.b32.xlu0 %v2097, 48
      %v2115 = vpop.permute.xlu0 %2114
      %vm2125 = vcmask 425344
      %2126 = vst.msk [vmem:[#allocation2] sm:$0xff] %vm2125, %v2099
      %2127 = vst.msk [vmem:[#allocation2 + $0x8] sm:$0xff] %vm2125, %v2101
      %2128 = vst.msk [vmem:[#allocation2 + $0x10] sm:$0xff] %vm2125, %v2103
      %2129 = vst.msk [vmem:[#allocation2 + $0x18] sm:$0xff] %vm2125, %v2105
      %2130 = vst.msk [vmem:[#allocation2 + $0x20] sm:$0xff] %vm2125, %v2107
      %2131 = vst.msk [vmem:[#allocation2 + $0x28] sm:$0xff] %vm2125, %v2109
      %2132 = vst.msk [vmem:[#allocation2 + $0x30] sm:$0xff] %vm2125, %v2111
      %2133 = vst.msk [vmem:[#allocation2 + $0x38] sm:$0xff] %vm2125, %v2113
      %2134 = vst.msk [vmem:[#allocation2 + $0x40] sm:$0xff] %vm2125, %v2115
      %v2135 = vld [vmem:[%s247 + $0x10] sm:$0xf]
      %v2136 = vld [vmem:[%s247 + $0x14] sm:$0xf]
      %v2137 = vld [vmem:[%s247 + $0x18] sm:$0xf]
      %v2138 = vld [vmem:[%s247 + $0x1c] sm:$0xf]
      %v2139 = vld [vmem:[%s247 + $0x20] sm:$0xf]
      %v2140 = vld [vmem:[%s247 + $0x24] sm:$0xf]
      %v2141 = vld [vmem:[%s247 + $0x28] sm:$0xf]
      %v2142 = vld [vmem:[%s247 + $0x2c] sm:$0xf]
      %v2143 = vld [vmem:[%s247 + $0x30] sm:$0xf]
      %v2144 = vld [vmem:[%s247 + $0x34] sm:$0xf]
      %v2145 = vld [vmem:[%s247 + $0x38] sm:$0xf]
      %v2146 = vld [vmem:[%s247 + $0x3c] sm:$0xf]
      %v2147 = vld [vmem:[%s247 + $0x40] sm:$0xf]
      %v2148 = vld [vmem:[%s247 + $0x44] sm:$0xf]
      %v2149 = vld [vmem:[%s247 + $0x48] sm:$0xf]
      %v2150 = vld [vmem:[%s247 + $0x4c] sm:$0xf]
      %v2151 = vld [vmem:[%s247 + $0x50] sm:$0xf]
      %v2152 = vld [vmem:[%s247 + $0x54] sm:$0xf]
      %v2153 = vld [vmem:[%s247 + $0x58] sm:$0x1]
      %v2173 = vunpack.c.l.b16 %v2135
      %v2174 = vunpack.c.l.b16 %v2136
      %v2175 = vunpack.c.l.b16 %v2137
      %v2176 = vunpack.c.l.b16 %v2138
      %v2177 = vunpack.c.l.b16 %v2139
      %v2178 = vunpack.c.l.b16 %v2140
      %v2179 = vunpack.c.l.b16 %v2141
      %v2180 = vunpack.c.l.b16 %v2142
      %v2181 = vunpack.c.l.b16 %v2143
      %v2182 = vunpack.c.l.b16 %v2144
      %v2183 = vunpack.c.l.b16 %v2145
      %v2184 = vunpack.c.l.b16 %v2146
      %v2185 = vunpack.c.l.b16 %v2147
      %v2186 = vunpack.c.l.b16 %v2148
      %v2187 = vunpack.c.l.b16 %v2149
      %v2188 = vunpack.c.l.b16 %v2150
      %v2189 = vunpack.c.l.b16 %v2151
      %v2190 = vunpack.c.l.b16 %v2152
      %v2191 = vunpack.c.l.b16 %v2153
      %v2192 = vpack.c.b16 %v2174, %v2173
      %v2193 = vpack.c.b16 %v2176, %v2175
      %v2194 = vpack.c.b16 %v2178, %v2177
      %v2195 = vpack.c.b16 %v2180, %v2179
      %v2196 = vpack.c.b16 %v2182, %v2181
      %v2197 = vpack.c.b16 %v2184, %v2183
      %v2198 = vpack.c.b16 %v2186, %v2185
      %v2199 = vpack.c.b16 %v2188, %v2187
      %v2200 = vpack.c.b16 %v2190, %v2189
      %v2201 = vpack.c.b16 %v2191, %v2191
      %v2203 = vshrl.u32 %v2192, 16
      %v2205 = vshll.u32 %v2192, 16
      %v2207 = vrot.slane %v2205, 1
      %v2208 = vor.u32 %v2203, %v2207
      %v2210 = vshll.u32 %v2193, 16
      %v2212 = vrot.slane %v2210, 1
      %v2213 = vsel %vm723, %v2208, %v2212
      %v2214 = vshrl.u32 %v2193, 16
      %v2216 = vor.u32 %v2214, %v2212
      %v2218 = vshll.u32 %v2194, 16
      %v2220 = vrot.slane %v2218, 1
      %v2221 = vsel %vm723, %v2216, %v2220
      %v2222 = vshrl.u32 %v2194, 16
      %v2224 = vor.u32 %v2222, %v2220
      %v2226 = vshll.u32 %v2195, 16
      %v2228 = vrot.slane %v2226, 1
      %v2229 = vsel %vm723, %v2224, %v2228
      %v2230 = vshrl.u32 %v2195, 16
      %v2232 = vor.u32 %v2230, %v2228
      %v2234 = vshll.u32 %v2196, 16
      %v2236 = vrot.slane %v2234, 1
      %v2237 = vsel %vm723, %v2232, %v2236
      %v2238 = vshrl.u32 %v2196, 16
      %v2240 = vor.u32 %v2238, %v2236
      %v2242 = vshll.u32 %v2197, 16
      %v2244 = vrot.slane %v2242, 1
      %v2245 = vsel %vm723, %v2240, %v2244
      %v2246 = vshrl.u32 %v2197, 16
      %v2248 = vor.u32 %v2246, %v2244
      %v2250 = vshll.u32 %v2198, 16
      %v2252 = vrot.slane %v2250, 1
      %v2253 = vsel %vm723, %v2248, %v2252
      %v2254 = vshrl.u32 %v2198, 16
      %v2256 = vor.u32 %v2254, %v2252
      %v2258 = vshll.u32 %v2199, 16
      %v2260 = vrot.slane %v2258, 1
      %v2261 = vsel %vm723, %v2256, %v2260
      %v2262 = vshrl.u32 %v2199, 16
      %v2264 = vor.u32 %v2262, %v2260
      %v2266 = vshll.u32 %v2200, 16
      %v2268 = vrot.slane %v2266, 1
      %v2269 = vsel %vm723, %v2264, %v2268
      %v2270 = vshrl.u32 %v2200, 16
      %v2272 = vor.u32 %v2270, %v2268
      %v2274 = vshll.u32 %v2201, 16
      %v2276 = vrot.slane %v2274, 1
      %v2277 = vsel %vm723, %v2272, %v2276
      %2278 = vrot.lane.b32.xlu0 %v2213, 52
      %v2279 = vpop.permute.xlu0 %2278
      %2280 = vrot.lane.b32.xlu0 %v2221, 52
      %v2281 = vpop.permute.xlu0 %2280
      %2282 = vrot.lane.b32.xlu0 %v2229, 52
      %v2283 = vpop.permute.xlu0 %2282
      %2284 = vrot.lane.b32.xlu0 %v2237, 52
      %v2285 = vpop.permute.xlu0 %2284
      %2286 = vrot.lane.b32.xlu0 %v2245, 52
      %v2287 = vpop.permute.xlu0 %2286
      %2288 = vrot.lane.b32.xlu0 %v2253, 52
      %v2289 = vpop.permute.xlu0 %2288
      %2290 = vrot.lane.b32.xlu0 %v2261, 52
      %v2291 = vpop.permute.xlu0 %2290
      %2292 = vrot.lane.b32.xlu0 %v2269, 52
      %v2293 = vpop.permute.xlu0 %2292
      %2294 = vrot.lane.b32.xlu0 %v2277, 52
      %v2295 = vpop.permute.xlu0 %2294
      %vm2305 = vcmask 458144
      %2306 = vst.msk [vmem:[#allocation2] sm:$0xff] %vm2305, %v2279
      %2307 = vst.msk [vmem:[#allocation2 + $0x8] sm:$0xff] %vm2305, %v2281
      %2308 = vst.msk [vmem:[#allocation2 + $0x10] sm:$0xff] %vm2305, %v2283
      %2309 = vst.msk [vmem:[#allocation2 + $0x18] sm:$0xff] %vm2305, %v2285
      %2310 = vst.msk [vmem:[#allocation2 + $0x20] sm:$0xff] %vm2305, %v2287
      %2311 = vst.msk [vmem:[#allocation2 + $0x28] sm:$0xff] %vm2305, %v2289
      %2312 = vst.msk [vmem:[#allocation2 + $0x30] sm:$0xff] %vm2305, %v2291
      %2313 = vst.msk [vmem:[#allocation2 + $0x38] sm:$0xff] %vm2305, %v2293
      %2314 = vst.msk [vmem:[#allocation2 + $0x40] sm:$0xff] %vm2305, %v2295
      %v2315 = vld [vmem:[%s247 + $0x10] sm:$0xe]
      %v2316 = vld [vmem:[%s247 + $0x14] sm:$0xf]
      %v2317 = vld [vmem:[%s247 + $0x18] sm:$0xf]
      %v2318 = vld [vmem:[%s247 + $0x1c] sm:$0xf]
      %v2319 = vld [vmem:[%s247 + $0x20] sm:$0xf]
      %v2320 = vld [vmem:[%s247 + $0x24] sm:$0xf]
      %v2321 = vld [vmem:[%s247 + $0x28] sm:$0xf]
      %v2322 = vld [vmem:[%s247 + $0x2c] sm:$0xf]
      %v2323 = vld [vmem:[%s247 + $0x30] sm:$0xf]
      %v2324 = vld [vmem:[%s247 + $0x34] sm:$0xf]
      %v2325 = vld [vmem:[%s247 + $0x38] sm:$0xf]
      %v2326 = vld [vmem:[%s247 + $0x3c] sm:$0xf]
      %v2327 = vld [vmem:[%s247 + $0x40] sm:$0xf]
      %v2328 = vld [vmem:[%s247 + $0x44] sm:$0xf]
      %v2329 = vld [vmem:[%s247 + $0x48] sm:$0xf]
      %v2330 = vld [vmem:[%s247 + $0x4c] sm:$0xf]
      %v2331 = vld [vmem:[%s247 + $0x50] sm:$0xf]
      %v2332 = vld [vmem:[%s247 + $0x54] sm:$0xf]
      %v2333 = vld [vmem:[%s247 + $0x58] sm:$0x1]
      %v2353 = vunpack.c.l.b16 %v2315
      %v2354 = vunpack.c.l.b16 %v2316
      %v2355 = vunpack.c.l.b16 %v2317
      %v2356 = vunpack.c.l.b16 %v2318
      %v2357 = vunpack.c.l.b16 %v2319
      %v2358 = vunpack.c.l.b16 %v2320
      %v2359 = vunpack.c.l.b16 %v2321
      %v2360 = vunpack.c.l.b16 %v2322
      %v2361 = vunpack.c.l.b16 %v2323
      %v2362 = vunpack.c.l.b16 %v2324
      %v2363 = vunpack.c.l.b16 %v2325
      %v2364 = vunpack.c.l.b16 %v2326
      %v2365 = vunpack.c.l.b16 %v2327
      %v2366 = vunpack.c.l.b16 %v2328
      %v2367 = vunpack.c.l.b16 %v2329
      %v2368 = vunpack.c.l.b16 %v2330
      %v2369 = vunpack.c.l.b16 %v2331
      %v2370 = vunpack.c.l.b16 %v2332
      %v2371 = vunpack.c.l.b16 %v2333
      %v2372 = vpack.c.b16 %v2354, %v2353
      %v2373 = vpack.c.b16 %v2356, %v2355
      %v2374 = vpack.c.b16 %v2358, %v2357
      %v2375 = vpack.c.b16 %v2360, %v2359
      %v2376 = vpack.c.b16 %v2362, %v2361
      %v2377 = vpack.c.b16 %v2364, %v2363
      %v2378 = vpack.c.b16 %v2366, %v2365
      %v2379 = vpack.c.b16 %v2368, %v2367
      %v2380 = vpack.c.b16 %v2370, %v2369
      %v2381 = vpack.c.b16 %v2371, %v2371
      %v2382 = vrot.slane %v2372, 1
      %v2383 = vrot.slane %v2373, 1
      %v2384 = vsel %vm904, %v2382, %v2383
      %v2385 = vrot.slane %v2374, 1
      %v2386 = vsel %vm904, %v2383, %v2385
      %v2387 = vrot.slane %v2375, 1
      %v2388 = vsel %vm904, %v2385, %v2387
      %v2389 = vrot.slane %v2376, 1
      %v2390 = vsel %vm904, %v2387, %v2389
      %v2391 = vrot.slane %v2377, 1
      %v2392 = vsel %vm904, %v2389, %v2391
      %v2393 = vrot.slane %v2378, 1
      %v2394 = vsel %vm904, %v2391, %v2393
      %v2395 = vrot.slane %v2379, 1
      %v2396 = vsel %vm904, %v2393, %v2395
      %v2397 = vrot.slane %v2380, 1
      %v2398 = vsel %vm904, %v2395, %v2397
      %v2399 = vrot.slane %v2381, 1
      %v2400 = vsel %vm904, %v2397, %v2399
      %2401 = vrot.lane.b32.xlu0 %v2384, 56
      %v2402 = vpop.permute.xlu0 %2401
      %2403 = vrot.lane.b32.xlu0 %v2386, 56
      %v2404 = vpop.permute.xlu0 %2403
      %2405 = vrot.lane.b32.xlu0 %v2388, 56
      %v2406 = vpop.permute.xlu0 %2405
      %2407 = vrot.lane.b32.xlu0 %v2390, 56
      %v2408 = vpop.permute.xlu0 %2407
      %2409 = vrot.lane.b32.xlu0 %v2392, 56
      %v2410 = vpop.permute.xlu0 %2409
      %2411 = vrot.lane.b32.xlu0 %v2394, 56
      %v2412 = vpop.permute.xlu0 %2411
      %2413 = vrot.lane.b32.xlu0 %v2396, 56
      %v2414 = vpop.permute.xlu0 %2413
      %2415 = vrot.lane.b32.xlu0 %v2398, 56
      %v2416 = vpop.permute.xlu0 %2415
      %2417 = vrot.lane.b32.xlu0 %v2400, 56
      %v2418 = vpop.permute.xlu0 %2417
      %vm2428 = vcmask 490944
      %2429 = vst.msk [vmem:[#allocation2] sm:$0xff] %vm2428, %v2402
      %2430 = vst.msk [vmem:[#allocation2 + $0x8] sm:$0xff] %vm2428, %v2404
      %2431 = vst.msk [vmem:[#allocation2 + $0x10] sm:$0xff] %vm2428, %v2406
      %2432 = vst.msk [vmem:[#allocation2 + $0x18] sm:$0xff] %vm2428, %v2408
      %2433 = vst.msk [vmem:[#allocation2 + $0x20] sm:$0xff] %vm2428, %v2410
      %2434 = vst.msk [vmem:[#allocation2 + $0x28] sm:$0xff] %vm2428, %v2412
      %2435 = vst.msk [vmem:[#allocation2 + $0x30] sm:$0xff] %vm2428, %v2414
      %2436 = vst.msk [vmem:[#allocation2 + $0x38] sm:$0xff] %vm2428, %v2416
      %2437 = vst.msk [vmem:[#allocation2 + $0x40] sm:$0xff] %vm2428, %v2418
      %v2438 = vld [vmem:[%s247 + $0x14] sm:$0xe]
      %v2439 = vld [vmem:[%s247 + $0x18] sm:$0xf]
      %v2440 = vld [vmem:[%s247 + $0x1c] sm:$0xf]
      %v2441 = vld [vmem:[%s247 + $0x20] sm:$0xf]
      %v2442 = vld [vmem:[%s247 + $0x24] sm:$0xf]
      %v2443 = vld [vmem:[%s247 + $0x28] sm:$0xf]
      %v2444 = vld [vmem:[%s247 + $0x2c] sm:$0xf]
      %v2445 = vld [vmem:[%s247 + $0x30] sm:$0xf]
      %v2446 = vld [vmem:[%s247 + $0x34] sm:$0xf]
      %v2447 = vld [vmem:[%s247 + $0x38] sm:$0xf]
      %v2448 = vld [vmem:[%s247 + $0x3c] sm:$0xf]
      %v2449 = vld [vmem:[%s247 + $0x40] sm:$0xf]
      %v2450 = vld [vmem:[%s247 + $0x44] sm:$0xf]
      %v2451 = vld [vmem:[%s247 + $0x48] sm:$0xf]
      %v2452 = vld [vmem:[%s247 + $0x4c] sm:$0xf]
      %v2453 = vld [vmem:[%s247 + $0x50] sm:$0xf]
      %v2454 = vld [vmem:[%s247 + $0x54] sm:$0xf]
      %v2455 = vld [vmem:[%s247 + $0x58] sm:$0xf]
      %v2456 = vld [vmem:[%s247 + $0x5c] sm:$0x1]
      %v2476 = vunpack.c.l.b16 %v2438
      %v2477 = vunpack.c.l.b16 %v2439
      %v2478 = vunpack.c.l.b16 %v2440
      %v2479 = vunpack.c.l.b16 %v2441
      %v2480 = vunpack.c.l.b16 %v2442
      %v2481 = vunpack.c.l.b16 %v2443
      %v2482 = vunpack.c.l.b16 %v2444
      %v2483 = vunpack.c.l.b16 %v2445
      %v2484 = vunpack.c.l.b16 %v2446
      %v2485 = vunpack.c.l.b16 %v2447
      %v2486 = vunpack.c.l.b16 %v2448
      %v2487 = vunpack.c.l.b16 %v2449
      %v2488 = vunpack.c.l.b16 %v2450
      %v2489 = vunpack.c.l.b16 %v2451
      %v2490 = vunpack.c.l.b16 %v2452
      %v2491 = vunpack.c.l.b16 %v2453
      %v2492 = vunpack.c.l.b16 %v2454
      %v2493 = vunpack.c.l.b16 %v2455
      %v2494 = vunpack.c.l.b16 %v2456
      %v2495 = vpack.c.b16 %v2477, %v2476
      %v2496 = vpack.c.b16 %v2479, %v2478
      %v2497 = vpack.c.b16 %v2481, %v2480
      %v2498 = vpack.c.b16 %v2483, %v2482
      %v2499 = vpack.c.b16 %v2485, %v2484
      %v2500 = vpack.c.b16 %v2487, %v2486
      %v2501 = vpack.c.b16 %v2489, %v2488
      %v2502 = vpack.c.b16 %v2491, %v2490
      %v2503 = vpack.c.b16 %v2493, %v2492
      %v2504 = vpack.c.b16 %v2494, %v2494
      %v2505 = vrot.slane %v2495, 1
      %v2506 = vrot.slane %v2496, 1
      %v2507 = vsel %vm904, %v2505, %v2506
      %v2508 = vrot.slane %v2497, 1
      %v2509 = vsel %vm904, %v2506, %v2508
      %v2510 = vrot.slane %v2498, 1
      %v2511 = vsel %vm904, %v2508, %v2510
      %v2512 = vrot.slane %v2499, 1
      %v2513 = vsel %vm904, %v2510, %v2512
      %v2514 = vrot.slane %v2500, 1
      %v2515 = vsel %vm904, %v2512, %v2514
      %v2516 = vrot.slane %v2501, 1
      %v2517 = vsel %vm904, %v2514, %v2516
      %v2518 = vrot.slane %v2502, 1
      %v2519 = vsel %vm904, %v2516, %v2518
      %v2520 = vrot.slane %v2503, 1
      %v2521 = vsel %vm904, %v2518, %v2520
      %v2522 = vrot.slane %v2504, 1
      %v2523 = vsel %vm904, %v2520, %v2522
      %2524 = vrot.lane.b32.xlu0 %v2507, 60
      %v2525 = vpop.permute.xlu0 %2524
      %2526 = vrot.lane.b32.xlu0 %v2509, 60
      %v2527 = vpop.permute.xlu0 %2526
      %2528 = vrot.lane.b32.xlu0 %v2511, 60
      %v2529 = vpop.permute.xlu0 %2528
      %2530 = vrot.lane.b32.xlu0 %v2513, 60
      %v2531 = vpop.permute.xlu0 %2530
      %2532 = vrot.lane.b32.xlu0 %v2515, 60
      %v2533 = vpop.permute.xlu0 %2532
      %2534 = vrot.lane.b32.xlu0 %v2517, 60
      %v2535 = vpop.permute.xlu0 %2534
      %2536 = vrot.lane.b32.xlu0 %v2519, 60
      %v2537 = vpop.permute.xlu0 %2536
      %2538 = vrot.lane.b32.xlu0 %v2521, 60
      %v2539 = vpop.permute.xlu0 %2538
      %2540 = vrot.lane.b32.xlu0 %v2523, 60
      %v2541 = vpop.permute.xlu0 %2540
      %vm2551 = vcmask 523744
      %2552 = vst.msk [vmem:[#allocation2] sm:$0xff] %vm2551, %v2525
      %2553 = vst.msk [vmem:[#allocation2 + $0x8] sm:$0xff] %vm2551, %v2527
      %2554 = vst.msk [vmem:[#allocation2 + $0x10] sm:$0xff] %vm2551, %v2529
      %2555 = vst.msk [vmem:[#allocation2 + $0x18] sm:$0xff] %vm2551, %v2531
      %2556 = vst.msk [vmem:[#allocation2 + $0x20] sm:$0xff] %vm2551, %v2533
      %2557 = vst.msk [vmem:[#allocation2 + $0x28] sm:$0xff] %vm2551, %v2535
      %2558 = vst.msk [vmem:[#allocation2 + $0x30] sm:$0xff] %vm2551, %v2537
      %2559 = vst.msk [vmem:[#allocation2 + $0x38] sm:$0xff] %vm2551, %v2539
      %2560 = vst.msk [vmem:[#allocation2 + $0x40] sm:$0xff] %vm2551, %v2541
      %v2561 = vld [vmem:[%s247 + $0x14] sm:$0xe]
      %v2562 = vld [vmem:[%s247 + $0x18] sm:$0xf]
      %v2563 = vld [vmem:[%s247 + $0x1c] sm:$0xf]
      %v2564 = vld [vmem:[%s247 + $0x20] sm:$0xf]
      %v2565 = vld [vmem:[%s247 + $0x24] sm:$0xf]
      %v2566 = vld [vmem:[%s247 + $0x28] sm:$0xf]
      %v2567 = vld [vmem:[%s247 + $0x2c] sm:$0xf]
      %v2568 = vld [vmem:[%s247 + $0x30] sm:$0xf]
      %v2569 = vld [vmem:[%s247 + $0x34] sm:$0xf]
      %v2570 = vld [vmem:[%s247 + $0x38] sm:$0xf]
      %v2571 = vld [vmem:[%s247 + $0x3c] sm:$0xf]
      %v2572 = vld [vmem:[%s247 + $0x40] sm:$0xf]
      %v2573 = vld [vmem:[%s247 + $0x44] sm:$0xf]
      %v2574 = vld [vmem:[%s247 + $0x48] sm:$0xf]
      %v2575 = vld [vmem:[%s247 + $0x4c] sm:$0xf]
      %v2576 = vld [vmem:[%s247 + $0x50] sm:$0xf]
      %v2577 = vld [vmem:[%s247 + $0x54] sm:$0xf]
      %v2578 = vld [vmem:[%s247 + $0x58] sm:$0xf]
      %v2579 = vld [vmem:[%s247 + $0x5c] sm:$0x3]
      %v2599 = vunpack.c.l.b16 %v2561
      %v2600 = vunpack.c.l.b16 %v2562
      %v2601 = vunpack.c.l.b16 %v2563
      %v2602 = vunpack.c.l.b16 %v2564
      %v2603 = vunpack.c.l.b16 %v2565
      %v2604 = vunpack.c.l.b16 %v2566
      %v2605 = vunpack.c.l.b16 %v2567
      %v2606 = vunpack.c.l.b16 %v2568
      %v2607 = vunpack.c.l.b16 %v2569
      %v2608 = vunpack.c.l.b16 %v2570
      %v2609 = vunpack.c.l.b16 %v2571
      %v2610 = vunpack.c.l.b16 %v2572
      %v2611 = vunpack.c.l.b16 %v2573
      %v2612 = vunpack.c.l.b16 %v2574
      %v2613 = vunpack.c.l.b16 %v2575
      %v2614 = vunpack.c.l.b16 %v2576
      %v2615 = vunpack.c.l.b16 %v2577
      %v2616 = vunpack.c.l.b16 %v2578
      %v2617 = vunpack.c.l.b16 %v2579
      %v2618 = vpack.c.b16 %v2600, %v2599
      %v2619 = vpack.c.b16 %v2602, %v2601
      %v2620 = vpack.c.b16 %v2604, %v2603
      %v2621 = vpack.c.b16 %v2606, %v2605
      %v2622 = vpack.c.b16 %v2608, %v2607
      %v2623 = vpack.c.b16 %v2610, %v2609
      %v2624 = vpack.c.b16 %v2612, %v2611
      %v2625 = vpack.c.b16 %v2614, %v2613
      %v2626 = vpack.c.b16 %v2616, %v2615
      %v2627 = vpack.c.b16 %v2617, %v2617
      %v2629 = vshrl.u32 %v2618, 16
      %v2631 = vrot.slane %v2629, 1
      %v2632 = vshll.u32 %v2618, 16
      %v2634 = vrot.slane %v2632, 2
      %v2635 = vor.u32 %v2631, %v2634
      %v2637 = vshrl.u32 %v2619, 16
      %v2639 = vrot.slane %v2637, 1
      %v2640 = vshll.u32 %v2619, 16
      %v2642 = vrot.slane %v2640, 2
      %v2643 = vor.u32 %v2639, %v2642
      %v2644 = vsel %vm1151, %v2635, %v2643
      %v2646 = vshrl.u32 %v2620, 16
      %v2648 = vrot.slane %v2646, 1
      %v2649 = vshll.u32 %v2620, 16
      %v2651 = vrot.slane %v2649, 2
      %v2652 = vor.u32 %v2648, %v2651
      %v2653 = vsel %vm1151, %v2643, %v2652
      %v2655 = vshrl.u32 %v2621, 16
      %v2657 = vrot.slane %v2655, 1
      %v2658 = vshll.u32 %v2621, 16
      %v2660 = vrot.slane %v2658, 2
      %v2661 = vor.u32 %v2657, %v2660
      %v2662 = vsel %vm1151, %v2652, %v2661
      %v2664 = vshrl.u32 %v2622, 16
      %v2666 = vrot.slane %v2664, 1
      %v2667 = vshll.u32 %v2622, 16
      %v2669 = vrot.slane %v2667, 2
      %v2670 = vor.u32 %v2666, %v2669
      %v2671 = vsel %vm1151, %v2661, %v2670
      %v2673 = vshrl.u32 %v2623, 16
      %v2675 = vrot.slane %v2673, 1
      %v2676 = vshll.u32 %v2623, 16
      %v2678 = vrot.slane %v2676, 2
      %v2679 = vor.u32 %v2675, %v2678
      %v2680 = vsel %vm1151, %v2670, %v2679
      %v2682 = vshrl.u32 %v2624, 16
      %v2684 = vrot.slane %v2682, 1
      %v2685 = vshll.u32 %v2624, 16
      %v2687 = vrot.slane %v2685, 2
      %v2688 = vor.u32 %v2684, %v2687
      %v2689 = vsel %vm1151, %v2679, %v2688
      %v2691 = vshrl.u32 %v2625, 16
      %v2693 = vrot.slane %v2691, 1
      %v2694 = vshll.u32 %v2625, 16
      %v2696 = vrot.slane %v2694, 2
      %v2697 = vor.u32 %v2693, %v2696
      %v2698 = vsel %vm1151, %v2688, %v2697
      %v2700 = vshrl.u32 %v2626, 16
      %v2702 = vrot.slane %v2700, 1
      %v2703 = vshll.u32 %v2626, 16
      %v2705 = vrot.slane %v2703, 2
      %v2706 = vor.u32 %v2702, %v2705
      %v2707 = vsel %vm1151, %v2697, %v2706
      %v2709 = vshrl.u32 %v2627, 16
      %v2711 = vrot.slane %v2709, 1
      %v2712 = vshll.u32 %v2627, 16
      %v2714 = vrot.slane %v2712, 2
      %v2715 = vor.u32 %v2711, %v2714
      %v2716 = vsel %vm1151, %v2706, %v2715
      %2717 = vrot.lane.b32.xlu0 %v2644, 64
      %v2718 = vpop.permute.xlu0 %2717
      %2719 = vrot.lane.b32.xlu0 %v2653, 64
      %v2720 = vpop.permute.xlu0 %2719
      %2721 = vrot.lane.b32.xlu0 %v2662, 64
      %v2722 = vpop.permute.xlu0 %2721
      %2723 = vrot.lane.b32.xlu0 %v2671, 64
      %v2724 = vpop.permute.xlu0 %2723
      %2725 = vrot.lane.b32.xlu0 %v2680, 64
      %v2726 = vpop.permute.xlu0 %2725
      %2727 = vrot.lane.b32.xlu0 %v2689, 64
      %v2728 = vpop.permute.xlu0 %2727
      %2729 = vrot.lane.b32.xlu0 %v2698, 64
      %v2730 = vpop.permute.xlu0 %2729
      %2731 = vrot.lane.b32.xlu0 %v2707, 64
      %v2732 = vpop.permute.xlu0 %2731
      %2733 = vrot.lane.b32.xlu0 %v2716, 64
      %v2734 = vpop.permute.xlu0 %2733
      %vm2744 = vcmask 556544
      %2745 = vst.msk [vmem:[#allocation2] sm:$0xff] %vm2744, %v2718
      %2746 = vst.msk [vmem:[#allocation2 + $0x8] sm:$0xff] %vm2744, %v2720
      %2747 = vst.msk [vmem:[#allocation2 + $0x10] sm:$0xff] %vm2744, %v2722
      %2748 = vst.msk [vmem:[#allocation2 + $0x18] sm:$0xff] %vm2744, %v2724
      %2749 = vst.msk [vmem:[#allocation2 + $0x20] sm:$0xff] %vm2744, %v2726
      %2750 = vst.msk [vmem:[#allocation2 + $0x28] sm:$0xff] %vm2744, %v2728
      %2751 = vst.msk [vmem:[#allocation2 + $0x30] sm:$0xff] %vm2744, %v2730
      %2752 = vst.msk [vmem:[#allocation2 + $0x38] sm:$0xff] %vm2744, %v2732
      %2753 = vst.msk [vmem:[#allocation2 + $0x40] sm:$0xff] %vm2744, %v2734
      %v2754 = vld [vmem:[%s247 + $0x14] sm:$0xc]
      %v2755 = vld [vmem:[%s247 + $0x18] sm:$0xf]
      %v2756 = vld [vmem:[%s247 + $0x1c] sm:$0xf]
      %v2757 = vld [vmem:[%s247 + $0x20] sm:$0xf]
      %v2758 = vld [vmem:[%s247 + $0x24] sm:$0xf]
      %v2759 = vld [vmem:[%s247 + $0x28] sm:$0xf]
      %v2760 = vld [vmem:[%s247 + $0x2c] sm:$0xf]
      %v2761 = vld [vmem:[%s247 + $0x30] sm:$0xf]
      %v2762 = vld [vmem:[%s247 + $0x34] sm:$0xf]
      %v2763 = vld [vmem:[%s247 + $0x38] sm:$0xf]
      %v2764 = vld [vmem:[%s247 + $0x3c] sm:$0xf]
      %v2765 = vld [vmem:[%s247 + $0x40] sm:$0xf]
      %v2766 = vld [vmem:[%s247 + $0x44] sm:$0xf]
      %v2767 = vld [vmem:[%s247 + $0x48] sm:$0xf]
      %v2768 = vld [vmem:[%s247 + $0x4c] sm:$0xf]
      %v2769 = vld [vmem:[%s247 + $0x50] sm:$0xf]
      %v2770 = vld [vmem:[%s247 + $0x54] sm:$0xf]
      %v2771 = vld [vmem:[%s247 + $0x58] sm:$0xf]
      %v2772 = vld [vmem:[%s247 + $0x5c] sm:$0x3]
      %v2792 = vunpack.c.l.b16 %v2754
      %v2793 = vunpack.c.l.b16 %v2755
      %v2794 = vunpack.c.l.b16 %v2756
      %v2795 = vunpack.c.l.b16 %v2757
      %v2796 = vunpack.c.l.b16 %v2758
      %v2797 = vunpack.c.l.b16 %v2759
      %v2798 = vunpack.c.l.b16 %v2760
      %v2799 = vunpack.c.l.b16 %v2761
      %v2800 = vunpack.c.l.b16 %v2762
      %v2801 = vunpack.c.l.b16 %v2763
      %v2802 = vunpack.c.l.b16 %v2764
      %v2803 = vunpack.c.l.b16 %v2765
      %v2804 = vunpack.c.l.b16 %v2766
      %v2805 = vunpack.c.l.b16 %v2767
      %v2806 = vunpack.c.l.b16 %v2768
      %v2807 = vunpack.c.l.b16 %v2769
      %v2808 = vunpack.c.l.b16 %v2770
      %v2809 = vunpack.c.l.b16 %v2771
      %v2810 = vunpack.c.l.b16 %v2772
      %v2811 = vpack.c.b16 %v2793, %v2792
      %v2812 = vpack.c.b16 %v2795, %v2794
      %v2813 = vpack.c.b16 %v2797, %v2796
      %v2814 = vpack.c.b16 %v2799, %v2798
      %v2815 = vpack.c.b16 %v2801, %v2800
      %v2816 = vpack.c.b16 %v2803, %v2802
      %v2817 = vpack.c.b16 %v2805, %v2804
      %v2818 = vpack.c.b16 %v2807, %v2806
      %v2819 = vpack.c.b16 %v2809, %v2808
      %v2820 = vpack.c.b16 %v2810, %v2810
      %v2821 = vrot.slane %v2811, 2
      %v2822 = vrot.slane %v2812, 2
      %v2823 = vsel %vm1345, %v2821, %v2822
      %v2824 = vrot.slane %v2813, 2
      %v2825 = vsel %vm1345, %v2822, %v2824
      %v2826 = vrot.slane %v2814, 2
      %v2827 = vsel %vm1345, %v2824, %v2826
      %v2828 = vrot.slane %v2815, 2
      %v2829 = vsel %vm1345, %v2826, %v2828
      %v2830 = vrot.slane %v2816, 2
      %v2831 = vsel %vm1345, %v2828, %v2830
      %v2832 = vrot.slane %v2817, 2
      %v2833 = vsel %vm1345, %v2830, %v2832
      %v2834 = vrot.slane %v2818, 2
      %v2835 = vsel %vm1345, %v2832, %v2834
      %v2836 = vrot.slane %v2819, 2
      %v2837 = vsel %vm1345, %v2834, %v2836
      %v2838 = vrot.slane %v2820, 2
      %v2839 = vsel %vm1345, %v2836, %v2838
      %2840 = vrot.lane.b32.xlu0 %v2823, 68
      %v2841 = vpop.permute.xlu0 %2840
      %2842 = vrot.lane.b32.xlu0 %v2825, 68
      %v2843 = vpop.permute.xlu0 %2842
      %2844 = vrot.lane.b32.xlu0 %v2827, 68
      %v2845 = vpop.permute.xlu0 %2844
      %2846 = vrot.lane.b32.xlu0 %v2829, 68
      %v2847 = vpop.permute.xlu0 %2846
      %2848 = vrot.lane.b32.xlu0 %v2831, 68
      %v2849 = vpop.permute.xlu0 %2848
      %2850 = vrot.lane.b32.xlu0 %v2833, 68
      %v2851 = vpop.permute.xlu0 %2850
      %2852 = vrot.lane.b32.xlu0 %v2835, 68
      %v2853 = vpop.permute.xlu0 %2852
      %2854 = vrot.lane.b32.xlu0 %v2837, 68
      %v2855 = vpop.permute.xlu0 %2854
      %2856 = vrot.lane.b32.xlu0 %v2839, 68
      %v2857 = vpop.permute.xlu0 %2856
      %vm2867 = vcmask 589344
      %2868 = vst.msk [vmem:[#allocation2] sm:$0xff] %vm2867, %v2841
      %2869 = vst.msk [vmem:[#allocation2 + $0x8] sm:$0xff] %vm2867, %v2843
      %2870 = vst.msk [vmem:[#allocation2 + $0x10] sm:$0xff] %vm2867, %v2845
      %2871 = vst.msk [vmem:[#allocation2 + $0x18] sm:$0xff] %vm2867, %v2847
      %2872 = vst.msk [vmem:[#allocation2 + $0x20] sm:$0xff] %vm2867, %v2849
      %2873 = vst.msk [vmem:[#allocation2 + $0x28] sm:$0xff] %vm2867, %v2851
      %2874 = vst.msk [vmem:[#allocation2 + $0x30] sm:$0xff] %vm2867, %v2853
      %2875 = vst.msk [vmem:[#allocation2 + $0x38] sm:$0xff] %vm2867, %v2855
      %2876 = vst.msk [vmem:[#allocation2 + $0x40] sm:$0xff] %vm2867, %v2857
      %v2877 = vld [vmem:[%s247 + $0x14] sm:$0xc]
      %v2878 = vld [vmem:[%s247 + $0x18] sm:$0xf]
      %v2879 = vld [vmem:[%s247 + $0x1c] sm:$0xf]
      %v2880 = vld [vmem:[%s247 + $0x20] sm:$0xf]
      %v2881 = vld [vmem:[%s247 + $0x24] sm:$0xf]
      %v2882 = vld [vmem:[%s247 + $0x28] sm:$0xf]
      %v2883 = vld [vmem:[%s247 + $0x2c] sm:$0xf]
      %v2884 = vld [vmem:[%s247 + $0x30] sm:$0xf]
      %v2885 = vld [vmem:[%s247 + $0x34] sm:$0xf]
      %v2886 = vld [vmem:[%s247 + $0x38] sm:$0xf]
      %v2887 = vld [vmem:[%s247 + $0x3c] sm:$0xf]
      %v2888 = vld [vmem:[%s247 + $0x40] sm:$0xf]
      %v2889 = vld [vmem:[%s247 + $0x44] sm:$0xf]
      %v2890 = vld [vmem:[%s247 + $0x48] sm:$0xf]
      %v2891 = vld [vmem:[%s247 + $0x4c] sm:$0xf]
      %v2892 = vld [vmem:[%s247 + $0x50] sm:$0xf]
      %v2893 = vld [vmem:[%s247 + $0x54] sm:$0xf]
      %v2894 = vld [vmem:[%s247 + $0x58] sm:$0xf]
      %v2895 = vld [vmem:[%s247 + $0x5c] sm:$0x7]
      %v2915 = vunpack.c.l.b16 %v2877
      %v2916 = vunpack.c.l.b16 %v2878
      %v2917 = vunpack.c.l.b16 %v2879
      %v2918 = vunpack.c.l.b16 %v2880
      %v2919 = vunpack.c.l.b16 %v2881
      %v2920 = vunpack.c.l.b16 %v2882
      %v2921 = vunpack.c.l.b16 %v2883
      %v2922 = vunpack.c.l.b16 %v2884
      %v2923 = vunpack.c.l.b16 %v2885
      %v2924 = vunpack.c.l.b16 %v2886
      %v2925 = vunpack.c.l.b16 %v2887
      %v2926 = vunpack.c.l.b16 %v2888
      %v2927 = vunpack.c.l.b16 %v2889
      %v2928 = vunpack.c.l.b16 %v2890
      %v2929 = vunpack.c.l.b16 %v2891
      %v2930 = vunpack.c.l.b16 %v2892
      %v2931 = vunpack.c.l.b16 %v2893
      %v2932 = vunpack.c.l.b16 %v2894
      %v2933 = vunpack.c.l.b16 %v2895
      %v2934 = vpack.c.b16 %v2916, %v2915
      %v2935 = vpack.c.b16 %v2918, %v2917
      %v2936 = vpack.c.b16 %v2920, %v2919
      %v2937 = vpack.c.b16 %v2922, %v2921
      %v2938 = vpack.c.b16 %v2924, %v2923
      %v2939 = vpack.c.b16 %v2926, %v2925
      %v2940 = vpack.c.b16 %v2928, %v2927
      %v2941 = vpack.c.b16 %v2930, %v2929
      %v2942 = vpack.c.b16 %v2932, %v2931
      %v2943 = vpack.c.b16 %v2933, %v2933
      %v2945 = vshrl.u32 %v2934, 16
      %v2947 = vrot.slane %v2945, 2
      %v2948 = vshll.u32 %v2934, 16
      %v2950 = vrot.slane %v2948, 3
      %v2951 = vor.u32 %v2947, %v2950
      %v2953 = vshrl.u32 %v2935, 16
      %v2955 = vrot.slane %v2953, 2
      %v2956 = vshll.u32 %v2935, 16
      %v2958 = vrot.slane %v2956, 3
      %v2959 = vor.u32 %v2955, %v2958
      %v2960 = vsel %vm1469, %v2951, %v2959
      %v2962 = vshrl.u32 %v2936, 16
      %v2964 = vrot.slane %v2962, 2
      %v2965 = vshll.u32 %v2936, 16
      %v2967 = vrot.slane %v2965, 3
      %v2968 = vor.u32 %v2964, %v2967
      %v2969 = vsel %vm1469, %v2959, %v2968
      %v2971 = vshrl.u32 %v2937, 16
      %v2973 = vrot.slane %v2971, 2
      %v2974 = vshll.u32 %v2937, 16
      %v2976 = vrot.slane %v2974, 3
      %v2977 = vor.u32 %v2973, %v2976
      %v2978 = vsel %vm1469, %v2968, %v2977
      %v2980 = vshrl.u32 %v2938, 16
      %v2982 = vrot.slane %v2980, 2
      %v2983 = vshll.u32 %v2938, 16
      %v2985 = vrot.slane %v2983, 3
      %v2986 = vor.u32 %v2982, %v2985
      %v2987 = vsel %vm1469, %v2977, %v2986
      %v2989 = vshrl.u32 %v2939, 16
      %v2991 = vrot.slane %v2989, 2
      %v2992 = vshll.u32 %v2939, 16
      %v2994 = vrot.slane %v2992, 3
      %v2995 = vor.u32 %v2991, %v2994
      %v2996 = vsel %vm1469, %v2986, %v2995
      %v2998 = vshrl.u32 %v2940, 16
      %v3000 = vrot.slane %v2998, 2
      %v3001 = vshll.u32 %v2940, 16
      %v3003 = vrot.slane %v3001, 3
      %v3004 = vor.u32 %v3000, %v3003
      %v3005 = vsel %vm1469, %v2995, %v3004
      %v3007 = vshrl.u32 %v2941, 16
      %v3009 = vrot.slane %v3007, 2
      %v3010 = vshll.u32 %v2941, 16
      %v3012 = vrot.slane %v3010, 3
      %v3013 = vor.u32 %v3009, %v3012
      %v3014 = vsel %vm1469, %v3004, %v3013
      %v3016 = vshrl.u32 %v2942, 16
      %v3018 = vrot.slane %v3016, 2
      %v3019 = vshll.u32 %v2942, 16
      %v3021 = vrot.slane %v3019, 3
      %v3022 = vor.u32 %v3018, %v3021
      %v3023 = vsel %vm1469, %v3013, %v3022
      %v3025 = vshrl.u32 %v2943, 16
      %v3027 = vrot.slane %v3025, 2
      %v3028 = vshll.u32 %v2943, 16
      %v3030 = vrot.slane %v3028, 3
      %v3031 = vor.u32 %v3027, %v3030
      %v3032 = vsel %vm1469, %v3022, %v3031
      %3033 = vrot.lane.b32.xlu0 %v2960, 72
      %v3034 = vpop.permute.xlu0 %3033
      %3035 = vrot.lane.b32.xlu0 %v2969, 72
      %v3036 = vpop.permute.xlu0 %3035
      %3037 = vrot.lane.b32.xlu0 %v2978, 72
      %v3038 = vpop.permute.xlu0 %3037
      %3039 = vrot.lane.b32.xlu0 %v2987, 72
      %v3040 = vpop.permute.xlu0 %3039
      %3041 = vrot.lane.b32.xlu0 %v2996, 72
      %v3042 = vpop.permute.xlu0 %3041
      %3043 = vrot.lane.b32.xlu0 %v3005, 72
      %v3044 = vpop.permute.xlu0 %3043
      %3045 = vrot.lane.b32.xlu0 %v3014, 72
      %v3046 = vpop.permute.xlu0 %3045
      %3047 = vrot.lane.b32.xlu0 %v3023, 72
      %v3048 = vpop.permute.xlu0 %3047
      %3049 = vrot.lane.b32.xlu0 %v3032, 72
      %v3050 = vpop.permute.xlu0 %3049
      %vm3060 = vcmask 622144
      %3061 = vst.msk [vmem:[#allocation2] sm:$0xff] %vm3060, %v3034
      %3062 = vst.msk [vmem:[#allocation2 + $0x8] sm:$0xff] %vm3060, %v3036
      %3063 = vst.msk [vmem:[#allocation2 + $0x10] sm:$0xff] %vm3060, %v3038
      %3064 = vst.msk [vmem:[#allocation2 + $0x18] sm:$0xff] %vm3060, %v3040
      %3065 = vst.msk [vmem:[#allocation2 + $0x20] sm:$0xff] %vm3060, %v3042
      %3066 = vst.msk [vmem:[#allocation2 + $0x28] sm:$0xff] %vm3060, %v3044
      %3067 = vst.msk [vmem:[#allocation2 + $0x30] sm:$0xff] %vm3060, %v3046
      %3068 = vst.msk [vmem:[#allocation2 + $0x38] sm:$0xff] %vm3060, %v3048
      %3069 = vst.msk [vmem:[#allocation2 + $0x40] sm:$0xff] %vm3060, %v3050
      %v3070 = vld [vmem:[%s247 + $0x14] sm:$0x8]
      %v3071 = vld [vmem:[%s247 + $0x18] sm:$0xf]
      %v3072 = vld [vmem:[%s247 + $0x1c] sm:$0xf]
      %v3073 = vld [vmem:[%s247 + $0x20] sm:$0xf]
      %v3074 = vld [vmem:[%s247 + $0x24] sm:$0xf]
      %v3075 = vld [vmem:[%s247 + $0x28] sm:$0xf]
      %v3076 = vld [vmem:[%s247 + $0x2c] sm:$0xf]
      %v3077 = vld [vmem:[%s247 + $0x30] sm:$0xf]
      %v3078 = vld [vmem:[%s247 + $0x34] sm:$0xf]
      %v3079 = vld [vmem:[%s247 + $0x38] sm:$0xf]
      %v3080 = vld [vmem:[%s247 + $0x3c] sm:$0xf]
      %v3081 = vld [vmem:[%s247 + $0x40] sm:$0xf]
      %v3082 = vld [vmem:[%s247 + $0x44] sm:$0xf]
      %v3083 = vld [vmem:[%s247 + $0x48] sm:$0xf]
      %v3084 = vld [vmem:[%s247 + $0x4c] sm:$0xf]
      %v3085 = vld [vmem:[%s247 + $0x50] sm:$0xf]
      %v3086 = vld [vmem:[%s247 + $0x54] sm:$0xf]
      %v3087 = vld [vmem:[%s247 + $0x58] sm:$0xf]
      %v3088 = vld [vmem:[%s247 + $0x5c] sm:$0x7]
      %v3108 = vunpack.c.l.b16 %v3070
      %v3109 = vunpack.c.l.b16 %v3071
      %v3110 = vunpack.c.l.b16 %v3072
      %v3111 = vunpack.c.l.b16 %v3073
      %v3112 = vunpack.c.l.b16 %v3074
      %v3113 = vunpack.c.l.b16 %v3075
      %v3114 = vunpack.c.l.b16 %v3076
      %v3115 = vunpack.c.l.b16 %v3077
      %v3116 = vunpack.c.l.b16 %v3078
      %v3117 = vunpack.c.l.b16 %v3079
      %v3118 = vunpack.c.l.b16 %v3080
      %v3119 = vunpack.c.l.b16 %v3081
      %v3120 = vunpack.c.l.b16 %v3082
      %v3121 = vunpack.c.l.b16 %v3083
      %v3122 = vunpack.c.l.b16 %v3084
      %v3123 = vunpack.c.l.b16 %v3085
      %v3124 = vunpack.c.l.b16 %v3086
      %v3125 = vunpack.c.l.b16 %v3087
      %v3126 = vunpack.c.l.b16 %v3088
      %v3127 = vpack.c.b16 %v3109, %v3108
      %v3128 = vpack.c.b16 %v3111, %v3110
      %v3129 = vpack.c.b16 %v3113, %v3112
      %v3130 = vpack.c.b16 %v3115, %v3114
      %v3131 = vpack.c.b16 %v3117, %v3116
      %v3132 = vpack.c.b16 %v3119, %v3118
      %v3133 = vpack.c.b16 %v3121, %v3120
      %v3134 = vpack.c.b16 %v3123, %v3122
      %v3135 = vpack.c.b16 %v3125, %v3124
      %v3136 = vpack.c.b16 %v3126, %v3126
      %v3137 = vrot.slane %v3127, 3
      %v3138 = vrot.slane %v3128, 3
      %v3139 = vsel %vm323, %v3137, %v3138
      %v3140 = vrot.slane %v3129, 3
      %v3141 = vsel %vm323, %v3138, %v3140
      %v3142 = vrot.slane %v3130, 3
      %v3143 = vsel %vm323, %v3140, %v3142
      %v3144 = vrot.slane %v3131, 3
      %v3145 = vsel %vm323, %v3142, %v3144
      %v3146 = vrot.slane %v3132, 3
      %v3147 = vsel %vm323, %v3144, %v3146
      %v3148 = vrot.slane %v3133, 3
      %v3149 = vsel %vm323, %v3146, %v3148
      %v3150 = vrot.slane %v3134, 3
      %v3151 = vsel %vm323, %v3148, %v3150
      %v3152 = vrot.slane %v3135, 3
      %v3153 = vsel %vm323, %v3150, %v3152
      %v3154 = vrot.slane %v3136, 3
      %v3155 = vsel %vm323, %v3152, %v3154
      %3156 = vrot.lane.b32.xlu0 %v3139, 76
      %v3157 = vpop.permute.xlu0 %3156
      %3158 = vrot.lane.b32.xlu0 %v3141, 76
      %v3159 = vpop.permute.xlu0 %3158
      %3160 = vrot.lane.b32.xlu0 %v3143, 76
      %v3161 = vpop.permute.xlu0 %3160
      %3162 = vrot.lane.b32.xlu0 %v3145, 76
      %v3163 = vpop.permute.xlu0 %3162
      %3164 = vrot.lane.b32.xlu0 %v3147, 76
      %v3165 = vpop.permute.xlu0 %3164
      %3166 = vrot.lane.b32.xlu0 %v3149, 76
      %v3167 = vpop.permute.xlu0 %3166
      %3168 = vrot.lane.b32.xlu0 %v3151, 76
      %v3169 = vpop.permute.xlu0 %3168
      %3170 = vrot.lane.b32.xlu0 %v3153, 76
      %v3171 = vpop.permute.xlu0 %3170
      %3172 = vrot.lane.b32.xlu0 %v3155, 76
      %v3173 = vpop.permute.xlu0 %3172
      %vm3183 = vcmask 654944
      %3184 = vst.msk [vmem:[#allocation2] sm:$0xff] %vm3183, %v3157
      %3185 = vst.msk [vmem:[#allocation2 + $0x8] sm:$0xff] %vm3183, %v3159
      %3186 = vst.msk [vmem:[#allocation2 + $0x10] sm:$0xff] %vm3183, %v3161
      %3187 = vst.msk [vmem:[#allocation2 + $0x18] sm:$0xff] %vm3183, %v3163
      %3188 = vst.msk [vmem:[#allocation2 + $0x20] sm:$0xff] %vm3183, %v3165
      %3189 = vst.msk [vmem:[#allocation2 + $0x28] sm:$0xff] %vm3183, %v3167
      %3190 = vst.msk [vmem:[#allocation2 + $0x30] sm:$0xff] %vm3183, %v3169
      %3191 = vst.msk [vmem:[#allocation2 + $0x38] sm:$0xff] %vm3183, %v3171
      %3192 = vst.msk [vmem:[#allocation2 + $0x40] sm:$0xff] %vm3183, %v3173
      %v3193 = vld [vmem:[%s247 + $0x18] sm:$0x8]
      %v3194 = vld [vmem:[%s247 + $0x1c] sm:$0xf]
      %v3195 = vld [vmem:[%s247 + $0x20] sm:$0xf]
      %v3196 = vld [vmem:[%s247 + $0x24] sm:$0xf]
      %v3197 = vld [vmem:[%s247 + $0x28] sm:$0xf]
      %v3198 = vld [vmem:[%s247 + $0x2c] sm:$0xf]
      %v3199 = vld [vmem:[%s247 + $0x30] sm:$0xf]
      %v3200 = vld [vmem:[%s247 + $0x34] sm:$0xf]
      %v3201 = vld [vmem:[%s247 + $0x38] sm:$0xf]
      %v3202 = vld [vmem:[%s247 + $0x3c] sm:$0xf]
      %v3203 = vld [vmem:[%s247 + $0x40] sm:$0xf]
      %v3204 = vld [vmem:[%s247 + $0x44] sm:$0xf]
      %v3205 = vld [vmem:[%s247 + $0x48] sm:$0xf]
      %v3206 = vld [vmem:[%s247 + $0x4c] sm:$0xf]
      %v3207 = vld [vmem:[%s247 + $0x50] sm:$0xf]
      %v3208 = vld [vmem:[%s247 + $0x54] sm:$0xf]
      %v3209 = vld [vmem:[%s247 + $0x58] sm:$0xf]
      %v3210 = vld [vmem:[%s247 + $0x5c] sm:$0xf]
      %v3211 = vld [vmem:[%s247 + $0x60] sm:$0x7]
      %v3231 = vunpack.c.l.b16 %v3193
      %v3232 = vunpack.c.l.b16 %v3194
      %v3233 = vunpack.c.l.b16 %v3195
      %v3234 = vunpack.c.l.b16 %v3196
      %v3235 = vunpack.c.l.b16 %v3197
      %v3236 = vunpack.c.l.b16 %v3198
      %v3237 = vunpack.c.l.b16 %v3199
      %v3238 = vunpack.c.l.b16 %v3200
      %v3239 = vunpack.c.l.b16 %v3201
      %v3240 = vunpack.c.l.b16 %v3202
      %v3241 = vunpack.c.l.b16 %v3203
      %v3242 = vunpack.c.l.b16 %v3204
      %v3243 = vunpack.c.l.b16 %v3205
      %v3244 = vunpack.c.l.b16 %v3206
      %v3245 = vunpack.c.l.b16 %v3207
      %v3246 = vunpack.c.l.b16 %v3208
      %v3247 = vunpack.c.l.b16 %v3209
      %v3248 = vunpack.c.l.b16 %v3210
      %v3249 = vunpack.c.l.b16 %v3211
      %v3250 = vpack.c.b16 %v3232, %v3231
      %v3251 = vpack.c.b16 %v3234, %v3233
      %v3252 = vpack.c.b16 %v3236, %v3235
      %v3253 = vpack.c.b16 %v3238, %v3237
      %v3254 = vpack.c.b16 %v3240, %v3239
      %v3255 = vpack.c.b16 %v3242, %v3241
      %v3256 = vpack.c.b16 %v3244, %v3243
      %v3257 = vpack.c.b16 %v3246, %v3245
      %v3258 = vpack.c.b16 %v3248, %v3247
      %v3259 = vpack.c.b16 %v3249, %v3249
      %v3260 = vrot.slane %v3250, 3
      %v3261 = vrot.slane %v3251, 3
      %v3262 = vsel %vm323, %v3260, %v3261
      %v3263 = vrot.slane %v3252, 3
      %v3264 = vsel %vm323, %v3261, %v3263
      %v3265 = vrot.slane %v3253, 3
      %v3266 = vsel %vm323, %v3263, %v3265
      %v3267 = vrot.slane %v3254, 3
      %v3268 = vsel %vm323, %v3265, %v3267
      %v3269 = vrot.slane %v3255, 3
      %v3270 = vsel %vm323, %v3267, %v3269
      %v3271 = vrot.slane %v3256, 3
      %v3272 = vsel %vm323, %v3269, %v3271
      %v3273 = vrot.slane %v3257, 3
      %v3274 = vsel %vm323, %v3271, %v3273
      %v3275 = vrot.slane %v3258, 3
      %v3276 = vsel %vm323, %v3273, %v3275
      %v3277 = vrot.slane %v3259, 3
      %v3278 = vsel %vm323, %v3275, %v3277
      %3279 = vrot.lane.b32.xlu0 %v3262, 80
      %v3280 = vpop.permute.xlu0 %3279
      %3281 = vrot.lane.b32.xlu0 %v3264, 80
      %v3282 = vpop.permute.xlu0 %3281
      %3283 = vrot.lane.b32.xlu0 %v3266, 80
      %v3284 = vpop.permute.xlu0 %3283
      %3285 = vrot.lane.b32.xlu0 %v3268, 80
      %v3286 = vpop.permute.xlu0 %3285
      %3287 = vrot.lane.b32.xlu0 %v3270, 80
      %v3288 = vpop.permute.xlu0 %3287
      %3289 = vrot.lane.b32.xlu0 %v3272, 80
      %v3290 = vpop.permute.xlu0 %3289
      %3291 = vrot.lane.b32.xlu0 %v3274, 80
      %v3292 = vpop.permute.xlu0 %3291
      %3293 = vrot.lane.b32.xlu0 %v3276, 80
      %v3294 = vpop.permute.xlu0 %3293
      %3295 = vrot.lane.b32.xlu0 %v3278, 80
      %v3296 = vpop.permute.xlu0 %3295
      %vm3306 = vcmask 687744
      %3307 = vst.msk [vmem:[#allocation2] sm:$0xff] %vm3306, %v3280
      %3308 = vst.msk [vmem:[#allocation2 + $0x8] sm:$0xff] %vm3306, %v3282
      %3309 = vst.msk [vmem:[#allocation2 + $0x10] sm:$0xff] %vm3306, %v3284
      %3310 = vst.msk [vmem:[#allocation2 + $0x18] sm:$0xff] %vm3306, %v3286
      %3311 = vst.msk [vmem:[#allocation2 + $0x20] sm:$0xff] %vm3306, %v3288
      %3312 = vst.msk [vmem:[#allocation2 + $0x28] sm:$0xff] %vm3306, %v3290
      %3313 = vst.msk [vmem:[#allocation2 + $0x30] sm:$0xff] %vm3306, %v3292
      %3314 = vst.msk [vmem:[#allocation2 + $0x38] sm:$0xff] %vm3306, %v3294
      %3315 = vst.msk [vmem:[#allocation2 + $0x40] sm:$0xff] %vm3306, %v3296
      %v3316 = vld [vmem:[%s247 + $0x18] sm:$0x8]
      %v3317 = vld [vmem:[%s247 + $0x1c] sm:$0xf]
      %v3318 = vld [vmem:[%s247 + $0x20] sm:$0xf]
      %v3319 = vld [vmem:[%s247 + $0x24] sm:$0xf]
      %v3320 = vld [vmem:[%s247 + $0x28] sm:$0xf]
      %v3321 = vld [vmem:[%s247 + $0x2c] sm:$0xf]
      %v3322 = vld [vmem:[%s247 + $0x30] sm:$0xf]
      %v3323 = vld [vmem:[%s247 + $0x34] sm:$0xf]
      %v3324 = vld [vmem:[%s247 + $0x38] sm:$0xf]
      %v3325 = vld [vmem:[%s247 + $0x3c] sm:$0xf]
      %v3326 = vld [vmem:[%s247 + $0x40] sm:$0xf]
      %v3327 = vld [vmem:[%s247 + $0x44] sm:$0xf]
      %v3328 = vld [vmem:[%s247 + $0x48] sm:$0xf]
      %v3329 = vld [vmem:[%s247 + $0x4c] sm:$0xf]
      %v3330 = vld [vmem:[%s247 + $0x50] sm:$0xf]
      %v3331 = vld [vmem:[%s247 + $0x54] sm:$0xf]
      %v3332 = vld [vmem:[%s247 + $0x58] sm:$0xf]
      %v3333 = vld [vmem:[%s247 + $0x5c] sm:$0xf]
      %v3334 = vld [vmem:[%s247 + $0x60] sm:$0xf]
      %v3354 = vunpack.c.l.b16 %v3316
      %v3355 = vunpack.c.l.b16 %v3317
      %v3356 = vunpack.c.l.b16 %v3318
      %v3357 = vunpack.c.l.b16 %v3319
      %v3358 = vunpack.c.l.b16 %v3320
      %v3359 = vunpack.c.l.b16 %v3321
      %v3360 = vunpack.c.l.b16 %v3322
      %v3361 = vunpack.c.l.b16 %v3323
      %v3362 = vunpack.c.l.b16 %v3324
      %v3363 = vunpack.c.l.b16 %v3325
      %v3364 = vunpack.c.l.b16 %v3326
      %v3365 = vunpack.c.l.b16 %v3327
      %v3366 = vunpack.c.l.b16 %v3328
      %v3367 = vunpack.c.l.b16 %v3329
      %v3368 = vunpack.c.l.b16 %v3330
      %v3369 = vunpack.c.l.b16 %v3331
      %v3370 = vunpack.c.l.b16 %v3332
      %v3371 = vunpack.c.l.b16 %v3333
      %v3372 = vunpack.c.l.b16 %v3334
      %v3373 = vpack.c.b16 %v3355, %v3354
      %v3374 = vpack.c.b16 %v3357, %v3356
      %v3375 = vpack.c.b16 %v3359, %v3358
      %v3376 = vpack.c.b16 %v3361, %v3360
      %v3377 = vpack.c.b16 %v3363, %v3362
      %v3378 = vpack.c.b16 %v3365, %v3364
      %v3379 = vpack.c.b16 %v3367, %v3366
      %v3380 = vpack.c.b16 %v3369, %v3368
      %v3381 = vpack.c.b16 %v3371, %v3370
      %v3382 = vpack.c.b16 %v3372, %v3372
      %v3384 = vshrl.u32 %v3373, 16
      %v3386 = vrot.slane %v3384, 3
      %v3387 = vshll.u32 %v3373, 16
      %v3389 = vrot.slane %v3387, 4
      %v3390 = vor.u32 %v3386, %v3389
      %v3392 = vshrl.u32 %v3374, 16
      %v3394 = vrot.slane %v3392, 3
      %v3395 = vshll.u32 %v3374, 16
      %v3397 = vrot.slane %v3395, 4
      %v3398 = vor.u32 %v3394, %v3397
      %v3399 = vsel %vm429, %v3390, %v3398
      %v3401 = vshrl.u32 %v3375, 16
      %v3403 = vrot.slane %v3401, 3
      %v3404 = vshll.u32 %v3375, 16
      %v3406 = vrot.slane %v3404, 4
      %v3407 = vor.u32 %v3403, %v3406
      %v3408 = vsel %vm429, %v3398, %v3407
      %v3410 = vshrl.u32 %v3376, 16
      %v3412 = vrot.slane %v3410, 3
      %v3413 = vshll.u32 %v3376, 16
      %v3415 = vrot.slane %v3413, 4
      %v3416 = vor.u32 %v3412, %v3415
      %v3417 = vsel %vm429, %v3407, %v3416
      %v3419 = vshrl.u32 %v3377, 16
      %v3421 = vrot.slane %v3419, 3
      %v3422 = vshll.u32 %v3377, 16
      %v3424 = vrot.slane %v3422, 4
      %v3425 = vor.u32 %v3421, %v3424
      %v3426 = vsel %vm429, %v3416, %v3425
      %v3428 = vshrl.u32 %v3378, 16
      %v3430 = vrot.slane %v3428, 3
      %v3431 = vshll.u32 %v3378, 16
      %v3433 = vrot.slane %v3431, 4
      %v3434 = vor.u32 %v3430, %v3433
      %v3435 = vsel %vm429, %v3425, %v3434
      %v3437 = vshrl.u32 %v3379, 16
      %v3439 = vrot.slane %v3437, 3
      %v3440 = vshll.u32 %v3379, 16
      %v3442 = vrot.slane %v3440, 4
      %v3443 = vor.u32 %v3439, %v3442
      %v3444 = vsel %vm429, %v3434, %v3443
      %v3446 = vshrl.u32 %v3380, 16
      %v3448 = vrot.slane %v3446, 3
      %v3449 = vshll.u32 %v3380, 16
      %v3451 = vrot.slane %v3449, 4
      %v3452 = vor.u32 %v3448, %v3451
      %v3453 = vsel %vm429, %v3443, %v3452
      %v3455 = vshrl.u32 %v3381, 16
      %v3457 = vrot.slane %v3455, 3
      %v3458 = vshll.u32 %v3381, 16
      %v3460 = vrot.slane %v3458, 4
      %v3461 = vor.u32 %v3457, %v3460
      %v3462 = vsel %vm429, %v3452, %v3461
      %v3464 = vshrl.u32 %v3382, 16
      %v3466 = vrot.slane %v3464, 3
      %v3467 = vshll.u32 %v3382, 16
      %v3469 = vrot.slane %v3467, 4
      %v3470 = vor.u32 %v3466, %v3469
      %v3471 = vsel %vm429, %v3461, %v3470
      %3472 = vrot.lane.b32.xlu0 %v3399, 84
      %v3473 = vpop.permute.xlu0 %3472
      %3474 = vrot.lane.b32.xlu0 %v3408, 84
      %v3475 = vpop.permute.xlu0 %3474
      %3476 = vrot.lane.b32.xlu0 %v3417, 84
      %v3477 = vpop.permute.xlu0 %3476
      %3478 = vrot.lane.b32.xlu0 %v3426, 84
      %v3479 = vpop.permute.xlu0 %3478
      %3480 = vrot.lane.b32.xlu0 %v3435, 84
      %v3481 = vpop.permute.xlu0 %3480
      %3482 = vrot.lane.b32.xlu0 %v3444, 84
      %v3483 = vpop.permute.xlu0 %3482
      %3484 = vrot.lane.b32.xlu0 %v3453, 84
      %v3485 = vpop.permute.xlu0 %3484
      %3486 = vrot.lane.b32.xlu0 %v3462, 84
      %v3487 = vpop.permute.xlu0 %3486
      %3488 = vrot.lane.b32.xlu0 %v3471, 84
      %v3489 = vpop.permute.xlu0 %3488
      %vm3499 = vcmask 720544
      %3500 = vst.msk [vmem:[#allocation2] sm:$0xff] %vm3499, %v3473
      %3501 = vst.msk [vmem:[#allocation2 + $0x8] sm:$0xff] %vm3499, %v3475
      %3502 = vst.msk [vmem:[#allocation2 + $0x10] sm:$0xff] %vm3499, %v3477
      %3503 = vst.msk [vmem:[#allocation2 + $0x18] sm:$0xff] %vm3499, %v3479
      %3504 = vst.msk [vmem:[#allocation2 + $0x20] sm:$0xff] %vm3499, %v3481
      %3505 = vst.msk [vmem:[#allocation2 + $0x28] sm:$0xff] %vm3499, %v3483
      %3506 = vst.msk [vmem:[#allocation2 + $0x30] sm:$0xff] %vm3499, %v3485
      %3507 = vst.msk [vmem:[#allocation2 + $0x38] sm:$0xff] %vm3499, %v3487
      %3508 = vst.msk [vmem:[#allocation2 + $0x40] sm:$0xff] %vm3499, %v3489
      %v3509 = vld [vmem:[%s247 + $0x1c] sm:$0xf]
      %v3510 = vld [vmem:[%s247 + $0x20] sm:$0xf]
      %v3511 = vld [vmem:[%s247 + $0x24] sm:$0xf]
      %v3512 = vld [vmem:[%s247 + $0x28] sm:$0xf]
      %v3513 = vld [vmem:[%s247 + $0x2c] sm:$0xf]
      %v3514 = vld [vmem:[%s247 + $0x30] sm:$0xf]
      %v3515 = vld [vmem:[%s247 + $0x34] sm:$0xf]
      %v3516 = vld [vmem:[%s247 + $0x38] sm:$0xf]
      %v3517 = vld [vmem:[%s247 + $0x3c] sm:$0xf]
      %v3518 = vld [vmem:[%s247 + $0x40] sm:$0xf]
      %v3519 = vld [vmem:[%s247 + $0x44] sm:$0xf]
      %v3520 = vld [vmem:[%s247 + $0x48] sm:$0xf]
      %v3521 = vld [vmem:[%s247 + $0x4c] sm:$0xf]
      %v3522 = vld [vmem:[%s247 + $0x50] sm:$0xf]
      %v3523 = vld [vmem:[%s247 + $0x54] sm:$0xf]
      %v3524 = vld [vmem:[%s247 + $0x58] sm:$0xf]
      %v3525 = vld [vmem:[%s247 + $0x5c] sm:$0xf]
      %v3526 = vld [vmem:[%s247 + $0x60] sm:$0xf]
      %v3545 = vunpack.c.l.b16 %v3509
      %v3546 = vunpack.c.l.b16 %v3510
      %v3547 = vunpack.c.l.b16 %v3511
      %v3548 = vunpack.c.l.b16 %v3512
      %v3549 = vunpack.c.l.b16 %v3513
      %v3550 = vunpack.c.l.b16 %v3514
      %v3551 = vunpack.c.l.b16 %v3515
      %v3552 = vunpack.c.l.b16 %v3516
      %v3553 = vunpack.c.l.b16 %v3517
      %v3554 = vunpack.c.l.b16 %v3518
      %v3555 = vunpack.c.l.b16 %v3519
      %v3556 = vunpack.c.l.b16 %v3520
      %v3557 = vunpack.c.l.b16 %v3521
      %v3558 = vunpack.c.l.b16 %v3522
      %v3559 = vunpack.c.l.b16 %v3523
      %v3560 = vunpack.c.l.b16 %v3524
      %v3561 = vunpack.c.l.b16 %v3525
      %v3562 = vunpack.c.l.b16 %v3526
      %v3563 = vpack.c.b16 %v3546, %v3545
      %v3564 = vpack.c.b16 %v3548, %v3547
      %v3565 = vpack.c.b16 %v3550, %v3549
      %v3566 = vpack.c.b16 %v3552, %v3551
      %v3567 = vpack.c.b16 %v3554, %v3553
      %v3568 = vpack.c.b16 %v3556, %v3555
      %v3569 = vpack.c.b16 %v3558, %v3557
      %v3570 = vpack.c.b16 %v3560, %v3559
      %v3571 = vpack.c.b16 %v3562, %v3561
      %3572 = vrot.lane.b32.xlu0 %v3563, 88
      %v3573 = vpop.permute.xlu0 %3572
      %3574 = vrot.lane.b32.xlu0 %v3564, 88
      %v3575 = vpop.permute.xlu0 %3574
      %3576 = vrot.lane.b32.xlu0 %v3565, 88
      %v3577 = vpop.permute.xlu0 %3576
      %3578 = vrot.lane.b32.xlu0 %v3566, 88
      %v3579 = vpop.permute.xlu0 %3578
      %3580 = vrot.lane.b32.xlu0 %v3567, 88
      %v3581 = vpop.permute.xlu0 %3580
      %3582 = vrot.lane.b32.xlu0 %v3568, 88
      %v3583 = vpop.permute.xlu0 %3582
      %3584 = vrot.lane.b32.xlu0 %v3569, 88
      %v3585 = vpop.permute.xlu0 %3584
      %3586 = vrot.lane.b32.xlu0 %v3570, 88
      %v3587 = vpop.permute.xlu0 %3586
      %3588 = vrot.lane.b32.xlu0 %v3571, 88
      %v3589 = vpop.permute.xlu0 %3588
      %vm3599 = vcmask 753344
      %3600 = vst.msk [vmem:[#allocation2] sm:$0xff] %vm3599, %v3573
      %3601 = vst.msk [vmem:[#allocation2 + $0x8] sm:$0xff] %vm3599, %v3575
      %3602 = vst.msk [vmem:[#allocation2 + $0x10] sm:$0xff] %vm3599, %v3577
      %3603 = vst.msk [vmem:[#allocation2 + $0x18] sm:$0xff] %vm3599, %v3579
      %3604 = vst.msk [vmem:[#allocation2 + $0x20] sm:$0xff] %vm3599, %v3581
      %3605 = vst.msk [vmem:[#allocation2 + $0x28] sm:$0xff] %vm3599, %v3583
      %3606 = vst.msk [vmem:[#allocation2 + $0x30] sm:$0xff] %vm3599, %v3585
      %3607 = vst.msk [vmem:[#allocation2 + $0x38] sm:$0xff] %vm3599, %v3587
      %3608 = vst.msk [vmem:[#allocation2 + $0x40] sm:$0xff] %vm3599, %v3589
      %v3609 = vld [vmem:[%s247 + $0x1c] sm:$0xf]
      %v3610 = vld [vmem:[%s247 + $0x20] sm:$0xf]
      %v3611 = vld [vmem:[%s247 + $0x24] sm:$0xf]
      %v3612 = vld [vmem:[%s247 + $0x28] sm:$0xf]
      %v3613 = vld [vmem:[%s247 + $0x2c] sm:$0xf]
      %v3614 = vld [vmem:[%s247 + $0x30] sm:$0xf]
      %v3615 = vld [vmem:[%s247 + $0x34] sm:$0xf]
      %v3616 = vld [vmem:[%s247 + $0x38] sm:$0xf]
      %v3617 = vld [vmem:[%s247 + $0x3c] sm:$0xf]
      %v3618 = vld [vmem:[%s247 + $0x40] sm:$0xf]
      %v3619 = vld [vmem:[%s247 + $0x44] sm:$0xf]
      %v3620 = vld [vmem:[%s247 + $0x48] sm:$0xf]
      %v3621 = vld [vmem:[%s247 + $0x4c] sm:$0xf]
      %v3622 = vld [vmem:[%s247 + $0x50] sm:$0xf]
      %v3623 = vld [vmem:[%s247 + $0x54] sm:$0xf]
      %v3624 = vld [vmem:[%s247 + $0x58] sm:$0xf]
      %v3625 = vld [vmem:[%s247 + $0x5c] sm:$0xf]
      %v3626 = vld [vmem:[%s247 + $0x60] sm:$0xf]
      %v3627 = vld [vmem:[%s247 + $0x64] sm:$0x1]
      %v3647 = vunpack.c.l.b16 %v3609
      %v3648 = vunpack.c.l.b16 %v3610
      %v3649 = vunpack.c.l.b16 %v3611
      %v3650 = vunpack.c.l.b16 %v3612
      %v3651 = vunpack.c.l.b16 %v3613
      %v3652 = vunpack.c.l.b16 %v3614
      %v3653 = vunpack.c.l.b16 %v3615
      %v3654 = vunpack.c.l.b16 %v3616
      %v3655 = vunpack.c.l.b16 %v3617
      %v3656 = vunpack.c.l.b16 %v3618
      %v3657 = vunpack.c.l.b16 %v3619
      %v3658 = vunpack.c.l.b16 %v3620
      %v3659 = vunpack.c.l.b16 %v3621
      %v3660 = vunpack.c.l.b16 %v3622
      %v3661 = vunpack.c.l.b16 %v3623
      %v3662 = vunpack.c.l.b16 %v3624
      %v3663 = vunpack.c.l.b16 %v3625
      %v3664 = vunpack.c.l.b16 %v3626
      %v3665 = vunpack.c.l.b16 %v3627
      %v3666 = vpack.c.b16 %v3648, %v3647
      %v3667 = vpack.c.b16 %v3650, %v3649
      %v3668 = vpack.c.b16 %v3652, %v3651
      %v3669 = vpack.c.b16 %v3654, %v3653
      %v3670 = vpack.c.b16 %v3656, %v3655
      %v3671 = vpack.c.b16 %v3658, %v3657
      %v3672 = vpack.c.b16 %v3660, %v3659
      %v3673 = vpack.c.b16 %v3662, %v3661
      %v3674 = vpack.c.b16 %v3664, %v3663
      %v3675 = vpack.c.b16 %v3665, %v3665
      %v3677 = vshrl.u32 %v3666, 16
      %v3679 = vshll.u32 %v3666, 16
      %v3681 = vrot.slane %v3679, 1
      %v3682 = vor.u32 %v3677, %v3681
      %v3684 = vshll.u32 %v3667, 16
      %v3686 = vrot.slane %v3684, 1
      %v3687 = vsel %vm723, %v3682, %v3686
      %v3688 = vshrl.u32 %v3667, 16
      %v3690 = vor.u32 %v3688, %v3686
      %v3692 = vshll.u32 %v3668, 16
      %v3694 = vrot.slane %v3692, 1
      %v3695 = vsel %vm723, %v3690, %v3694
      %v3696 = vshrl.u32 %v3668, 16
      %v3698 = vor.u32 %v3696, %v3694
      %v3700 = vshll.u32 %v3669, 16
      %v3702 = vrot.slane %v3700, 1
      %v3703 = vsel %vm723, %v3698, %v3702
      %v3704 = vshrl.u32 %v3669, 16
      %v3706 = vor.u32 %v3704, %v3702
      %v3708 = vshll.u32 %v3670, 16
      %v3710 = vrot.slane %v3708, 1
      %v3711 = vsel %vm723, %v3706, %v3710
      %v3712 = vshrl.u32 %v3670, 16
      %v3714 = vor.u32 %v3712, %v3710
      %v3716 = vshll.u32 %v3671, 16
      %v3718 = vrot.slane %v3716, 1
      %v3719 = vsel %vm723, %v3714, %v3718
      %v3720 = vshrl.u32 %v3671, 16
      %v3722 = vor.u32 %v3720, %v3718
      %v3724 = vshll.u32 %v3672, 16
      %v3726 = vrot.slane %v3724, 1
      %v3727 = vsel %vm723, %v3722, %v3726
      %v3728 = vshrl.u32 %v3672, 16
      %v3730 = vor.u32 %v3728, %v3726
      %v3732 = vshll.u32 %v3673, 16
      %v3734 = vrot.slane %v3732, 1
      %v3735 = vsel %vm723, %v3730, %v3734
      %v3736 = vshrl.u32 %v3673, 16
      %v3738 = vor.u32 %v3736, %v3734
      %v3740 = vshll.u32 %v3674, 16
      %v3742 = vrot.slane %v3740, 1
      %v3743 = vsel %vm723, %v3738, %v3742
      %v3744 = vshrl.u32 %v3674, 16
      %v3746 = vor.u32 %v3744, %v3742
      %v3748 = vshll.u32 %v3675, 16
      %v3750 = vrot.slane %v3748, 1
      %v3751 = vsel %vm723, %v3746, %v3750
      %3752 = vrot.lane.b32.xlu0 %v3687, 92
      %v3753 = vpop.permute.xlu0 %3752
      %3754 = vrot.lane.b32.xlu0 %v3695, 92
      %v3755 = vpop.permute.xlu0 %3754
      %3756 = vrot.lane.b32.xlu0 %v3703, 92
      %v3757 = vpop.permute.xlu0 %3756
      %3758 = vrot.lane.b32.xlu0 %v3711, 92
      %v3759 = vpop.permute.xlu0 %3758
      %3760 = vrot.lane.b32.xlu0 %v3719, 92
      %v3761 = vpop.permute.xlu0 %3760
      %3762 = vrot.lane.b32.xlu0 %v3727, 92
      %v3763 = vpop.permute.xlu0 %3762
      %3764 = vrot.lane.b32.xlu0 %v3735, 92
      %v3765 = vpop.permute.xlu0 %3764
      %3766 = vrot.lane.b32.xlu0 %v3743, 92
      %v3767 = vpop.permute.xlu0 %3766
      %3768 = vrot.lane.b32.xlu0 %v3751, 92
      %v3769 = vpop.permute.xlu0 %3768
      %vm3779 = vcmask 786144
      %3780 = vst.msk [vmem:[#allocation2] sm:$0xff] %vm3779, %v3753
      %3781 = vst.msk [vmem:[#allocation2 + $0x8] sm:$0xff] %vm3779, %v3755
      %3782 = vst.msk [vmem:[#allocation2 + $0x10] sm:$0xff] %vm3779, %v3757
      %3783 = vst.msk [vmem:[#allocation2 + $0x18] sm:$0xff] %vm3779, %v3759
      %3784 = vst.msk [vmem:[#allocation2 + $0x20] sm:$0xff] %vm3779, %v3761
      %3785 = vst.msk [vmem:[#allocation2 + $0x28] sm:$0xff] %vm3779, %v3763
      %3786 = vst.msk [vmem:[#allocation2 + $0x30] sm:$0xff] %vm3779, %v3765
      %3787 = vst.msk [vmem:[#allocation2 + $0x38] sm:$0xff] %vm3779, %v3767
      %3788 = vst.msk [vmem:[#allocation2 + $0x40] sm:$0xff] %vm3779, %v3769
      %v3789 = vld [vmem:[%s247 + $0x1c] sm:$0xe]
      %v3790 = vld [vmem:[%s247 + $0x20] sm:$0xf]
      %v3791 = vld [vmem:[%s247 + $0x24] sm:$0xf]
      %v3792 = vld [vmem:[%s247 + $0x28] sm:$0xf]
      %v3793 = vld [vmem:[%s247 + $0x2c] sm:$0xf]
      %v3794 = vld [vmem:[%s247 + $0x30] sm:$0xf]
      %v3795 = vld [vmem:[%s247 + $0x34] sm:$0xf]
      %v3796 = vld [vmem:[%s247 + $0x38] sm:$0xf]
      %v3797 = vld [vmem:[%s247 + $0x3c] sm:$0xf]
      %v3798 = vld [vmem:[%s247 + $0x40] sm:$0xf]
      %v3799 = vld [vmem:[%s247 + $0x44] sm:$0xf]
      %v3800 = vld [vmem:[%s247 + $0x48] sm:$0xf]
      %v3801 = vld [vmem:[%s247 + $0x4c] sm:$0xf]
      %v3802 = vld [vmem:[%s247 + $0x50] sm:$0xf]
      %v3803 = vld [vmem:[%s247 + $0x54] sm:$0xf]
      %v3804 = vld [vmem:[%s247 + $0x58] sm:$0xf]
      %v3805 = vld [vmem:[%s247 + $0x5c] sm:$0xf]
      %v3806 = vld [vmem:[%s247 + $0x60] sm:$0xf]
      %v3807 = vld [vmem:[%s247 + $0x64] sm:$0x1]
      %v3827 = vunpack.c.l.b16 %v3789
      %v3828 = vunpack.c.l.b16 %v3790
      %v3829 = vunpack.c.l.b16 %v3791
      %v3830 = vunpack.c.l.b16 %v3792
      %v3831 = vunpack.c.l.b16 %v3793
      %v3832 = vunpack.c.l.b16 %v3794
      %v3833 = vunpack.c.l.b16 %v3795
      %v3834 = vunpack.c.l.b16 %v3796
      %v3835 = vunpack.c.l.b16 %v3797
      %v3836 = vunpack.c.l.b16 %v3798
      %v3837 = vunpack.c.l.b16 %v3799
      %v3838 = vunpack.c.l.b16 %v3800
      %v3839 = vunpack.c.l.b16 %v3801
      %v3840 = vunpack.c.l.b16 %v3802
      %v3841 = vunpack.c.l.b16 %v3803
      %v3842 = vunpack.c.l.b16 %v3804
      %v3843 = vunpack.c.l.b16 %v3805
      %v3844 = vunpack.c.l.b16 %v3806
      %v3845 = vunpack.c.l.b16 %v3807
      %v3846 = vpack.c.b16 %v3828, %v3827
      %v3847 = vpack.c.b16 %v3830, %v3829
      %v3848 = vpack.c.b16 %v3832, %v3831
      %v3849 = vpack.c.b16 %v3834, %v3833
      %v3850 = vpack.c.b16 %v3836, %v3835
      %v3851 = vpack.c.b16 %v3838, %v3837
      %v3852 = vpack.c.b16 %v3840, %v3839
      %v3853 = vpack.c.b16 %v3842, %v3841
      %v3854 = vpack.c.b16 %v3844, %v3843
      %v3855 = vpack.c.b16 %v3845, %v3845
      %v3856 = vrot.slane %v3846, 1
      %v3857 = vrot.slane %v3847, 1
      %v3858 = vsel %vm904, %v3856, %v3857
      %v3859 = vrot.slane %v3848, 1
      %v3860 = vsel %vm904, %v3857, %v3859
      %v3861 = vrot.slane %v3849, 1
      %v3862 = vsel %vm904, %v3859, %v3861
      %v3863 = vrot.slane %v3850, 1
      %v3864 = vsel %vm904, %v3861, %v3863
      %v3865 = vrot.slane %v3851, 1
      %v3866 = vsel %vm904, %v3863, %v3865
      %v3867 = vrot.slane %v3852, 1
      %v3868 = vsel %vm904, %v3865, %v3867
      %v3869 = vrot.slane %v3853, 1
      %v3870 = vsel %vm904, %v3867, %v3869
      %v3871 = vrot.slane %v3854, 1
      %v3872 = vsel %vm904, %v3869, %v3871
      %v3873 = vrot.slane %v3855, 1
      %v3874 = vsel %vm904, %v3871, %v3873
      %3875 = vrot.lane.b32.xlu0 %v3858, 96
      %v3876 = vpop.permute.xlu0 %3875
      %3877 = vrot.lane.b32.xlu0 %v3860, 96
      %v3878 = vpop.permute.xlu0 %3877
      %3879 = vrot.lane.b32.xlu0 %v3862, 96
      %v3880 = vpop.permute.xlu0 %3879
      %3881 = vrot.lane.b32.xlu0 %v3864, 96
      %v3882 = vpop.permute.xlu0 %3881
      %3883 = vrot.lane.b32.xlu0 %v3866, 96
      %v3884 = vpop.permute.xlu0 %3883
      %3885 = vrot.lane.b32.xlu0 %v3868, 96
      %v3886 = vpop.permute.xlu0 %3885
      %3887 = vrot.lane.b32.xlu0 %v3870, 96
      %v3888 = vpop.permute.xlu0 %3887
      %3889 = vrot.lane.b32.xlu0 %v3872, 96
      %v3890 = vpop.permute.xlu0 %3889
      %3891 = vrot.lane.b32.xlu0 %v3874, 96
      %v3892 = vpop.permute.xlu0 %3891
      %vm3902 = vcmask 818944
      %3903 = vst.msk [vmem:[#allocation2] sm:$0xff] %vm3902, %v3876
      %3904 = vst.msk [vmem:[#allocation2 + $0x8] sm:$0xff] %vm3902, %v3878
      %3905 = vst.msk [vmem:[#allocation2 + $0x10] sm:$0xff] %vm3902, %v3880
      %3906 = vst.msk [vmem:[#allocation2 + $0x18] sm:$0xff] %vm3902, %v3882
      %3907 = vst.msk [vmem:[#allocation2 + $0x20] sm:$0xff] %vm3902, %v3884
      %3908 = vst.msk [vmem:[#allocation2 + $0x28] sm:$0xff] %vm3902, %v3886
      %3909 = vst.msk [vmem:[#allocation2 + $0x30] sm:$0xff] %vm3902, %v3888
      %3910 = vst.msk [vmem:[#allocation2 + $0x38] sm:$0xff] %vm3902, %v3890
      %3911 = vst.msk [vmem:[#allocation2 + $0x40] sm:$0xff] %vm3902, %v3892
      %v3912 = vld [vmem:[#allocation2] sm:$0xff]
      %v3913 = vld [vmem:[#allocation2 + $0x8] sm:$0xff]
      %v3914 = vld [vmem:[#allocation2 + $0x10] sm:$0xff]
      %v3915 = vld [vmem:[#allocation2 + $0x18] sm:$0xff]
      %v3916 = vld [vmem:[#allocation2 + $0x20] sm:$0xff]
      %v3917 = vld [vmem:[#allocation2 + $0x28] sm:$0xff]
      %v3918 = vld [vmem:[#allocation2 + $0x30] sm:$0xff]
      %v3919 = vld [vmem:[#allocation2 + $0x38] sm:$0xff]
      %v3920 = vld [vmem:[#allocation2 + $0x40] sm:$0xff]
      %v3921 = vld [vmem:[%s1] sm:$0xf]
      %v3922 = vld [vmem:[%s1 + $0x4] sm:$0xf]
      %v3923 = vld [vmem:[%s1 + $0x8] sm:$0xf]
      %v3924 = vld [vmem:[%s1 + $0xc] sm:$0xf]
      %v3925 = vld [vmem:[%s1 + $0x10] sm:$0xf]
      %v3926 = vld [vmem:[%s1 + $0x14] sm:$0xf]
      %v3927 = vld [vmem:[%s1 + $0x18] sm:$0xf]
      %v3928 = vld [vmem:[%s1 + $0x1c] sm:$0xf]
      %v3929 = vld [vmem:[%s1 + $0x20] sm:$0xf]
      %v3930 = vld [vmem:[%s1 + $0x24] sm:$0xf]
      %v3931 = vld [vmem:[%s1 + $0x28] sm:$0xf]
      %v3932 = vld [vmem:[%s1 + $0x2c] sm:$0xf]
      %v3933 = vld [vmem:[%s1 + $0x30] sm:$0x3]
      %v3934 = vld [vmem:[%s2] sm:$0x1]
      %v3936 = vlaneseq
      %v3937 = vshrl.u32 %v3936, 7
      %v3938 = vsub.s32 0, %v3937
      %v3939 = vrot.slane %v3934, %v3938
      %v3954 = vunpack.c.l.b16 %v3921
      %v3955 = vunpack.c.l.b16 %v3922
      %v3956 = vunpack.c.l.b16 %v3923
      %v3957 = vunpack.c.l.b16 %v3924
      %v3958 = vunpack.c.l.b16 %v3925
      %v3959 = vunpack.c.l.b16 %v3926
      %v3960 = vunpack.c.l.b16 %v3927
      %v3961 = vunpack.c.l.b16 %v3928
      %v3962 = vunpack.c.l.b16 %v3929
      %v3963 = vunpack.c.l.b16 %v3930
      %v3964 = vunpack.c.l.b16 %v3931
      %v3965 = vunpack.c.l.b16 %v3932
      %v3966 = vunpack.c.l.b16 %v3933
      %v3967 = vpack.c.b16 %v3955, %v3954
      %v3968 = vpack.c.b16 %v3957, %v3956
      %v3969 = vpack.c.b16 %v3959, %v3958
      %v3970 = vpack.c.b16 %v3961, %v3960
      %v3971 = vpack.c.b16 %v3963, %v3962
      %v3972 = vpack.c.b16 %v3965, %v3964
      %v3973 = vpack.c.b16 %v3966, %v3966
      %vm3980 = vcmask 818176
      %v3982 = vsel %vm3980, %v3912, 0
      %v3985 = vsel %vm3980, %v3913, 0
      %v3988 = vsel %vm3980, %v3914, 0
      %v3991 = vsel %vm3980, %v3915, 0
      %v3994 = vsel %vm3980, %v3916, 0
      %v3997 = vsel %vm3980, %v3917, 0
      %v4000 = vsel %vm3980, %v3918, 0
      %v4003 = vsel %vm3980, %v3919, 0
      %v4006 = vsel %vm3980, %v3920, 0
      %vm4008 = vcmask 1041408
      %v4010 = vsel %vm4008, %v3973, 0
      %4012 = vmatprep.subr.bf16.mxu0 0
      %4013 = vmatpush1.bf16.msra.mxu0 %v3967
      %4014 = vmatprep.subr.bf16.mxu0 0
      %4015 = vmatpush1.bf16.msra.mxu0 %v3968
      %4016 = vmatprep.subr.bf16.mxu0 0
      %4017 = vmatpush1.bf16.msra.mxu0 %v3969
      %4018 = vmatprep.subr.bf16.mxu0 0
      %4019 = vmatpush1.bf16.msra.mxu0 %v3970
      %4020 = vmatprep.subr.bf16.mxu0 0
      %4021 = vmatpush1.bf16.msra.mxu0 %v3971
      %4022 = vmatprep.subr.bf16.mxu0 0
      %4023 = vmatpush1.bf16.msra.mxu0 %v3972
      %4024 = vmatprep.subr.bf16.mxu0 0
      %4025 = vmatpush1.bf16.msra.mxu0 %v4010
      %4026 = vmatprep.subr.bf16.mxu0 0
      %4027 = vmatpush1.bf16.msra.mxu0 0
      %4028 = vmatprep.subr.bf16.mxu0 0
      %4029 = vmatpush1.bf16.msra.mxu0 0
      %4030 = vmatprep.subr.bf16.mxu0 0
      %4031 = vmatpush1.bf16.msra.mxu0 0
      %4032 = vmatprep.subr.bf16.mxu0 0
      %4033 = vmatpush1.bf16.msra.mxu0 0
      %4034 = vmatprep.subr.bf16.mxu0 0
      %4035 = vmatpush1.bf16.msra.mxu0 0
      %4036 = vmatprep.subr.bf16.mxu0 0
      %4037 = vmatpush1.bf16.msra.mxu0 0
      %4038 = vmatprep.subr.bf16.mxu0 0
      %4039 = vmatpush1.bf16.msra.mxu0 0
      %4040 = vmatprep.subr.bf16.mxu0 0
      %4041 = vmatpush1.bf16.msra.mxu0 0
      %4042 = vmatprep.subr.bf16.mxu0 0
      %4043 = vmatpush1.bf16.msra.mxu0 0
      %4044 = vmatprep.mubr.bf16.mxu0 0
      %4045 = vmatmul.mubr.bf16.gmra.mrb[0].mxu0 %v3982
      %v4046 = vpop.f32.mrb[0].mxu0
      %v4047 = vadd.f32 %v3939, %v4046
      %v4048 = vpop.f32.mrb[0].mxu0
      %v4049 = vpop.f32.mrb[0].mxu0
      %v4050 = vadd.f32 %v3939, %v4049
      %v4051 = vpop.f32.mrb[0].mxu0
      %4052 = vmatprep.mubr.bf16.mxu0 0
      %4053 = vmatmul.mubr.bf16.gmra.mrb[0].mxu0 %v3985
      %v4054 = vpop.f32.mrb[0].mxu0
      %v4055 = vadd.f32 %v3939, %v4054
      %v4056 = vpop.f32.mrb[0].mxu0
      %v4057 = vpop.f32.mrb[0].mxu0
      %v4058 = vadd.f32 %v3939, %v4057
      %v4059 = vpop.f32.mrb[0].mxu0
      %4060 = vmatprep.mubr.bf16.mxu0 0
      %4061 = vmatmul.mubr.bf16.gmra.mrb[0].mxu0 %v3988
      %v4062 = vpop.f32.mrb[0].mxu0
      %v4063 = vadd.f32 %v3939, %v4062
      %v4064 = vpop.f32.mrb[0].mxu0
      %v4065 = vpop.f32.mrb[0].mxu0
      %v4066 = vadd.f32 %v3939, %v4065
      %v4067 = vpop.f32.mrb[0].mxu0
      %4068 = vmatprep.mubr.bf16.mxu0 0
      %4069 = vmatmul.mubr.bf16.gmra.mrb[0].mxu0 %v3991
      %v4070 = vpop.f32.mrb[0].mxu0
      %v4071 = vadd.f32 %v3939, %v4070
      %v4072 = vpop.f32.mrb[0].mxu0
      %v4073 = vpop.f32.mrb[0].mxu0
      %v4074 = vadd.f32 %v3939, %v4073
      %v4075 = vpop.f32.mrb[0].mxu0
      %4076 = vmatprep.mubr.bf16.mxu0 0
      %4077 = vmatmul.mubr.bf16.gmra.mrb[0].mxu0 %v3994
      %v4078 = vpop.f32.mrb[0].mxu0
      %v4079 = vadd.f32 %v3939, %v4078
      %v4080 = vpop.f32.mrb[0].mxu0
      %v4081 = vpop.f32.mrb[0].mxu0
      %v4082 = vadd.f32 %v3939, %v4081
      %v4083 = vpop.f32.mrb[0].mxu0
      %4084 = vmatprep.mubr.bf16.mxu0 0
      %4085 = vmatmul.mubr.bf16.gmra.mrb[0].mxu0 %v3997
      %v4086 = vpop.f32.mrb[0].mxu0
      %v4087 = vadd.f32 %v3939, %v4086
      %v4088 = vpop.f32.mrb[0].mxu0
      %v4089 = vpop.f32.mrb[0].mxu0
      %v4090 = vadd.f32 %v3939, %v4089
      %v4091 = vpop.f32.mrb[0].mxu0
      %4092 = vmatprep.mubr.bf16.mxu0 0
      %4093 = vmatmul.mubr.bf16.gmra.mrb[0].mxu0 %v4000
      %v4094 = vpop.f32.mrb[0].mxu0
      %v4095 = vadd.f32 %v3939, %v4094
      %v4096 = vpop.f32.mrb[0].mxu0
      %v4097 = vpop.f32.mrb[0].mxu0
      %v4098 = vadd.f32 %v3939, %v4097
      %v4099 = vpop.f32.mrb[0].mxu0
      %4100 = vmatprep.mubr.bf16.mxu0 0
      %4101 = vmatmul.mubr.bf16.gmra.mrb[0].mxu0 %v4003
      %v4102 = vpop.f32.mrb[0].mxu0
      %v4103 = vadd.f32 %v3939, %v4102
      %v4104 = vpop.f32.mrb[0].mxu0
      %v4105 = vpop.f32.mrb[0].mxu0
      %v4106 = vadd.f32 %v3939, %v4105
      %v4107 = vpop.f32.mrb[0].mxu0
      %4108 = vmatprep.mubr.bf16.mxu0 0
      %4109 = vmatmul.mubr.bf16.gmra.mrb[0].mxu0 %v4006
      %v4110 = vpop.f32.mrb[0].mxu0
      %v4111 = vadd.f32 %v3939, %v4110
      %v4112 = vpop.f32.mrb[0].mxu0
      %v4113 = vpop.f32.mrb[0].mxu0
      %v4114 = vadd.f32 %v3939, %v4113
      %v4115 = vpop.f32.mrb[0].mxu0
      %4116 = vdwg.mxu0
      %v4117 = vmax.f32 %v4047, 0.0
      %v4118 = vmax.f32 %v4050, 0.0
      %v4119 = vmax.f32 %v4055, 0.0
      %v4120 = vmax.f32 %v4058, 0.0
      %v4121 = vmax.f32 %v4063, 0.0
      %v4122 = vmax.f32 %v4066, 0.0
      %v4123 = vmax.f32 %v4071, 0.0
      %v4124 = vmax.f32 %v4074, 0.0
      %v4125 = vmax.f32 %v4079, 0.0
      %v4126 = vmax.f32 %v4082, 0.0
      %v4127 = vmax.f32 %v4087, 0.0
      %v4128 = vmax.f32 %v4090, 0.0
      %v4129 = vmax.f32 %v4095, 0.0
      %v4130 = vmax.f32 %v4098, 0.0
      %v4131 = vmax.f32 %v4103, 0.0
      %v4132 = vmax.f32 %v4106, 0.0
      %v4133 = vmax.f32 %v4111, 0.0
      %v4134 = vmax.f32 %v4114, 0.0
      %v4135 = vld [vmem:[%s5] sm:$0xff]
      %v4136 = vld [vmem:[%s5 + $0x8] sm:$0xff]
      %v4137 = vld [vmem:[%s5 + $0x10] sm:$0xff]
      %v4138 = vld [vmem:[%s5 + $0x18] sm:$0xff]
      %v4139 = vld [vmem:[%s5 + $0x20] sm:$0xff]
      %v4140 = vld [vmem:[%s5 + $0x28] sm:$0xff]
      %v4141 = vld [vmem:[%s5 + $0x30] sm:$0xff]
      %v4142 = vld [vmem:[%s5 + $0x38] sm:$0xff]
      %v4143 = vld [vmem:[%s5 + $0x40] sm:$0xff]
      %v4144 = vld [vmem:[%s5 + $0x48] sm:$0xff]
      %v4145 = vld [vmem:[%s5 + $0x50] sm:$0xff]
      %v4146 = vld [vmem:[%s5 + $0x58] sm:$0xff]
      %v4147 = vld [vmem:[%s5 + $0x60] sm:$0xff]
      %v4148 = vld [vmem:[%s5 + $0x68] sm:$0xff]
      %v4149 = vld [vmem:[%s5 + $0x70] sm:$0xff]
      %v4150 = vld [vmem:[%s5 + $0x78] sm:$0xff]
      %v4151 = vld [vmem:[%s5 + $0x80] sm:$0xff]
      %v4152 = vld [vmem:[%s5 + $0x88] sm:$0xff]
      %4154 = vset.pattern.permute.xlu0 0
      %4155 = vperm.xlu0 %4154, %v4135
      %v4156 = vpop.permute.xlu0 %4155
      %4159 = vset.pattern.permute.xlu0 0
      %4160 = vperm.xlu0 %4159, %v4136
      %v4161 = vpop.permute.xlu0 %4160
      %4164 = vset.pattern.permute.xlu0 0
      %4165 = vperm.xlu0 %4164, %v4137
      %v4166 = vpop.permute.xlu0 %4165
      %4169 = vset.pattern.permute.xlu0 0
      %4170 = vperm.xlu0 %4169, %v4138
      %v4171 = vpop.permute.xlu0 %4170
      %4174 = vset.pattern.permute.xlu0 0
      %4175 = vperm.xlu0 %4174, %v4139
      %v4176 = vpop.permute.xlu0 %4175
      %4179 = vset.pattern.permute.xlu0 0
      %4180 = vperm.xlu0 %4179, %v4140
      %v4181 = vpop.permute.xlu0 %4180
      %4184 = vset.pattern.permute.xlu0 0
      %4185 = vperm.xlu0 %4184, %v4141
      %v4186 = vpop.permute.xlu0 %4185
      %4189 = vset.pattern.permute.xlu0 0
      %4190 = vperm.xlu0 %4189, %v4142
      %v4191 = vpop.permute.xlu0 %4190
      %4194 = vset.pattern.permute.xlu0 0
      %4195 = vperm.xlu0 %4194, %v4143
      %v4196 = vpop.permute.xlu0 %4195
      %4199 = vset.pattern.permute.xlu0 0
      %4200 = vperm.xlu0 %4199, %v4144
      %v4201 = vpop.permute.xlu0 %4200
      %4204 = vset.pattern.permute.xlu0 0
      %4205 = vperm.xlu0 %4204, %v4145
      %v4206 = vpop.permute.xlu0 %4205
      %4209 = vset.pattern.permute.xlu0 0
      %4210 = vperm.xlu0 %4209, %v4146
      %v4211 = vpop.permute.xlu0 %4210
      %4214 = vset.pattern.permute.xlu0 0
      %4215 = vperm.xlu0 %4214, %v4147
      %v4216 = vpop.permute.xlu0 %4215
      %4219 = vset.pattern.permute.xlu0 0
      %4220 = vperm.xlu0 %4219, %v4148
      %v4221 = vpop.permute.xlu0 %4220
      %4224 = vset.pattern.permute.xlu0 0
      %4225 = vperm.xlu0 %4224, %v4149
      %v4226 = vpop.permute.xlu0 %4225
      %4229 = vset.pattern.permute.xlu0 0
      %4230 = vperm.xlu0 %4229, %v4150
      %v4231 = vpop.permute.xlu0 %4230
      %4234 = vset.pattern.permute.xlu0 0
      %4235 = vperm.xlu0 %4234, %v4151
      %v4236 = vpop.permute.xlu0 %4235
      %4239 = vset.pattern.permute.xlu0 0
      %4240 = vperm.xlu0 %4239, %v4152
      %v4241 = vpop.permute.xlu0 %4240
      %v4243 = vmul.f32 %v4117, %v4156
      %v4244 = vmul.f32 %v4118, %v4161
      %v4245 = vmul.f32 %v4119, %v4166
      %v4246 = vmul.f32 %v4120, %v4171
      %v4247 = vmul.f32 %v4121, %v4176
      %v4248 = vmul.f32 %v4122, %v4181
      %v4249 = vmul.f32 %v4123, %v4186
      %v4250 = vmul.f32 %v4124, %v4191
      %v4251 = vmul.f32 %v4125, %v4196
      %v4252 = vmul.f32 %v4126, %v4201
      %v4253 = vmul.f32 %v4127, %v4206
      %v4254 = vmul.f32 %v4128, %v4211
      %v4255 = vmul.f32 %v4129, %v4216
      %v4256 = vmul.f32 %v4130, %v4221
      %v4257 = vmul.f32 %v4131, %v4226
      %v4258 = vmul.f32 %v4132, %v4231
      %v4259 = vmul.f32 %v4133, %v4236
      %v4260 = vmul.f32 %v4134, %v4241
      %vm4261 = vcmask 130048
      %4262 = vst.msk [vmem:[#allocation3] sm:$0xff] %vm4261, 0
      %4263 = vst.msk [vmem:[#allocation3 + $0x50] sm:$0xff] %vm4261, 0
      %v4264 = vpack.c.bf16 %v4244, %v4243
      %v4265 = vpack.c.bf16 %v4246, %v4245
      %v4266 = vpack.c.bf16 %v4248, %v4247
      %v4267 = vpack.c.bf16 %v4250, %v4249
      %v4268 = vpack.c.bf16 %v4252, %v4251
      %v4269 = vpack.c.bf16 %v4254, %v4253
      %v4270 = vpack.c.bf16 %v4256, %v4255
      %v4271 = vpack.c.bf16 %v4258, %v4257
      %v4272 = vpack.c.bf16 %v4260, %v4259
      %4273 = vst.msk [vmem:[#allocation3 + $0x8] sm:$0xff] %vm4261, %v4264
      %4274 = vst.msk [vmem:[#allocation3 + $0x10] sm:$0xff] %vm4261, %v4265
      %4275 = vst.msk [vmem:[#allocation3 + $0x18] sm:$0xff] %vm4261, %v4266
      %4276 = vst.msk [vmem:[#allocation3 + $0x20] sm:$0xff] %vm4261, %v4267
      %4277 = vst.msk [vmem:[#allocation3 + $0x28] sm:$0xff] %vm4261, %v4268
      %4278 = vst.msk [vmem:[#allocation3 + $0x30] sm:$0xff] %vm4261, %v4269
      %4279 = vst.msk [vmem:[#allocation3 + $0x38] sm:$0xff] %vm4261, %v4270
      %4280 = vst.msk [vmem:[#allocation3 + $0x40] sm:$0xff] %vm4261, %v4271
      %4281 = vst.msk [vmem:[#allocation3 + $0x48] sm:$0xff] %vm4261, %v4272
      %v4282 = vld [vmem:[#allocation3] sm:$0xfe]
      %v4283 = vld [vmem:[#allocation3 + $0x8] sm:$0xff]
      %v4284 = vld [vmem:[#allocation3 + $0x10] sm:$0xff]
      %v4285 = vld [vmem:[#allocation3 + $0x18] sm:$0xff]
      %v4286 = vld [vmem:[#allocation3 + $0x20] sm:$0xff]
      %v4287 = vld [vmem:[#allocation3 + $0x28] sm:$0xff]
      %v4288 = vld [vmem:[#allocation3 + $0x30] sm:$0xff]
      %v4289 = vld [vmem:[#allocation3 + $0x38] sm:$0xff]
      %v4290 = vld [vmem:[#allocation3 + $0x40] sm:$0xff]
      %v4291 = vld [vmem:[#allocation3 + $0x48] sm:$0x3]
      %v4293 = vshrl.u32 %v4282, 16
      %v4295 = vrot.slane %v4293, 1
      %v4296 = vshll.u32 %v4282, 16
      %v4298 = vrot.slane %v4296, 2
      %v4299 = vor.u32 %v4295, %v4298
      %v4301 = vshrl.u32 %v4283, 16
      %v4303 = vrot.slane %v4301, 1
      %v4304 = vshll.u32 %v4283, 16
      %v4306 = vrot.slane %v4304, 2
      %v4307 = vor.u32 %v4303, %v4306
      %v4308 = vsel %vm1151, %v4299, %v4307
      %v4310 = vshrl.u32 %v4284, 16
      %v4312 = vrot.slane %v4310, 1
      %v4313 = vshll.u32 %v4284, 16
      %v4315 = vrot.slane %v4313, 2
      %v4316 = vor.u32 %v4312, %v4315
      %v4317 = vsel %vm1151, %v4307, %v4316
      %v4319 = vshrl.u32 %v4285, 16
      %v4321 = vrot.slane %v4319, 1
      %v4322 = vshll.u32 %v4285, 16
      %v4324 = vrot.slane %v4322, 2
      %v4325 = vor.u32 %v4321, %v4324
      %v4326 = vsel %vm1151, %v4316, %v4325
      %v4328 = vshrl.u32 %v4286, 16
      %v4330 = vrot.slane %v4328, 1
      %v4331 = vshll.u32 %v4286, 16
      %v4333 = vrot.slane %v4331, 2
      %v4334 = vor.u32 %v4330, %v4333
      %v4335 = vsel %vm1151, %v4325, %v4334
      %v4337 = vshrl.u32 %v4287, 16
      %v4339 = vrot.slane %v4337, 1
      %v4340 = vshll.u32 %v4287, 16
      %v4342 = vrot.slane %v4340, 2
      %v4343 = vor.u32 %v4339, %v4342
      %v4344 = vsel %vm1151, %v4334, %v4343
      %v4346 = vshrl.u32 %v4288, 16
      %v4348 = vrot.slane %v4346, 1
      %v4349 = vshll.u32 %v4288, 16
      %v4351 = vrot.slane %v4349, 2
      %v4352 = vor.u32 %v4348, %v4351
      %v4353 = vsel %vm1151, %v4343, %v4352
      %v4355 = vshrl.u32 %v4289, 16
      %v4357 = vrot.slane %v4355, 1
      %v4358 = vshll.u32 %v4289, 16
      %v4360 = vrot.slane %v4358, 2
      %v4361 = vor.u32 %v4357, %v4360
      %v4362 = vsel %vm1151, %v4352, %v4361
      %v4364 = vshrl.u32 %v4290, 16
      %v4366 = vrot.slane %v4364, 1
      %v4367 = vshll.u32 %v4290, 16
      %v4369 = vrot.slane %v4367, 2
      %v4370 = vor.u32 %v4366, %v4369
      %v4371 = vsel %vm1151, %v4361, %v4370
      %v4373 = vshrl.u32 %v4291, 16
      %v4375 = vrot.slane %v4373, 1
      %v4376 = vshll.u32 %v4291, 16
      %v4378 = vrot.slane %v4376, 2
      %v4379 = vor.u32 %v4375, %v4378
      %v4380 = vsel %vm1151, %v4370, %v4379
      %4390 = vst.msk [vmem:[#allocation4] sm:$0xff] %vm4261, %v4308
      %4391 = vst.msk [vmem:[#allocation4 + $0x10] sm:$0xff] %vm4261, %v4317
      %4392 = vst.msk [vmem:[#allocation4 + $0x20] sm:$0xff] %vm4261, %v4326
      %4393 = vst.msk [vmem:[#allocation4 + $0x30] sm:$0xff] %vm4261, %v4335
      %4394 = vst.msk [vmem:[#allocation4 + $0x40] sm:$0xff] %vm4261, %v4344
      %4395 = vst.msk [vmem:[#allocation4 + $0x50] sm:$0xff] %vm4261, %v4353
      %4396 = vst.msk [vmem:[#allocation4 + $0x60] sm:$0xff] %vm4261, %v4362
      %4397 = vst.msk [vmem:[#allocation4 + $0x70] sm:$0xff] %vm4261, %v4371
      %4398 = vst.msk [vmem:[#allocation4 + $0x80] sm:$0xff] %vm4261, %v4380
      %v4399 = vld [vmem:[#allocation3] sm:$0xfc]
      %v4400 = vld [vmem:[#allocation3 + $0x8] sm:$0xff]
      %v4401 = vld [vmem:[#allocation3 + $0x10] sm:$0xff]
      %v4402 = vld [vmem:[#allocation3 + $0x18] sm:$0xff]
      %v4403 = vld [vmem:[#allocation3 + $0x20] sm:$0xff]
      %v4404 = vld [vmem:[#allocation3 + $0x28] sm:$0xff]
      %v4405 = vld [vmem:[#allocation3 + $0x30] sm:$0xff]
      %v4406 = vld [vmem:[#allocation3 + $0x38] sm:$0xff]
      %v4407 = vld [vmem:[#allocation3 + $0x40] sm:$0xff]
      %v4408 = vld [vmem:[#allocation3 + $0x48] sm:$0x3]
      %v4419 = vrot.slane %v4399, 2
      %v4420 = vrot.slane %v4400, 2
      %v4421 = vsel %vm1345, %v4419, %v4420
      %v4422 = vrot.slane %v4401, 2
      %v4423 = vsel %vm1345, %v4420, %v4422
      %v4424 = vrot.slane %v4402, 2
      %v4425 = vsel %vm1345, %v4422, %v4424
      %v4426 = vrot.slane %v4403, 2
      %v4427 = vsel %vm1345, %v4424, %v4426
      %v4428 = vrot.slane %v4404, 2
      %v4429 = vsel %vm1345, %v4426, %v4428
      %v4430 = vrot.slane %v4405, 2
      %v4431 = vsel %vm1345, %v4428, %v4430
      %v4432 = vrot.slane %v4406, 2
      %v4433 = vsel %vm1345, %v4430, %v4432
      %v4434 = vrot.slane %v4407, 2
      %v4435 = vsel %vm1345, %v4432, %v4434
      %v4436 = vrot.slane %v4408, 2
      %v4437 = vsel %vm1345, %v4434, %v4436
      %4438 = vrot.lane.b32.xlu0 %v4421, 16
      %v4439 = vpop.permute.xlu0 %4438
      %4440 = vrot.lane.b32.xlu0 %v4423, 16
      %v4441 = vpop.permute.xlu0 %4440
      %4442 = vrot.lane.b32.xlu0 %v4425, 16
      %v4443 = vpop.permute.xlu0 %4442
      %4444 = vrot.lane.b32.xlu0 %v4427, 16
      %v4445 = vpop.permute.xlu0 %4444
      %4446 = vrot.lane.b32.xlu0 %v4429, 16
      %v4447 = vpop.permute.xlu0 %4446
      %4448 = vrot.lane.b32.xlu0 %v4431, 16
      %v4449 = vpop.permute.xlu0 %4448
      %4450 = vrot.lane.b32.xlu0 %v4433, 16
      %v4451 = vpop.permute.xlu0 %4450
      %4452 = vrot.lane.b32.xlu0 %v4435, 16
      %v4453 = vpop.permute.xlu0 %4452
      %4454 = vrot.lane.b32.xlu0 %v4437, 16
      %v4455 = vpop.permute.xlu0 %4454
      %vm4465 = vcmask 261248
      %4466 = vst.msk [vmem:[#allocation4] sm:$0xff] %vm4465, %v4439
      %4467 = vst.msk [vmem:[#allocation4 + $0x10] sm:$0xff] %vm4465, %v4441
      %4468 = vst.msk [vmem:[#allocation4 + $0x20] sm:$0xff] %vm4465, %v4443
      %4469 = vst.msk [vmem:[#allocation4 + $0x30] sm:$0xff] %vm4465, %v4445
      %4470 = vst.msk [vmem:[#allocation4 + $0x40] sm:$0xff] %vm4465, %v4447
      %4471 = vst.msk [vmem:[#allocation4 + $0x50] sm:$0xff] %vm4465, %v4449
      %4472 = vst.msk [vmem:[#allocation4 + $0x60] sm:$0xff] %vm4465, %v4451
      %4473 = vst.msk [vmem:[#allocation4 + $0x70] sm:$0xff] %vm4465, %v4453
      %4474 = vst.msk [vmem:[#allocation4 + $0x80] sm:$0xff] %vm4465, %v4455
      %v4475 = vld [vmem:[#allocation3] sm:$0xfc]
      %v4476 = vld [vmem:[#allocation3 + $0x8] sm:$0xff]
      %v4477 = vld [vmem:[#allocation3 + $0x10] sm:$0xff]
      %v4478 = vld [vmem:[#allocation3 + $0x18] sm:$0xff]
      %v4479 = vld [vmem:[#allocation3 + $0x20] sm:$0xff]
      %v4480 = vld [vmem:[#allocation3 + $0x28] sm:$0xff]
      %v4481 = vld [vmem:[#allocation3 + $0x30] sm:$0xff]
      %v4482 = vld [vmem:[#allocation3 + $0x38] sm:$0xff]
      %v4483 = vld [vmem:[#allocation3 + $0x40] sm:$0xff]
      %v4484 = vld [vmem:[#allocation3 + $0x48] sm:$0x7]
      %v4486 = vshrl.u32 %v4475, 16
      %v4488 = vrot.slane %v4486, 2
      %v4489 = vshll.u32 %v4475, 16
      %v4491 = vrot.slane %v4489, 3
      %v4492 = vor.u32 %v4488, %v4491
      %v4494 = vshrl.u32 %v4476, 16
      %v4496 = vrot.slane %v4494, 2
      %v4497 = vshll.u32 %v4476, 16
      %v4499 = vrot.slane %v4497, 3
      %v4500 = vor.u32 %v4496, %v4499
      %v4501 = vsel %vm1469, %v4492, %v4500
      %v4503 = vshrl.u32 %v4477, 16
      %v4505 = vrot.slane %v4503, 2
      %v4506 = vshll.u32 %v4477, 16
      %v4508 = vrot.slane %v4506, 3
      %v4509 = vor.u32 %v4505, %v4508
      %v4510 = vsel %vm1469, %v4500, %v4509
      %v4512 = vshrl.u32 %v4478, 16
      %v4514 = vrot.slane %v4512, 2
      %v4515 = vshll.u32 %v4478, 16
      %v4517 = vrot.slane %v4515, 3
      %v4518 = vor.u32 %v4514, %v4517
      %v4519 = vsel %vm1469, %v4509, %v4518
      %v4521 = vshrl.u32 %v4479, 16
      %v4523 = vrot.slane %v4521, 2
      %v4524 = vshll.u32 %v4479, 16
      %v4526 = vrot.slane %v4524, 3
      %v4527 = vor.u32 %v4523, %v4526
      %v4528 = vsel %vm1469, %v4518, %v4527
      %v4530 = vshrl.u32 %v4480, 16
      %v4532 = vrot.slane %v4530, 2
      %v4533 = vshll.u32 %v4480, 16
      %v4535 = vrot.slane %v4533, 3
      %v4536 = vor.u32 %v4532, %v4535
      %v4537 = vsel %vm1469, %v4527, %v4536
      %v4539 = vshrl.u32 %v4481, 16
      %v4541 = vrot.slane %v4539, 2
      %v4542 = vshll.u32 %v4481, 16
      %v4544 = vrot.slane %v4542, 3
      %v4545 = vor.u32 %v4541, %v4544
      %v4546 = vsel %vm1469, %v4536, %v4545
      %v4548 = vshrl.u32 %v4482, 16
      %v4550 = vrot.slane %v4548, 2
      %v4551 = vshll.u32 %v4482, 16
      %v4553 = vrot.slane %v4551, 3
      %v4554 = vor.u32 %v4550, %v4553
      %v4555 = vsel %vm1469, %v4545, %v4554
      %v4557 = vshrl.u32 %v4483, 16
      %v4559 = vrot.slane %v4557, 2
      %v4560 = vshll.u32 %v4483, 16
      %v4562 = vrot.slane %v4560, 3
      %v4563 = vor.u32 %v4559, %v4562
      %v4564 = vsel %vm1469, %v4554, %v4563
      %v4566 = vshrl.u32 %v4484, 16
      %v4568 = vrot.slane %v4566, 2
      %v4569 = vshll.u32 %v4484, 16
      %v4571 = vrot.slane %v4569, 3
      %v4572 = vor.u32 %v4568, %v4571
      %v4573 = vsel %vm1469, %v4563, %v4572
      %4574 = vrot.lane.b32.xlu0 %v4501, 32
      %v4575 = vpop.permute.xlu0 %4574
      %4576 = vrot.lane.b32.xlu0 %v4510, 32
      %v4577 = vpop.permute.xlu0 %4576
      %4578 = vrot.lane.b32.xlu0 %v4519, 32
      %v4579 = vpop.permute.xlu0 %4578
      %4580 = vrot.lane.b32.xlu0 %v4528, 32
      %v4581 = vpop.permute.xlu0 %4580
      %4582 = vrot.lane.b32.xlu0 %v4537, 32
      %v4583 = vpop.permute.xlu0 %4582
      %4584 = vrot.lane.b32.xlu0 %v4546, 32
      %v4585 = vpop.permute.xlu0 %4584
      %4586 = vrot.lane.b32.xlu0 %v4555, 32
      %v4587 = vpop.permute.xlu0 %4586
      %4588 = vrot.lane.b32.xlu0 %v4564, 32
      %v4589 = vpop.permute.xlu0 %4588
      %4590 = vrot.lane.b32.xlu0 %v4573, 32
      %v4591 = vpop.permute.xlu0 %4590
      %vm4601 = vcmask 392448
      %4602 = vst.msk [vmem:[#allocation4] sm:$0xff] %vm4601, %v4575
      %4603 = vst.msk [vmem:[#allocation4 + $0x10] sm:$0xff] %vm4601, %v4577
      %4604 = vst.msk [vmem:[#allocation4 + $0x20] sm:$0xff] %vm4601, %v4579
      %4605 = vst.msk [vmem:[#allocation4 + $0x30] sm:$0xff] %vm4601, %v4581
      %4606 = vst.msk [vmem:[#allocation4 + $0x40] sm:$0xff] %vm4601, %v4583
      %4607 = vst.msk [vmem:[#allocation4 + $0x50] sm:$0xff] %vm4601, %v4585
      %4608 = vst.msk [vmem:[#allocation4 + $0x60] sm:$0xff] %vm4601, %v4587
      %4609 = vst.msk [vmem:[#allocation4 + $0x70] sm:$0xff] %vm4601, %v4589
      %4610 = vst.msk [vmem:[#allocation4 + $0x80] sm:$0xff] %vm4601, %v4591
      %v4611 = vld [vmem:[#allocation3] sm:$0x80]
      %v4612 = vld [vmem:[#allocation3 + $0x8] sm:$0xff]
      %v4613 = vld [vmem:[#allocation3 + $0x10] sm:$0xff]
      %v4614 = vld [vmem:[#allocation3 + $0x18] sm:$0xff]
      %v4615 = vld [vmem:[#allocation3 + $0x20] sm:$0xff]
      %v4616 = vld [vmem:[#allocation3 + $0x28] sm:$0xff]
      %v4617 = vld [vmem:[#allocation3 + $0x30] sm:$0xff]
      %v4618 = vld [vmem:[#allocation3 + $0x38] sm:$0xff]
      %v4619 = vld [vmem:[#allocation3 + $0x40] sm:$0xff]
      %v4620 = vld [vmem:[#allocation3 + $0x48] sm:$0xff]
      %vm4621 = vsmask.f32 256
      %v4623 = vshrl.u32 %v4611, 16
      %v4625 = vrot.slane %v4623, 7
      %v4627 = vshrl.u32 %v4612, 16
      %v4629 = vrot.slane %v4627, 7
      %v4630 = vshll.u32 %v4612, 16
      %v4632 = vor.u32 %v4629, %v4630
      %v4633 = vsel %vm4621, %v4625, %v4632
      %v4635 = vshrl.u32 %v4613, 16
      %v4637 = vrot.slane %v4635, 7
      %v4638 = vshll.u32 %v4613, 16
      %v4640 = vor.u32 %v4637, %v4638
      %v4641 = vsel %vm4621, %v4629, %v4640
      %v4643 = vshrl.u32 %v4614, 16
      %v4645 = vrot.slane %v4643, 7
      %v4646 = vshll.u32 %v4614, 16
      %v4648 = vor.u32 %v4645, %v4646
      %v4649 = vsel %vm4621, %v4637, %v4648
      %v4651 = vshrl.u32 %v4615, 16
      %v4653 = vrot.slane %v4651, 7
      %v4654 = vshll.u32 %v4615, 16
      %v4656 = vor.u32 %v4653, %v4654
      %v4657 = vsel %vm4621, %v4645, %v4656
      %v4659 = vshrl.u32 %v4616, 16
      %v4661 = vrot.slane %v4659, 7
      %v4662 = vshll.u32 %v4616, 16
      %v4664 = vor.u32 %v4661, %v4662
      %v4665 = vsel %vm4621, %v4653, %v4664
      %v4667 = vshrl.u32 %v4617, 16
      %v4669 = vrot.slane %v4667, 7
      %v4670 = vshll.u32 %v4617, 16
      %v4672 = vor.u32 %v4669, %v4670
      %v4673 = vsel %vm4621, %v4661, %v4672
      %v4675 = vshrl.u32 %v4618, 16
      %v4677 = vrot.slane %v4675, 7
      %v4678 = vshll.u32 %v4618, 16
      %v4680 = vor.u32 %v4677, %v4678
      %v4681 = vsel %vm4621, %v4669, %v4680
      %v4683 = vshrl.u32 %v4619, 16
      %v4685 = vrot.slane %v4683, 7
      %v4686 = vshll.u32 %v4619, 16
      %v4688 = vor.u32 %v4685, %v4686
      %v4689 = vsel %vm4621, %v4677, %v4688
      %v4691 = vshrl.u32 %v4620, 16
      %v4693 = vrot.slane %v4691, 7
      %v4694 = vshll.u32 %v4620, 16
      %v4696 = vor.u32 %v4693, %v4694
      %v4697 = vsel %vm4621, %v4685, %v4696
      %4698 = vrot.lane.b32.xlu0 %v4633, 48
      %v4699 = vpop.permute.xlu0 %4698
      %4700 = vrot.lane.b32.xlu0 %v4641, 48
      %v4701 = vpop.permute.xlu0 %4700
      %4702 = vrot.lane.b32.xlu0 %v4649, 48
      %v4703 = vpop.permute.xlu0 %4702
      %4704 = vrot.lane.b32.xlu0 %v4657, 48
      %v4705 = vpop.permute.xlu0 %4704
      %4706 = vrot.lane.b32.xlu0 %v4665, 48
      %v4707 = vpop.permute.xlu0 %4706
      %4708 = vrot.lane.b32.xlu0 %v4673, 48
      %v4709 = vpop.permute.xlu0 %4708
      %4710 = vrot.lane.b32.xlu0 %v4681, 48
      %v4711 = vpop.permute.xlu0 %4710
      %4712 = vrot.lane.b32.xlu0 %v4689, 48
      %v4713 = vpop.permute.xlu0 %4712
      %4714 = vrot.lane.b32.xlu0 %v4697, 48
      %v4715 = vpop.permute.xlu0 %4714
      %vm4725 = vcmask 523648
      %4726 = vst.msk [vmem:[#allocation4] sm:$0xff] %vm4725, %v4699
      %4727 = vst.msk [vmem:[#allocation4 + $0x10] sm:$0xff] %vm4725, %v4701
      %4728 = vst.msk [vmem:[#allocation4 + $0x20] sm:$0xff] %vm4725, %v4703
      %4729 = vst.msk [vmem:[#allocation4 + $0x30] sm:$0xff] %vm4725, %v4705
      %4730 = vst.msk [vmem:[#allocation4 + $0x40] sm:$0xff] %vm4725, %v4707
      %4731 = vst.msk [vmem:[#allocation4 + $0x50] sm:$0xff] %vm4725, %v4709
      %4732 = vst.msk [vmem:[#allocation4 + $0x60] sm:$0xff] %vm4725, %v4711
      %4733 = vst.msk [vmem:[#allocation4 + $0x70] sm:$0xff] %vm4725, %v4713
      %4734 = vst.msk [vmem:[#allocation4 + $0x80] sm:$0xff] %vm4725, %v4715
      %v4735 = vld [vmem:[#allocation3 + $0x8] sm:$0xff]
      %v4736 = vld [vmem:[#allocation3 + $0x10] sm:$0xff]
      %v4737 = vld [vmem:[#allocation3 + $0x18] sm:$0xff]
      %v4738 = vld [vmem:[#allocation3 + $0x20] sm:$0xff]
      %v4739 = vld [vmem:[#allocation3 + $0x28] sm:$0xff]
      %v4740 = vld [vmem:[#allocation3 + $0x30] sm:$0xff]
      %v4741 = vld [vmem:[#allocation3 + $0x38] sm:$0xff]
      %v4742 = vld [vmem:[#allocation3 + $0x40] sm:$0xff]
      %v4743 = vld [vmem:[#allocation3 + $0x48] sm:$0xff]
      %4753 = vrot.lane.b32.xlu0 %v4735, 64
      %v4754 = vpop.permute.xlu0 %4753
      %4755 = vrot.lane.b32.xlu0 %v4736, 64
      %v4756 = vpop.permute.xlu0 %4755
      %4757 = vrot.lane.b32.xlu0 %v4737, 64
      %v4758 = vpop.permute.xlu0 %4757
      %4759 = vrot.lane.b32.xlu0 %v4738, 64
      %v4760 = vpop.permute.xlu0 %4759
      %4761 = vrot.lane.b32.xlu0 %v4739, 64
      %v4762 = vpop.permute.xlu0 %4761
      %4763 = vrot.lane.b32.xlu0 %v4740, 64
      %v4764 = vpop.permute.xlu0 %4763
      %4765 = vrot.lane.b32.xlu0 %v4741, 64
      %v4766 = vpop.permute.xlu0 %4765
      %4767 = vrot.lane.b32.xlu0 %v4742, 64
      %v4768 = vpop.permute.xlu0 %4767
      %4769 = vrot.lane.b32.xlu0 %v4743, 64
      %v4770 = vpop.permute.xlu0 %4769
      %vm4780 = vcmask 654848
      %4781 = vst.msk [vmem:[#allocation4] sm:$0xff] %vm4780, %v4754
      %4782 = vst.msk [vmem:[#allocation4 + $0x10] sm:$0xff] %vm4780, %v4756
      %4783 = vst.msk [vmem:[#allocation4 + $0x20] sm:$0xff] %vm4780, %v4758
      %4784 = vst.msk [vmem:[#allocation4 + $0x30] sm:$0xff] %vm4780, %v4760
      %4785 = vst.msk [vmem:[#allocation4 + $0x40] sm:$0xff] %vm4780, %v4762
      %4786 = vst.msk [vmem:[#allocation4 + $0x50] sm:$0xff] %vm4780, %v4764
      %4787 = vst.msk [vmem:[#allocation4 + $0x60] sm:$0xff] %vm4780, %v4766
      %4788 = vst.msk [vmem:[#allocation4 + $0x70] sm:$0xff] %vm4780, %v4768
      %4789 = vst.msk [vmem:[#allocation4 + $0x80] sm:$0xff] %vm4780, %v4770
      %v4790 = vld [vmem:[#allocation3 + $0x8] sm:$0xff]
      %v4791 = vld [vmem:[#allocation3 + $0x10] sm:$0xff]
      %v4792 = vld [vmem:[#allocation3 + $0x18] sm:$0xff]
      %v4793 = vld [vmem:[#allocation3 + $0x20] sm:$0xff]
      %v4794 = vld [vmem:[#allocation3 + $0x28] sm:$0xff]
      %v4795 = vld [vmem:[#allocation3 + $0x30] sm:$0xff]
      %v4796 = vld [vmem:[#allocation3 + $0x38] sm:$0xff]
      %v4797 = vld [vmem:[#allocation3 + $0x40] sm:$0xff]
      %v4798 = vld [vmem:[#allocation3 + $0x48] sm:$0xff]
      %v4799 = vld [vmem:[#allocation3 + $0x50] sm:$0x1]
      %v4801 = vshrl.u32 %v4790, 16
      %v4803 = vshll.u32 %v4790, 16
      %v4805 = vrot.slane %v4803, 1
      %v4806 = vor.u32 %v4801, %v4805
      %v4808 = vshll.u32 %v4791, 16
      %v4810 = vrot.slane %v4808, 1
      %v4811 = vsel %vm723, %v4806, %v4810
      %v4812 = vshrl.u32 %v4791, 16
      %v4814 = vor.u32 %v4812, %v4810
      %v4816 = vshll.u32 %v4792, 16
      %v4818 = vrot.slane %v4816, 1
      %v4819 = vsel %vm723, %v4814, %v4818
      %v4820 = vshrl.u32 %v4792, 16
      %v4822 = vor.u32 %v4820, %v4818
      %v4824 = vshll.u32 %v4793, 16
      %v4826 = vrot.slane %v4824, 1
      %v4827 = vsel %vm723, %v4822, %v4826
      %v4828 = vshrl.u32 %v4793, 16
      %v4830 = vor.u32 %v4828, %v4826
      %v4832 = vshll.u32 %v4794, 16
      %v4834 = vrot.slane %v4832, 1
      %v4835 = vsel %vm723, %v4830, %v4834
      %v4836 = vshrl.u32 %v4794, 16
      %v4838 = vor.u32 %v4836, %v4834
      %v4840 = vshll.u32 %v4795, 16
      %v4842 = vrot.slane %v4840, 1
      %v4843 = vsel %vm723, %v4838, %v4842
      %v4844 = vshrl.u32 %v4795, 16
      %v4846 = vor.u32 %v4844, %v4842
      %v4848 = vshll.u32 %v4796, 16
      %v4850 = vrot.slane %v4848, 1
      %v4851 = vsel %vm723, %v4846, %v4850
      %v4852 = vshrl.u32 %v4796, 16
      %v4854 = vor.u32 %v4852, %v4850
      %v4856 = vshll.u32 %v4797, 16
      %v4858 = vrot.slane %v4856, 1
      %v4859 = vsel %vm723, %v4854, %v4858
      %v4860 = vshrl.u32 %v4797, 16
      %v4862 = vor.u32 %v4860, %v4858
      %v4864 = vshll.u32 %v4798, 16
      %v4866 = vrot.slane %v4864, 1
      %v4867 = vsel %vm723, %v4862, %v4866
      %v4868 = vshrl.u32 %v4798, 16
      %v4870 = vor.u32 %v4868, %v4866
      %v4872 = vshll.u32 %v4799, 16
      %v4874 = vrot.slane %v4872, 1
      %v4875 = vsel %vm723, %v4870, %v4874
      %4876 = vrot.lane.b32.xlu0 %v4811, 80
      %v4877 = vpop.permute.xlu0 %4876
      %4878 = vrot.lane.b32.xlu0 %v4819, 80
      %v4879 = vpop.permute.xlu0 %4878
      %4880 = vrot.lane.b32.xlu0 %v4827, 80
      %v4881 = vpop.permute.xlu0 %4880
      %4882 = vrot.lane.b32.xlu0 %v4835, 80
      %v4883 = vpop.permute.xlu0 %4882
      %4884 = vrot.lane.b32.xlu0 %v4843, 80
      %v4885 = vpop.permute.xlu0 %4884
      %4886 = vrot.lane.b32.xlu0 %v4851, 80
      %v4887 = vpop.permute.xlu0 %4886
      %4888 = vrot.lane.b32.xlu0 %v4859, 80
      %v4889 = vpop.permute.xlu0 %4888
      %4890 = vrot.lane.b32.xlu0 %v4867, 80
      %v4891 = vpop.permute.xlu0 %4890
      %4892 = vrot.lane.b32.xlu0 %v4875, 80
      %v4893 = vpop.permute.xlu0 %4892
      %vm4903 = vcmask 786048
      %4904 = vst.msk [vmem:[#allocation4] sm:$0xff] %vm4903, %v4877
      %4905 = vst.msk [vmem:[#allocation4 + $0x10] sm:$0xff] %vm4903, %v4879
      %4906 = vst.msk [vmem:[#allocation4 + $0x20] sm:$0xff] %vm4903, %v4881
      %4907 = vst.msk [vmem:[#allocation4 + $0x30] sm:$0xff] %vm4903, %v4883
      %4908 = vst.msk [vmem:[#allocation4 + $0x40] sm:$0xff] %vm4903, %v4885
      %4909 = vst.msk [vmem:[#allocation4 + $0x50] sm:$0xff] %vm4903, %v4887
      %4910 = vst.msk [vmem:[#allocation4 + $0x60] sm:$0xff] %vm4903, %v4889
      %4911 = vst.msk [vmem:[#allocation4 + $0x70] sm:$0xff] %vm4903, %v4891
      %4912 = vst.msk [vmem:[#allocation4 + $0x80] sm:$0xff] %vm4903, %v4893
      %v4913 = vld [vmem:[#allocation3 + $0x8] sm:$0xe0]
      %v4914 = vld [vmem:[#allocation3 + $0x10] sm:$0xff]
      %v4915 = vld [vmem:[#allocation3 + $0x18] sm:$0xff]
      %v4916 = vld [vmem:[#allocation3 + $0x20] sm:$0xff]
      %v4917 = vld [vmem:[#allocation3 + $0x28] sm:$0xff]
      %v4918 = vld [vmem:[#allocation3 + $0x30] sm:$0xff]
      %v4919 = vld [vmem:[#allocation3 + $0x38] sm:$0xff]
      %v4920 = vld [vmem:[#allocation3 + $0x40] sm:$0xff]
      %v4921 = vld [vmem:[#allocation3 + $0x48] sm:$0xff]
      %v4922 = vld [vmem:[#allocation3 + $0x50] sm:$0x3f]
      %vm4923 = vsmask.f32 2304
      %v4925 = vshrl.u32 %v4913, 16
      %v4927 = vrot.slane %v4925, 5
      %v4928 = vshll.u32 %v4913, 16
      %v4930 = vrot.slane %v4928, 6
      %v4931 = vor.u32 %v4927, %v4930
      %v4933 = vshrl.u32 %v4914, 16
      %v4935 = vrot.slane %v4933, 5
      %v4936 = vshll.u32 %v4914, 16
      %v4938 = vrot.slane %v4936, 6
      %v4939 = vor.u32 %v4935, %v4938
      %v4940 = vsel %vm4923, %v4931, %v4939
      %v4942 = vshrl.u32 %v4915, 16
      %v4944 = vrot.slane %v4942, 5
      %v4945 = vshll.u32 %v4915, 16
      %v4947 = vrot.slane %v4945, 6
      %v4948 = vor.u32 %v4944, %v4947
      %v4949 = vsel %vm4923, %v4939, %v4948
      %v4951 = vshrl.u32 %v4916, 16
      %v4953 = vrot.slane %v4951, 5
      %v4954 = vshll.u32 %v4916, 16
      %v4956 = vrot.slane %v4954, 6
      %v4957 = vor.u32 %v4953, %v4956
      %v4958 = vsel %vm4923, %v4948, %v4957
      %v4960 = vshrl.u32 %v4917, 16
      %v4962 = vrot.slane %v4960, 5
      %v4963 = vshll.u32 %v4917, 16
      %v4965 = vrot.slane %v4963, 6
      %v4966 = vor.u32 %v4962, %v4965
      %v4967 = vsel %vm4923, %v4957, %v4966
      %v4969 = vshrl.u32 %v4918, 16
      %v4971 = vrot.slane %v4969, 5
      %v4972 = vshll.u32 %v4918, 16
      %v4974 = vrot.slane %v4972, 6
      %v4975 = vor.u32 %v4971, %v4974
      %v4976 = vsel %vm4923, %v4966, %v4975
      %v4978 = vshrl.u32 %v4919, 16
      %v4980 = vrot.slane %v4978, 5
      %v4981 = vshll.u32 %v4919, 16
      %v4983 = vrot.slane %v4981, 6
      %v4984 = vor.u32 %v4980, %v4983
      %v4985 = vsel %vm4923, %v4975, %v4984
      %v4987 = vshrl.u32 %v4920, 16
      %v4989 = vrot.slane %v4987, 5
      %v4990 = vshll.u32 %v4920, 16
      %v4992 = vrot.slane %v4990, 6
      %v4993 = vor.u32 %v4989, %v4992
      %v4994 = vsel %vm4923, %v4984, %v4993
      %v4996 = vshrl.u32 %v4921, 16
      %v4998 = vrot.slane %v4996, 5
      %v4999 = vshll.u32 %v4921, 16
      %v5001 = vrot.slane %v4999, 6
      %v5002 = vor.u32 %v4998, %v5001
      %v5003 = vsel %vm4923, %v4993, %v5002
      %v5005 = vshrl.u32 %v4922, 16
      %v5007 = vrot.slane %v5005, 5
      %v5008 = vshll.u32 %v4922, 16
      %v5010 = vrot.slane %v5008, 6
      %v5011 = vor.u32 %v5007, %v5010
      %v5012 = vsel %vm4923, %v5002, %v5011
      %5013 = vrot.lane.b32.xlu0 %v4940, 96
      %v5014 = vpop.permute.xlu0 %5013
      %5015 = vrot.lane.b32.xlu0 %v4949, 96
      %v5016 = vpop.permute.xlu0 %5015
      %5017 = vrot.lane.b32.xlu0 %v4958, 96
      %v5018 = vpop.permute.xlu0 %5017
      %5019 = vrot.lane.b32.xlu0 %v4967, 96
      %v5020 = vpop.permute.xlu0 %5019
      %5021 = vrot.lane.b32.xlu0 %v4976, 96
      %v5022 = vpop.permute.xlu0 %5021
      %5023 = vrot.lane.b32.xlu0 %v4985, 96
      %v5024 = vpop.permute.xlu0 %5023
      %5025 = vrot.lane.b32.xlu0 %v4994, 96
      %v5026 = vpop.permute.xlu0 %5025
      %5027 = vrot.lane.b32.xlu0 %v5003, 96
      %v5028 = vpop.permute.xlu0 %5027
      %5029 = vrot.lane.b32.xlu0 %v5012, 96
      %v5030 = vpop.permute.xlu0 %5029
      %vm5040 = vcmask 917248
      %5041 = vst.msk [vmem:[#allocation4] sm:$0xff] %vm5040, %v5014
      %5042 = vst.msk [vmem:[#allocation4 + $0x10] sm:$0xff] %vm5040, %v5016
      %5043 = vst.msk [vmem:[#allocation4 + $0x20] sm:$0xff] %vm5040, %v5018
      %5044 = vst.msk [vmem:[#allocation4 + $0x30] sm:$0xff] %vm5040, %v5020
      %5045 = vst.msk [vmem:[#allocation4 + $0x40] sm:$0xff] %vm5040, %v5022
      %5046 = vst.msk [vmem:[#allocation4 + $0x50] sm:$0xff] %vm5040, %v5024
      %5047 = vst.msk [vmem:[#allocation4 + $0x60] sm:$0xff] %vm5040, %v5026
      %5048 = vst.msk [vmem:[#allocation4 + $0x70] sm:$0xff] %vm5040, %v5028
      %5049 = vst.msk [vmem:[#allocation4 + $0x80] sm:$0xff] %vm5040, %v5030
      %v5050 = vld [vmem:[#allocation3 + $0x8] sm:$0xc0]
      %v5051 = vld [vmem:[#allocation3 + $0x10] sm:$0xff]
      %v5052 = vld [vmem:[#allocation3 + $0x18] sm:$0xff]
      %v5053 = vld [vmem:[#allocation3 + $0x20] sm:$0xff]
      %v5054 = vld [vmem:[#allocation3 + $0x28] sm:$0xff]
      %v5055 = vld [vmem:[#allocation3 + $0x30] sm:$0xff]
      %v5056 = vld [vmem:[#allocation3 + $0x38] sm:$0xff]
      %v5057 = vld [vmem:[#allocation3 + $0x40] sm:$0xff]
      %v5058 = vld [vmem:[#allocation3 + $0x48] sm:$0xff]
      %v5059 = vld [vmem:[#allocation3 + $0x50] sm:$0x3f]
      %vm5070 = vcmask 1041408
      %v5071 = vrot.slane %v5050, 6
      %v5072 = vrot.slane %v5051, 6
      %v5073 = vsel %vm5070, %v5071, %v5072
      %v5074 = vrot.slane %v5052, 6
      %v5075 = vsel %vm5070, %v5072, %v5074
      %v5076 = vrot.slane %v5053, 6
      %v5077 = vsel %vm5070, %v5074, %v5076
      %v5078 = vrot.slane %v5054, 6
      %v5079 = vsel %vm5070, %v5076, %v5078
      %v5080 = vrot.slane %v5055, 6
      %v5081 = vsel %vm5070, %v5078, %v5080
      %v5082 = vrot.slane %v5056, 6
      %v5083 = vsel %vm5070, %v5080, %v5082
      %v5084 = vrot.slane %v5057, 6
      %v5085 = vsel %vm5070, %v5082, %v5084
      %v5086 = vrot.slane %v5058, 6
      %v5087 = vsel %vm5070, %v5084, %v5086
      %v5088 = vrot.slane %v5059, 6
      %v5089 = vsel %vm5070, %v5086, %v5088
      %5090 = vrot.lane.b32.xlu0 %v5073, 112
      %v5091 = vpop.permute.xlu0 %5090
      %5092 = vrot.lane.b32.xlu0 %v5075, 112
      %v5093 = vpop.permute.xlu0 %5092
      %5094 = vrot.lane.b32.xlu0 %v5077, 112
      %v5095 = vpop.permute.xlu0 %5094
      %5096 = vrot.lane.b32.xlu0 %v5079, 112
      %v5097 = vpop.permute.xlu0 %5096
      %5098 = vrot.lane.b32.xlu0 %v5081, 112
      %v5099 = vpop.permute.xlu0 %5098
      %5100 = vrot.lane.b32.xlu0 %v5083, 112
      %v5101 = vpop.permute.xlu0 %5100
      %5102 = vrot.lane.b32.xlu0 %v5085, 112
      %v5103 = vpop.permute.xlu0 %5102
      %5104 = vrot.lane.b32.xlu0 %v5087, 112
      %v5105 = vpop.permute.xlu0 %5104
      %5106 = vrot.lane.b32.xlu0 %v5089, 112
      %v5107 = vpop.permute.xlu0 %5106
      %vm5117 = vcmask 1048448
      %5118 = vst.msk [vmem:[#allocation4] sm:$0xff] %vm5117, %v5091
      %5119 = vst.msk [vmem:[#allocation4 + $0x10] sm:$0xff] %vm5117, %v5093
      %5120 = vst.msk [vmem:[#allocation4 + $0x20] sm:$0xff] %vm5117, %v5095
      %5121 = vst.msk [vmem:[#allocation4 + $0x30] sm:$0xff] %vm5117, %v5097
      %5122 = vst.msk [vmem:[#allocation4 + $0x40] sm:$0xff] %vm5117, %v5099
      %5123 = vst.msk [vmem:[#allocation4 + $0x50] sm:$0xff] %vm5117, %v5101
      %5124 = vst.msk [vmem:[#allocation4 + $0x60] sm:$0xff] %vm5117, %v5103
      %5125 = vst.msk [vmem:[#allocation4 + $0x70] sm:$0xff] %vm5117, %v5105
      %5126 = vst.msk [vmem:[#allocation4 + $0x80] sm:$0xff] %vm5117, %v5107
      %v5127 = vld [vmem:[#allocation3 + $0x8] sm:$0xc0]
      %v5128 = vld [vmem:[#allocation3 + $0x10] sm:$0xff]
      %v5129 = vld [vmem:[#allocation3 + $0x18] sm:$0xff]
      %v5130 = vld [vmem:[#allocation3 + $0x20] sm:$0xff]
      %v5131 = vld [vmem:[#allocation3 + $0x28] sm:$0xff]
      %v5132 = vld [vmem:[#allocation3 + $0x30] sm:$0xff]
      %v5133 = vld [vmem:[#allocation3 + $0x38] sm:$0xff]
      %v5134 = vld [vmem:[#allocation3 + $0x40] sm:$0xff]
      %v5135 = vld [vmem:[#allocation3 + $0x48] sm:$0xff]
      %v5136 = vld [vmem:[#allocation3 + $0x50] sm:$0x7f]
      %vm5137 = vsmask.f32 1280
      %v5139 = vshrl.u32 %v5127, 16
      %v5141 = vrot.slane %v5139, 6
      %v5142 = vshll.u32 %v5127, 16
      %v5144 = vrot.slane %v5142, 7
      %v5145 = vor.u32 %v5141, %v5144
      %v5147 = vshrl.u32 %v5128, 16
      %v5149 = vrot.slane %v5147, 6
      %v5150 = vshll.u32 %v5128, 16
      %v5152 = vrot.slane %v5150, 7
      %v5153 = vor.u32 %v5149, %v5152
      %v5154 = vsel %vm5137, %v5145, %v5153
      %v5156 = vshrl.u32 %v5129, 16
      %v5158 = vrot.slane %v5156, 6
      %v5159 = vshll.u32 %v5129, 16
      %v5161 = vrot.slane %v5159, 7
      %v5162 = vor.u32 %v5158, %v5161
      %v5163 = vsel %vm5137, %v5153, %v5162
      %v5165 = vshrl.u32 %v5130, 16
      %v5167 = vrot.slane %v5165, 6
      %v5168 = vshll.u32 %v5130, 16
      %v5170 = vrot.slane %v5168, 7
      %v5171 = vor.u32 %v5167, %v5170
      %v5172 = vsel %vm5137, %v5162, %v5171
      %v5174 = vshrl.u32 %v5131, 16
      %v5176 = vrot.slane %v5174, 6
      %v5177 = vshll.u32 %v5131, 16
      %v5179 = vrot.slane %v5177, 7
      %v5180 = vor.u32 %v5176, %v5179
      %v5181 = vsel %vm5137, %v5171, %v5180
      %v5183 = vshrl.u32 %v5132, 16
      %v5185 = vrot.slane %v5183, 6
      %v5186 = vshll.u32 %v5132, 16
      %v5188 = vrot.slane %v5186, 7
      %v5189 = vor.u32 %v5185, %v5188
      %v5190 = vsel %vm5137, %v5180, %v5189
      %v5192 = vshrl.u32 %v5133, 16
      %v5194 = vrot.slane %v5192, 6
      %v5195 = vshll.u32 %v5133, 16
      %v5197 = vrot.slane %v5195, 7
      %v5198 = vor.u32 %v5194, %v5197
      %v5199 = vsel %vm5137, %v5189, %v5198
      %v5201 = vshrl.u32 %v5134, 16
      %v5203 = vrot.slane %v5201, 6
      %v5204 = vshll.u32 %v5134, 16
      %v5206 = vrot.slane %v5204, 7
      %v5207 = vor.u32 %v5203, %v5206
      %v5208 = vsel %vm5137, %v5198, %v5207
      %v5210 = vshrl.u32 %v5135, 16
      %v5212 = vrot.slane %v5210, 6
      %v5213 = vshll.u32 %v5135, 16
      %v5215 = vrot.slane %v5213, 7
      %v5216 = vor.u32 %v5212, %v5215
      %v5217 = vsel %vm5137, %v5207, %v5216
      %v5219 = vshrl.u32 %v5136, 16
      %v5221 = vrot.slane %v5219, 6
      %v5222 = vshll.u32 %v5136, 16
      %v5224 = vrot.slane %v5222, 7
      %v5225 = vor.u32 %v5221, %v5224
      %v5226 = vsel %vm5137, %v5216, %v5225
      %5236 = vst.msk [vmem:[#allocation4 + $0x8] sm:$0xff] %vm4261, %v5154
      %5237 = vst.msk [vmem:[#allocation4 + $0x18] sm:$0xff] %vm4261, %v5163
      %5238 = vst.msk [vmem:[#allocation4 + $0x28] sm:$0xff] %vm4261, %v5172
      %5239 = vst.msk [vmem:[#allocation4 + $0x38] sm:$0xff] %vm4261, %v5181
      %5240 = vst.msk [vmem:[#allocation4 + $0x48] sm:$0xff] %vm4261, %v5190
      %5241 = vst.msk [vmem:[#allocation4 + $0x58] sm:$0xff] %vm4261, %v5199
      %5242 = vst.msk [vmem:[#allocation4 + $0x68] sm:$0xff] %vm4261, %v5208
      %5243 = vst.msk [vmem:[#allocation4 + $0x78] sm:$0xff] %vm4261, %v5217
      %5244 = vst.msk [vmem:[#allocation4 + $0x88] sm:$0xff] %vm4261, %v5226
      %v5245 = vld [vmem:[#allocation4] sm:$0xff]
      %v5246 = vld [vmem:[#allocation4 + $0x8] sm:$0xff]
      %v5247 = vld [vmem:[#allocation4 + $0x10] sm:$0xff]
      %v5248 = vld [vmem:[#allocation4 + $0x18] sm:$0xff]
      %v5249 = vld [vmem:[#allocation4 + $0x20] sm:$0xff]
      %v5250 = vld [vmem:[#allocation4 + $0x28] sm:$0xff]
      %v5251 = vld [vmem:[#allocation4 + $0x30] sm:$0xff]
      %v5252 = vld [vmem:[#allocation4 + $0x38] sm:$0xff]
      %v5253 = vld [vmem:[#allocation4 + $0x40] sm:$0xff]
      %v5254 = vld [vmem:[#allocation4 + $0x48] sm:$0xff]
      %v5255 = vld [vmem:[#allocation4 + $0x50] sm:$0xff]
      %v5256 = vld [vmem:[#allocation4 + $0x58] sm:$0xff]
      %v5257 = vld [vmem:[#allocation4 + $0x60] sm:$0xff]
      %v5258 = vld [vmem:[#allocation4 + $0x68] sm:$0xff]
      %v5259 = vld [vmem:[#allocation4 + $0x70] sm:$0xff]
      %v5260 = vld [vmem:[#allocation4 + $0x78] sm:$0xff]
      %v5261 = vld [vmem:[#allocation4 + $0x80] sm:$0xff]
      %v5262 = vld [vmem:[#allocation4 + $0x88] sm:$0xff]
      %v5263 = vld [vmem:[%s3] sm:$0xf]
      %v5264 = vld [vmem:[%s3 + $0x4] sm:$0xf]
      %v5265 = vld [vmem:[%s3 + $0x8] sm:$0xf]
      %v5266 = vld [vmem:[%s3 + $0xc] sm:$0xf]
      %v5267 = vld [vmem:[%s3 + $0x10] sm:$0xf]
      %v5268 = vld [vmem:[%s3 + $0x14] sm:$0xf]
      %v5269 = vld [vmem:[%s3 + $0x18] sm:$0xf]
      %v5270 = vld [vmem:[%s3 + $0x1c] sm:$0xf]
      %v5271 = vld [vmem:[%s3 + $0x20] sm:$0xf]
      %v5272 = vld [vmem:[%s3 + $0x24] sm:$0xf]
      %v5273 = vld [vmem:[%s3 + $0x28] sm:$0xf]
      %v5274 = vld [vmem:[%s3 + $0x2c] sm:$0xf]
      %v5275 = vld [vmem:[%s3 + $0x30] sm:$0xf]
      %v5276 = vld [vmem:[%s3 + $0x34] sm:$0xf]
      %v5277 = vld [vmem:[%s3 + $0x38] sm:$0xf]
      %v5278 = vld [vmem:[%s3 + $0x3c] sm:$0xf]
      %v5279 = vld [vmem:[%s3 + $0x40] sm:$0xf]
      %v5280 = vld [vmem:[%s3 + $0x44] sm:$0xf]
      %v5281 = vld [vmem:[%s4] sm:$0x1]
      %v5283 = vlaneseq
      %v5284 = vshrl.u32 %v5283, 7
      %v5285 = vsub.s32 0, %v5284
      %v5286 = vrot.slane %v5281, %v5285
      %v5306 = vunpack.c.l.b16 %v5263
      %v5307 = vunpack.c.l.b16 %v5264
      %v5308 = vunpack.c.l.b16 %v5265
      %v5309 = vunpack.c.l.b16 %v5266
      %v5310 = vunpack.c.l.b16 %v5267
      %v5311 = vunpack.c.l.b16 %v5268
      %v5312 = vunpack.c.l.b16 %v5269
      %v5313 = vunpack.c.l.b16 %v5270
      %v5314 = vunpack.c.l.b16 %v5271
      %v5315 = vunpack.c.l.b16 %v5272
      %v5316 = vunpack.c.l.b16 %v5273
      %v5317 = vunpack.c.l.b16 %v5274
      %v5318 = vunpack.c.l.b16 %v5275
      %v5319 = vunpack.c.l.b16 %v5276
      %v5320 = vunpack.c.l.b16 %v5277
      %v5321 = vunpack.c.l.b16 %v5278
      %v5322 = vunpack.c.l.b16 %v5279
      %v5323 = vunpack.c.l.b16 %v5280
      %v5324 = vpack.c.b16 %v5307, %v5306
      %v5325 = vpack.c.b16 %v5309, %v5308
      %v5326 = vpack.c.b16 %v5311, %v5310
      %v5327 = vpack.c.b16 %v5313, %v5312
      %v5328 = vpack.c.b16 %v5315, %v5314
      %v5329 = vpack.c.b16 %v5317, %v5316
      %v5330 = vpack.c.b16 %v5319, %v5318
      %v5331 = vpack.c.b16 %v5321, %v5320
      %v5332 = vpack.c.b16 %v5323, %v5322
      %v5343 = vsel %vm4261, %v5246, 0
      %v5346 = vsel %vm4261, %v5248, 0
      %v5349 = vsel %vm4261, %v5250, 0
      %v5352 = vsel %vm4261, %v5252, 0
      %v5355 = vsel %vm4261, %v5254, 0
      %v5358 = vsel %vm4261, %v5256, 0
      %v5361 = vsel %vm4261, %v5258, 0
      %v5364 = vsel %vm4261, %v5260, 0
      %v5367 = vsel %vm4261, %v5262, 0
      %5369 = vmatprep.subr.bf16.mxu0 0
      %5370 = vmatpush1.bf16.msra.mxu0 %v5324
      %5371 = vmatprep.subr.bf16.mxu0 0
      %5372 = vmatpush1.bf16.msra.mxu0 %v5325
      %5373 = vmatprep.subr.bf16.mxu0 0
      %5374 = vmatpush1.bf16.msra.mxu0 %v5326
      %5375 = vmatprep.subr.bf16.mxu0 0
      %5376 = vmatpush1.bf16.msra.mxu0 %v5327
      %5377 = vmatprep.subr.bf16.mxu0 0
      %5378 = vmatpush1.bf16.msra.mxu0 %v5328
      %5379 = vmatprep.subr.bf16.mxu0 0
      %5380 = vmatpush1.bf16.msra.mxu0 %v5329
      %5381 = vmatprep.subr.bf16.mxu0 0
      %5382 = vmatpush1.bf16.msra.mxu0 %v5330
      %5383 = vmatprep.subr.bf16.mxu0 0
      %5384 = vmatpush1.bf16.msra.mxu0 %v5331
      %5385 = vmatprep.subr.bf16.mxu0 0
      %5386 = vmatpush1.bf16.msra.mxu0 %v5332
      %5387 = vmatprep.subr.bf16.mxu0 0
      %5388 = vmatpush1.bf16.msra.mxu0 0
      %5389 = vmatprep.subr.bf16.mxu0 0
      %5390 = vmatpush1.bf16.msra.mxu0 0
      %5391 = vmatprep.subr.bf16.mxu0 0
      %5392 = vmatpush1.bf16.msra.mxu0 0
      %5393 = vmatprep.subr.bf16.mxu0 0
      %5394 = vmatpush1.bf16.msra.mxu0 0
      %5395 = vmatprep.subr.bf16.mxu0 0
      %5396 = vmatpush1.bf16.msra.mxu0 0
      %5397 = vmatprep.subr.bf16.mxu0 0
      %5398 = vmatpush1.bf16.msra.mxu0 0
      %5399 = vmatprep.subr.bf16.mxu0 0
      %5400 = vmatpush1.bf16.msra.mxu0 0
      %5401 = vmatprep.mubr.bf16.mxu0 %v5343
      %5402 = vmatmul.mubr.bf16.gmra.mrb[0].mxu0 %v5245
      %v5403 = vpop.f32.mrb[0].mxu0
      %v5404 = vpop.f32.mrb[0].mxu0
      %v5405 = vpop.f32.mrb[0].mxu0
      %v5406 = vpop.f32.mrb[0].mxu0
      %5407 = vmatprep.mubr.bf16.mxu0 %v5346
      %5408 = vmatmul.mubr.bf16.gmra.mrb[0].mxu0 %v5247
      %v5409 = vpop.f32.mrb[0].mxu0
      %v5410 = vadd.f32 %v5286, %v5409
      %v5411 = vpop.f32.mrb[0].mxu0
      %v5412 = vpop.f32.mrb[0].mxu0
      %v5413 = vadd.f32 %v5286, %v5412
      %v5414 = vpop.f32.mrb[0].mxu0
      %5415 = vmatprep.mubr.bf16.mxu0 %v5349
      %5416 = vmatmul.mubr.bf16.gmra.mrb[0].mxu0 %v5249
      %v5417 = vpop.f32.mrb[0].mxu0
      %v5418 = vadd.f32 %v5286, %v5417
      %v5419 = vpop.f32.mrb[0].mxu0
      %v5420 = vpop.f32.mrb[0].mxu0
      %v5421 = vadd.f32 %v5286, %v5420
      %v5422 = vpop.f32.mrb[0].mxu0
      %5423 = vmatprep.mubr.bf16.mxu0 %v5352
      %5424 = vmatmul.mubr.bf16.gmra.mrb[0].mxu0 %v5251
      %v5425 = vpop.f32.mrb[0].mxu0
      %v5426 = vadd.f32 %v5286, %v5425
      %v5427 = vpop.f32.mrb[0].mxu0
      %v5428 = vpop.f32.mrb[0].mxu0
      %v5429 = vadd.f32 %v5286, %v5428
      %v5430 = vpop.f32.mrb[0].mxu0
      %5431 = vmatprep.mubr.bf16.mxu0 %v5355
      %5432 = vmatmul.mubr.bf16.gmra.mrb[0].mxu0 %v5253
      %v5433 = vpop.f32.mrb[0].mxu0
      %v5434 = vadd.f32 %v5286, %v5433
      %v5435 = vpop.f32.mrb[0].mxu0
      %v5436 = vpop.f32.mrb[0].mxu0
      %v5437 = vadd.f32 %v5286, %v5436
      %v5438 = vpop.f32.mrb[0].mxu0
      %5439 = vmatprep.mubr.bf16.mxu0 %v5358
      %5440 = vmatmul.mubr.bf16.gmra.mrb[0].mxu0 %v5255
      %v5441 = vpop.f32.mrb[0].mxu0
      %v5442 = vadd.f32 %v5286, %v5441
      %v5443 = vpop.f32.mrb[0].mxu0
      %v5444 = vpop.f32.mrb[0].mxu0
      %v5445 = vadd.f32 %v5286, %v5444
      %v5446 = vpop.f32.mrb[0].mxu0
      %5447 = vmatprep.mubr.bf16.mxu0 %v5361
      %5448 = vmatmul.mubr.bf16.gmra.mrb[0].mxu0 %v5257
      %v5449 = vpop.f32.mrb[0].mxu0
      %v5450 = vadd.f32 %v5286, %v5449
      %v5451 = vpop.f32.mrb[0].mxu0
      %v5452 = vpop.f32.mrb[0].mxu0
      %v5453 = vadd.f32 %v5286, %v5452
      %v5454 = vpop.f32.mrb[0].mxu0
      %5455 = vmatprep.mubr.bf16.mxu0 %v5364
      %5456 = vmatmul.mubr.bf16.gmra.mrb[0].mxu0 %v5259
      %v5457 = vpop.f32.mrb[0].mxu0
      %v5458 = vadd.f32 %v5286, %v5457
      %v5459 = vpop.f32.mrb[0].mxu0
      %v5460 = vpop.f32.mrb[0].mxu0
      %v5461 = vadd.f32 %v5286, %v5460
      %v5462 = vpop.f32.mrb[0].mxu0
      %5463 = vmatprep.mubr.bf16.mxu0 %v5367
      %5464 = vmatmul.mubr.bf16.gmra.mrb[0].mxu0 %v5261
      %v5465 = vpop.f32.mrb[0].mxu0
      %v5466 = vpop.f32.mrb[0].mxu0
      %v5467 = vpop.f32.mrb[0].mxu0
      %v5468 = vpop.f32.mrb[0].mxu0
      %5469 = vdwg.mxu0
      %v5470 = vmax.f32 %v5410, 0.0
      %v5471 = vmax.f32 %v5413, 0.0
      %v5472 = vmax.f32 %v5418, 0.0
      %v5473 = vmax.f32 %v5421, 0.0
      %v5474 = vmax.f32 %v5426, 0.0
      %v5475 = vmax.f32 %v5429, 0.0
      %v5476 = vmax.f32 %v5434, 0.0
      %v5477 = vmax.f32 %v5437, 0.0
      %v5478 = vmax.f32 %v5442, 0.0
      %v5479 = vmax.f32 %v5445, 0.0
      %v5480 = vmax.f32 %v5450, 0.0
      %v5481 = vmax.f32 %v5453, 0.0
      %v5482 = vmax.f32 %v5458, 0.0
      %v5483 = vmax.f32 %v5461, 0.0
      %v5484 = vpack.c.bf16 %v5471, %v5470
      %v5485 = vpack.c.bf16 %v5473, %v5472
      %v5486 = vpack.c.bf16 %v5475, %v5474
      %v5487 = vpack.c.bf16 %v5477, %v5476
      %v5488 = vpack.c.bf16 %v5479, %v5478
      %v5489 = vpack.c.bf16 %v5481, %v5480
      %v5490 = vpack.c.bf16 %v5483, %v5482
      %v5493 = vunpack.c.h.b16 %v5484
      %v5494 = vunpack.c.l.b16 %v5485
      %v5495 = vpack.c.b16 %v5493, %v5493
      %v5496 = vpack.c.b16 %v5494, %v5494
      %vm5497 = vcmask 1042432
      %vm5498 = vcmask 1046532
      %vm5499 = vmor %vm5497, %vm5498
      %v5500 = vrot.slane %v5495, 5
      %v5501 = vrot.slane %v5500, 4
      %v5502 = vrot.slane %v5496, 5
      %v5503 = vsel %vm5499, %v5501, %v5502
      %vm5505 = vcmask 257024
      %5506 = vst.msk [vmem:[%s253] sm:$0xf] %vm5505, %v5503
      %v5507 = vunpack.c.h.b16 %v5485
      %v5508 = vpack.c.b16 %v5507, %v5507
      %vm5509 = vcmask 1040384
      %vm5510 = vcmask 1044484
      %vm5511 = vmor %vm5509, %vm5510
      %v5512 = vrot.slane %v5496, 7
      %v5513 = vrot.slane %v5512, 4
      %v5514 = vrot.slane %v5508, 7
      %v5515 = vsel %vm5511, %v5513, %v5514
      %5517 = vst.msk [vmem:[%s253 + $0x4] sm:$0xf] %vm5505, %v5515
      %v5519 = vunpack.c.l.b16 %v5486
      %v5520 = vunpack.c.h.b16 %v5486
      %v5521 = vpack.c.b16 %v5519, %v5519
      %v5522 = vpack.c.b16 %v5520, %v5520
      %v5523 = vrot.slane %v5521, 5
      %v5524 = vrot.slane %v5523, 4
      %v5525 = vrot.slane %v5522, 5
      %v5526 = vsel %vm5499, %v5524, %v5525
      %5528 = vst.msk [vmem:[%s253 + $0x8] sm:$0xf] %vm5505, %v5526
      %v5530 = vunpack.c.l.b16 %v5487
      %v5531 = vpack.c.b16 %v5530, %v5530
      %v5532 = vrot.slane %v5522, 7
      %v5533 = vrot.slane %v5532, 4
      %v5534 = vrot.slane %v5531, 7
      %v5535 = vsel %vm5511, %v5533, %v5534
      %5537 = vst.msk [vmem:[%s253 + $0xc] sm:$0xf] %vm5505, %v5535
      %v5539 = vunpack.c.h.b16 %v5487
      %v5540 = vunpack.c.l.b16 %v5488
      %v5541 = vpack.c.b16 %v5539, %v5539
      %v5542 = vpack.c.b16 %v5540, %v5540
      %v5543 = vrot.slane %v5541, 5
      %v5544 = vrot.slane %v5543, 4
      %v5545 = vrot.slane %v5542, 5
      %v5546 = vsel %vm5499, %v5544, %v5545
      %5548 = vst.msk [vmem:[%s253 + $0x10] sm:$0xf] %vm5505, %v5546
      %v5549 = vunpack.c.h.b16 %v5488
      %v5550 = vpack.c.b16 %v5549, %v5549
      %v5551 = vrot.slane %v5542, 7
      %v5552 = vrot.slane %v5551, 4
      %v5553 = vrot.slane %v5550, 7
      %v5554 = vsel %vm5511, %v5552, %v5553
      %5556 = vst.msk [vmem:[%s253 + $0x14] sm:$0xf] %vm5505, %v5554
      %v5558 = vunpack.c.l.b16 %v5489
      %v5559 = vunpack.c.h.b16 %v5489
      %v5560 = vpack.c.b16 %v5558, %v5558
      %v5561 = vpack.c.b16 %v5559, %v5559
      %v5562 = vrot.slane %v5560, 5
      %v5563 = vrot.slane %v5562, 4
      %v5564 = vrot.slane %v5561, 5
      %v5565 = vsel %vm5499, %v5563, %v5564
      %5567 = vst.msk [vmem:[%s253 + $0x18] sm:$0xf] %vm5505, %v5565
      %v5569 = vunpack.c.l.b16 %v5490
      %v5570 = vpack.c.b16 %v5569, %v5569
      %v5571 = vrot.slane %v5561, 7
      %v5572 = vrot.slane %v5571, 4
      %v5573 = vrot.slane %v5570, 7
      %v5574 = vsel %vm5511, %v5572, %v5573
      %5576 = vst.msk [vmem:[%s253 + $0x1c] sm:$0xf] %vm5505, %v5574
      %s5577 = smul.u32 8, %s17
      %p5578 = scmp.lt.s32.totalorder %s5577, 15
      %s5579 = scalar_select %p5578, %s5577, 15
      %s5580 = smul.addr %s5579, 4
      %s5581 = scalar_lea.vmem %s6, %s5580
      // Predicated region
      $region45: #{dqn_forward.2} parent=43 // pred_check
        %p5582 = pneg %p166
      $region46: #{dqn_forward.2} parent=43 // pred_check_branch
        %5584 = sbr.rel (%p5582) target = $region48
      $region47: #{dqn_forward.2} parent=43 // pred_region
        %s5585 = smul.u32 8, %s17
      $region48: #{dqn_forward.2} parent=43 // pred_fallthru
        _
    $region44: #{dqn_forward.2} parent=5 // pred_fallthru
      _
    %p5586 = scmp.le.s32.totalorder 2, %s12
    // Predicated region
    $region49: #{dqn_forward.2} parent=5 // pred_check
      %p5587 = pneg %p5586
    $region50: #{dqn_forward.2} parent=5 // pred_check_branch
      %5589 = sbr.rel (%p5587) target = $region52
    $region51: #{dqn_forward.2} parent=5 // pred_region
      %s5590 = ssub.s32 %s12, 2
      // Predicated region
      $region53: #{dqn_forward.2} parent=51 // pred_check
        %p5591 = pneg %p172
      $region54: #{dqn_forward.2} parent=51 // pred_check_branch
        %5593 = sbr.rel (%p5591) target = $region56
      $region55: #{dqn_forward.2} parent=51 // pred_region
        %s5594 = smul.u32 8, %s18
        %p5595 = scmp.lt.s32.totalorder %s5594, 15
        %s5596 = scalar_select %p5595, %s5594, 15
        %s5597 = smul.addr %s5596, 4
        %s5598 = scalar_lea.vmem %s6, %s5597
      $region56: #{dqn_forward.2} parent=51 // pred_fallthru
        _
    $region52: #{dqn_forward.2} parent=5 // pred_fallthru
      _
  $region6: #{dqn_forward.2} parent=0 // loop_footer
    %s16 = sadd.s32 1, %s12
  $region7: #{dqn_forward.2} parent=0 // loop_footer_branch
    %11 = sbr.rel target = $region3
  $region8: #{dqn_forward.2} parent=0 // loop_exit
    _

</llo_original>
